<compile_context>
chip_gen: v7x
topology: tpu7x:2x2x1
jax: 0.10.0
libtpu: 0.0.40
codegen_flags: <defaults>
</compile_context>

<pallas_src>
import jax
import jax.numpy as jnp
from jax import lax
from jax.experimental import pallas as pl
from jax.experimental.pallas import tpu as pltpu

EPS = 1e-5          # nn.BatchNorm2d default
NEG_SLOPE = 0.01    # nn.LeakyReLU() default
CHUNK = 128         # canvas rows per inner-loop step (16 vregs per f32 slab)


def _round_up(v, m):
    return (v + m - 1) // m * m


def _leaky(x):
    return jnp.where(x > 0, x, NEG_SLOPE * x)


def _make_kernel(Wp, Mcp, pad_lead, pad_trail, mask_col, count):
    # 3x3 tap offsets in flat-canvas rows (dy, dx relative to the output pixel).
    offs = [(dy - 1) * Wp + (dx - 1) for dy in range(3) for dx in range(3)]
    nchunk = Mcp // CHUNK
    inv_count = 1.0 / float(count)

    def conv3x3(src_ref, w_taps, base):
        # 9 sublane-shifted slabs of the flat canvas, each a short-K matmul.
        # The (CHUNK, Cpo) f32 accumulator stays resident in vregs.
        acc = jnp.zeros((CHUNK, w_taps[0].shape[-1]), jnp.float32)
        for t in range(9):
            start = base + offs[t]
            if (pad_lead + offs[t]) % 8 == 0:     # dy-only taps are 8-aligned
                start = pl.multiple_of(start, 8)
            acc = acc + jnp.dot(src_ref[pl.ds(start, CHUNK), :], w_taps[t],
                                preferred_element_type=jnp.float32)
        return acc

    def fold_bn(s, q, gamma, beta):
        # training-mode batch stats (biased var) folded to y = x*scale + shift
        mean = s * inv_count
        var = jnp.maximum(q * inv_count - mean * mean, 0.0)
        scale = gamma * lax.rsqrt(var + EPS)
        shift = beta - mean * scale
        return scale, shift

    def kernel(x_ref, w1_ref, w2_ref, bn_ref, out_ref, h1_ref):
        cpo = out_ref.shape[-1]

        # guard rows of the h1 scratch (implicit zero padding for conv2 taps)
        h1_ref[pl.ds(0, pad_lead), :] = jnp.zeros((pad_lead, cpo), jnp.float32)
        h1_ref[pl.ds(pad_lead + Mcp, pad_trail), :] = jnp.zeros(
            (pad_trail, cpo), jnp.float32)

        bn = bn_ref[...]                       # (6, Cpo): g1,b1,g2,b2,gs,bs
        ws_w = w1_ref[9]                       # 1x1 skip weight (Cpi, Cpo)
        w1_taps = [w1_ref[t] for t in range(9)]
        zc = jnp.zeros((1, cpo), jnp.float32)

        # -- pass 1: conv1 (raw) -> h1 scratch; masked stats for BN1 and skip-BN
        def pass1(c, carry):
            s1, q1, ss, qs = carry
            base = pl.multiple_of(pad_lead + c * CHUNK, 8)
            xc = x_ref[pl.ds(base, CHUNK), :]
            m = xc[:, mask_col:mask_col + 1]   # interior-row mask channel
            a1 = conv3x3(x_ref, w1_taps, base)
            h1_ref[pl.ds(base, CHUNK), :] = a1
            a1m = a1 * m
            s1 = s1 + jnp.sum(a1m, axis=0, keepdims=True)
            q1 = q1 + jnp.sum(a1m * a1, axis=0, keepdims=True)
            sk = jnp.dot(xc, ws_w, preferred_element_type=jnp.float32)
            skm = sk * m
            ss = ss + jnp.sum(skm, axis=0, keepdims=True)
            qs = qs + jnp.sum(skm * sk, axis=0, keepdims=True)
            return s1, q1, ss, qs

        s1, q1, ss, qs = lax.fori_loop(0, nchunk, pass1, (zc, zc, zc, zc))
        sc1, sh1 = fold_bn(s1, q1, bn[0:1], bn[1:2])
        scs, shs = fold_bn(ss, qs, bn[4:5], bn[5:6])

        # -- pass 2: h1 <- leaky(a1*scale + shift) * mask (halo rows -> exact zero)
        sc1b = jnp.broadcast_to(sc1, (CHUNK, cpo))   # hoisted out of the loop
        sh1b = jnp.broadcast_to(sh1, (CHUNK, cpo))

        def pass2(c, carry):
            base = pl.multiple_of(pad_lead + c * CHUNK, 8)
            m = x_ref[pl.ds(base, CHUNK), :][:, mask_col:mask_col + 1]
            h1 = _leaky(h1_ref[pl.ds(base, CHUNK), :] * sc1b + sh1b)
            h1_ref[pl.ds(base, CHUNK), :] = h1 * m
            return carry

        lax.fori_loop(0, nchunk, pass2, 0)

        # -- pass 3: conv2 (raw) -> out_ref; masked stats for BN2
        w2_taps = [w2_ref[t] for t in range(9)]

        def pass3(c, carry):
            s2, q2 = carry
            base = pl.multiple_of(pad_lead + c * CHUNK, 8)
            m = x_ref[pl.ds(base, CHUNK), :][:, mask_col:mask_col + 1]
            a2 = conv3x3(h1_ref, w2_taps, base)
            o = pl.multiple_of(c * CHUNK, 8)
            out_ref[pl.ds(o, CHUNK), :] = a2
            a2m = a2 * m
            s2 = s2 + jnp.sum(a2m, axis=0, keepdims=True)
            q2 = q2 + jnp.sum(a2m * a2, axis=0, keepdims=True)
            return s2, q2

        s2, q2 = lax.fori_loop(0, nchunk, pass3, (zc, zc))
        sc2, sh2 = fold_bn(s2, q2, bn[2:3], bn[3:4])

        # -- pass 4: out <- leaky(a2*scale+shift) + (x @ ws)*scale_s + shift_s
        sc2b = jnp.broadcast_to(sc2, (CHUNK, cpo))
        sh2b = jnp.broadcast_to(sh2, (CHUNK, cpo))
        scsb = jnp.broadcast_to(scs, (CHUNK, cpo))
        shsb = jnp.broadcast_to(shs, (CHUNK, cpo))

        def pass4(c, carry):
            base = pl.multiple_of(pad_lead + c * CHUNK, 8)
            o = pl.multiple_of(c * CHUNK, 8)
            y2 = _leaky(out_ref[pl.ds(o, CHUNK), :] * sc2b + sh2b)
            sk = jnp.dot(x_ref[pl.ds(base, CHUNK), :], ws_w,
                         preferred_element_type=jnp.float32)
            out_ref[pl.ds(o, CHUNK), :] = y2 + sk * scsb + shsb
            return carry

        lax.fori_loop(0, nchunk, pass4, 0)

    return kernel


def skip_block(x_nchw, params):
    """SkipBlock forward (step=1). x_nchw: (N, Cin, H, W) f32 -> (N, Cmid, H, W)."""
    (w1, g1, b1, w2, g2, b2, ws, gs, bs) = params
    N, Cin, H, W = x_nchw.shape
    Cmid = w1.shape[-1]

    Hp = H + 2
    Wp = _round_up(W + 2, 8)           # sublane-aligned dy tap offsets
    Cpi = _round_up(Cin + 1, 8)        # +1 mask channel, rounded to sublane tile
    Cpo = _round_up(Cmid, 8)
    Mc = N * Hp * Wp                   # rows of the flat padded canvas
    Mcp = _round_up(Mc, CHUNK)
    pad_lead = _round_up(Wp + 1, 8)    # guard rows so tap slices stay in bounds
    pad_trail = _round_up(Wp + 1, 8)
    R = pad_lead + Mcp + pad_trail
    count = N * H * W                  # BN statistics population

    # NCHW -> NHWC, append the interior-validity mask as an extra channel, zero-pad
    # (conv pad=1 plus sublane alignment of Wp), flatten to a 2-D canvas (R, Cpi).
    # No 128-lane channel padding is materialized in HBM.
    x = jnp.transpose(x_nchw, (0, 2, 3, 1))
    x = jnp.concatenate([x, jnp.ones((N, H, W, 1), x.dtype)], axis=-1)
    x = jnp.pad(x, ((0, 0), (1, 1), (1, Wp - W - 1), (0, Cpi - Cin - 1)))
    xf = jnp.pad(x.reshape(Mc, Cpi), ((pad_lead, pad_trail + Mcp - Mc), (0, 0)))

    # conv weights: (3,3,Ci,Co) -> (9,Cpi,Cpo); the 1x1 skip weight rides as a 10th
    # tap.  Zero rows for the mask / alignment channels keep the math exact.
    w1p = jnp.pad(w1, ((0, 0), (0, 0), (0, Cpi - Cin), (0, Cpo - Cmid)))
    wsp = jnp.pad(ws, ((0, Cpi - Cin), (0, Cpo - Cmid)))
    w1s = jnp.concatenate([w1p.reshape(9, Cpi, Cpo), wsp[None]], axis=0)
    w2p = jnp.pad(w2, ((0, 0), (0, 0), (0, Cpo - Cmid),
                       (0, Cpo - Cmid))).reshape(9, Cpo, Cpo)
    bnp = jnp.pad(jnp.concatenate([g1, b1, g2, b2, gs, bs], axis=0),
                  ((0, 0), (0, Cpo - Cmid)))

    # realistic cost estimate (real channel counts, not 128-padded)
    flops = int(2 * Mcp * Cpo * (9 * Cpi + 9 * Cpo + 2 * Cpi))
    bytes_accessed = int(4 * (R * Cpi + 10 * Cpi * Cpo + 9 * Cpo * Cpo
                              + 6 * Cpo + Mcp * Cpo))
    # VMEM footprint (lane-padded to 128) with ~2x headroom; don't claim all of VMEM.
    vmem_est = 4 * 128 * (2 * R + Mcp) + 4 * 128 * 8 * 20
    vmem_limit = min(max(2 * vmem_est, 4 * 1024 * 1024), 32 * 1024 * 1024)

    kernel = _make_kernel(Wp, Mcp, pad_lead, pad_trail, Cin, count)
    out = pl.pallas_call(
        kernel,
        out_shape=jax.ShapeDtypeStruct((Mcp, Cpo), jnp.float32),
        in_specs=[pl.BlockSpec(memory_space=pltpu.MemorySpace.VMEM)] * 4,
        out_specs=pl.BlockSpec(memory_space=pltpu.MemorySpace.VMEM),
        scratch_shapes=[pltpu.VMEM((R, Cpo), jnp.float32)],
        compiler_params=pltpu.CompilerParams(vmem_limit_bytes=vmem_limit),
        cost_estimate=pl.CostEstimate(flops=flops, transcendentals=3 * Cpo,
                                      bytes_accessed=bytes_accessed),
    )(xf, w1s, w2p, bnp)

    # extract the valid interior / real channels, back to NCHW
    out = out[:Mc].reshape(N, Hp, Wp, Cpo)[:, 1:H + 1, 1:W + 1, :Cmid]
    return jnp.transpose(out, (0, 3, 1, 2))


def _ref_forward(x_nchw, params):
    """Pure-JAX reference with identical semantics (for correctness check)."""
    (w1, g1, b1, w2, g2, b2, ws, gs, bs) = params
    x = jnp.transpose(x_nchw, (0, 2, 3, 1))

    def conv(a, w, pad):
        return lax.conv_general_dilated(
            a, w, window_strides=(1, 1), padding=pad,
            dimension_numbers=("NHWC", "HWIO", "NHWC"))

    def bn(a, gamma, beta):
        mean = jnp.mean(a, axis=(0, 1, 2), keepdims=True)
        var = jnp.mean((a - mean) ** 2, axis=(0, 1, 2), keepdims=True)
        return ((a - mean) * lax.rsqrt(var + EPS) * gamma.reshape(1, 1, 1, -1)
                + beta.reshape(1, 1, 1, -1))

    h1 = _leaky(bn(conv(x, w1, ((1, 1), (1, 1))), g1, b1))
    h2 = _leaky(bn(conv(h1, w2, ((1, 1), (1, 1))), g2, b2))
    sk = bn(conv(x, ws.reshape(1, 1, *ws.shape), ((0, 0), (0, 0))), gs, bs)
    return jnp.transpose(h2 + sk, (0, 3, 1, 2))


if __name__ == "__main__":
    N, Cin, Cmid, H, W = 2, 4, 8, 16, 16

    key = jax.random.PRNGKey(0)
    ks = jax.random.split(key, 10)
    # deterministic synthetic parameters (shapes from SkipBlock.__init__)
    w1 = 0.1 * jax.random.normal(ks[0], (3, 3, Cin, Cmid), jnp.float32)   # conv3x3 #1
    w2 = 0.1 * jax.random.normal(ks[1], (3, 3, Cmid, Cmid), jnp.float32)  # conv3x3 #2
    ws = 0.1 * jax.random.normal(ks[2], (Cin, Cmid), jnp.float32)         # conv1x1 skip
    g1 = 1.0 + 0.1 * jax.random.normal(ks[3], (1, Cmid), jnp.float32)
    b1 = 0.1 * jax.random.normal(ks[4], (1, Cmid), jnp.float32)
    g2 = 1.0 + 0.1 * jax.random.normal(ks[5], (1, Cmid), jnp.float32)
    b2 = 0.1 * jax.random.normal(ks[6], (1, Cmid), jnp.float32)
    gs = 1.0 + 0.1 * jax.random.normal(ks[7], (1, Cmid), jnp.float32)
    bs = 0.1 * jax.random.normal(ks[8], (1, Cmid), jnp.float32)
    params = (w1, g1, b1, w2, g2, b2, ws, gs, bs)

    x = jax.random.normal(ks[9], (N, Cin, H, W), jnp.float32)   # PyTorch NCHW input

    out = jax.block_until_ready(skip_block(x, params))
    assert out.shape == (N, Cmid, H, W), out.shape

    ref = _ref_forward(x, params)
    assert jnp.allclose(out, ref, rtol=1e-3, atol=1e-3), \
        float(jnp.max(jnp.abs(out - ref)))

    print("KERNEL_OK")
</pallas_src>

<mosaic_0001>
module attributes {stable_mosaic.version = 11 : i64} {
  func.func @kernel(%arg0: memref<960x8xf32, #tpu.memory_space<vmem>>, %arg1: memref<10x8x8xf32, #tpu.memory_space<vmem>>, %arg2: memref<9x8x8xf32, #tpu.memory_space<vmem>>, %arg3: memref<6x8xf32, #tpu.memory_space<vmem>>, %arg4: memref<896x8xf32, #tpu.memory_space<vmem>>, %arg5: memref<960x8xf32, #tpu.memory_space<vmem>>) attributes {dimension_semantics = [], scalar_prefetch = 0 : i64, scratch_operands = 1 : i64, tpu.core_type = #tpu.core_type<tc>} {
    %cst = arith.constant 0.000000e+00 : f32
    %0 = vector.broadcast %cst : f32 to vector<32x8xf32>
    %c0 = arith.constant 0 : index
    %c0_0 = arith.constant 0 : index
    %1 = vector.load %arg5[%c0, %c0_0] : memref<960x8xf32, #tpu.memory_space<vmem>>, vector<32x8xf32>
    tpu.vector_store %arg5[%c0, %c0_0], %0 {strides = array<i32>} : memref<960x8xf32, #tpu.memory_space<vmem>>, vector<32x8xf32>,
    %cst_1 = arith.constant 0.000000e+00 : f32
    %2 = vector.broadcast %cst_1 : f32 to vector<32x8xf32>
    %c928 = arith.constant 928 : index
    %c0_2 = arith.constant 0 : index
    %3 = vector.load %arg5[%c928, %c0_2] : memref<960x8xf32, #tpu.memory_space<vmem>>, vector<32x8xf32>
    tpu.vector_store %arg5[%c928, %c0_2], %2 {strides = array<i32>} : memref<960x8xf32, #tpu.memory_space<vmem>>, vector<32x8xf32>,
    %c0_3 = arith.constant 0 : index
    %c0_4 = arith.constant 0 : index
    %4 = vector.load %arg3[%c0_3, %c0_4] : memref<6x8xf32, #tpu.memory_space<vmem>>, vector<6x8xf32>
    %c9 = arith.constant 9 : index
    %c0_5 = arith.constant 0 : index
    %c0_6 = arith.constant 0 : index
    %5 = vector.load %arg1[%c9, %c0_5, %c0_6] : memref<10x8x8xf32, #tpu.memory_space<vmem>>, vector<1x8x8xf32>
    %6 = vector.shape_cast %5 : vector<1x8x8xf32> to vector<8x8xf32>
    %c0_7 = arith.constant 0 : index
    %c0_8 = arith.constant 0 : index
    %c0_9 = arith.constant 0 : index
    %7 = vector.load %arg1[%c0_7, %c0_8, %c0_9] : memref<10x8x8xf32, #tpu.memory_space<vmem>>, vector<1x8x8xf32>
    %8 = vector.shape_cast %7 : vector<1x8x8xf32> to vector<8x8xf32>
    %c1 = arith.constant 1 : index
    %c0_10 = arith.constant 0 : index
    %c0_11 = arith.constant 0 : index
    %9 = vector.load %arg1[%c1, %c0_10, %c0_11] : memref<10x8x8xf32, #tpu.memory_space<vmem>>, vector<1x8x8xf32>
    %10 = vector.shape_cast %9 : vector<1x8x8xf32> to vector<8x8xf32>
    %c2 = arith.constant 2 : index
    %c0_12 = arith.constant 0 : index
    %c0_13 = arith.constant 0 : index
    %11 = vector.load %arg1[%c2, %c0_12, %c0_13] : memref<10x8x8xf32, #tpu.memory_space<vmem>>, vector<1x8x8xf32>
    %12 = vector.shape_cast %11 : vector<1x8x8xf32> to vector<8x8xf32>
    %c3 = arith.constant 3 : index
    %c0_14 = arith.constant 0 : index
    %c0_15 = arith.constant 0 : index
    %13 = vector.load %arg1[%c3, %c0_14, %c0_15] : memref<10x8x8xf32, #tpu.memory_space<vmem>>, vector<1x8x8xf32>
    %14 = vector.shape_cast %13 : vector<1x8x8xf32> to vector<8x8xf32>
    %c4 = arith.constant 4 : index
    %c0_16 = arith.constant 0 : index
    %c0_17 = arith.constant 0 : index
    %15 = vector.load %arg1[%c4, %c0_16, %c0_17] : memref<10x8x8xf32, #tpu.memory_space<vmem>>, vector<1x8x8xf32>
    %16 = vector.shape_cast %15 : vector<1x8x8xf32> to vector<8x8xf32>
    %c5 = arith.constant 5 : index
    %c0_18 = arith.constant 0 : index
    %c0_19 = arith.constant 0 : index
    %17 = vector.load %arg1[%c5, %c0_18, %c0_19] : memref<10x8x8xf32, #tpu.memory_space<vmem>>, vector<1x8x8xf32>
    %18 = vector.shape_cast %17 : vector<1x8x8xf32> to vector<8x8xf32>
    %c6 = arith.constant 6 : index
    %c0_20 = arith.constant 0 : index
    %c0_21 = arith.constant 0 : index
    %19 = vector.load %arg1[%c6, %c0_20, %c0_21] : memref<10x8x8xf32, #tpu.memory_space<vmem>>, vector<1x8x8xf32>
    %20 = vector.shape_cast %19 : vector<1x8x8xf32> to vector<8x8xf32>
    %c7 = arith.constant 7 : index
    %c0_22 = arith.constant 0 : index
    %c0_23 = arith.constant 0 : index
    %21 = vector.load %arg1[%c7, %c0_22, %c0_23] : memref<10x8x8xf32, #tpu.memory_space<vmem>>, vector<1x8x8xf32>
    %22 = vector.shape_cast %21 : vector<1x8x8xf32> to vector<8x8xf32>
    %c8 = arith.constant 8 : index
    %c0_24 = arith.constant 0 : index
    %c0_25 = arith.constant 0 : index
    %23 = vector.load %arg1[%c8, %c0_24, %c0_25] : memref<10x8x8xf32, #tpu.memory_space<vmem>>, vector<1x8x8xf32>
    %24 = vector.shape_cast %23 : vector<1x8x8xf32> to vector<8x8xf32>
    %cst_26 = arith.constant 0.000000e+00 : f32
    %25 = vector.broadcast %cst_26 : f32 to vector<1x8xf32>
    %c0_i32 = arith.constant 0 : i32
    %c7_i32 = arith.constant 7 : i32
    %26 = arith.addi %c0_i32, %c7_i32 : i32
    %c1_i32 = arith.constant 1 : i32
    %27:4 = scf.for %arg6 = %c0_i32 to %26 step %c1_i32 iter_args(%arg7 = %25, %arg8 = %25, %arg9 = %25, %arg10 = %25) -> (vector<1x8xf32>, vector<1x8xf32>, vector<1x8xf32>, vector<1x8xf32>)  : i32 {
      %c128_i32 = arith.constant 128 : i32
      %110 = arith.muli %arg6, %c128_i32 : i32
      %c32_i32 = arith.constant 32 : i32
      %111 = arith.addi %c32_i32, %110 : i32
      %112 = tpu.assume_multiple %111, 8 : i32
      %113 = arith.index_cast %112 : i32 to index
      %c0_79 = arith.constant 0 : index
      %114 = vector.load %arg0[%113, %c0_79] : memref<960x8xf32, #tpu.memory_space<vmem>>, vector<128x8xf32>
      %115 = vector.extract_strided_slice %114 {offsets = [0, 4], sizes = [128, 1], strides = [1, 1]} : vector<128x8xf32> to vector<128x1xf32>
      %cst_80 = arith.constant 0.000000e+00 : f32
      %116 = vector.broadcast %cst_80 : f32 to vector<128x8xf32>
      %c-25_i32 = arith.constant -25 : i32
      %117 = arith.addi %112, %c-25_i32 : i32
      %118 = arith.index_cast %117 : i32 to index
      %c0_81 = arith.constant 0 : index
      %119 = vector.load %arg0[%118, %c0_81] : memref<960x8xf32, #tpu.memory_space<vmem>>, vector<128x8xf32>
      %cst_82 = arith.constant dense<0.000000e+00> : vector<128x8xf32>
      %120 = tpu.matmul %119, %8, %cst_82 {dimension_numbers = #tpu.dot_dimension_numbers<[1], [0], [0], [1], [0, 0, 1, 1], [], []>} : vector<128x8xf32>, vector<8x8xf32>, vector<128x8xf32> -> vector<128x8xf32>
      %121 = arith.addf %116, %120 : vector<128x8xf32>
      %c-24_i32 = arith.constant -24 : i32
      %122 = arith.addi %112, %c-24_i32 : i32
      %123 = tpu.assume_multiple %122, 8 : i32
      %124 = arith.index_cast %123 : i32 to index
      %c0_83 = arith.constant 0 : index
      %125 = vector.load %arg0[%124, %c0_83] : memref<960x8xf32, #tpu.memory_space<vmem>>, vector<128x8xf32>
      %cst_84 = arith.constant dense<0.000000e+00> : vector<128x8xf32>
      %126 = tpu.matmul %125, %10, %cst_84 {dimension_numbers = #tpu.dot_dimension_numbers<[1], [0], [0], [1], [0, 0, 1, 1], [], []>} : vector<128x8xf32>, vector<8x8xf32>, vector<128x8xf32> -> vector<128x8xf32>
      %127 = arith.addf %121, %126 : vector<128x8xf32>
      %c-23_i32 = arith.constant -23 : i32
      %128 = arith.addi %112, %c-23_i32 : i32
      %129 = arith.index_cast %128 : i32 to index
      %c0_85 = arith.constant 0 : index
      %130 = vector.load %arg0[%129, %c0_85] : memref<960x8xf32, #tpu.memory_space<vmem>>, vector<128x8xf32>
      %cst_86 = arith.constant dense<0.000000e+00> : vector<128x8xf32>
      %131 = tpu.matmul %130, %12, %cst_86 {dimension_numbers = #tpu.dot_dimension_numbers<[1], [0], [0], [1], [0, 0, 1, 1], [], []>} : vector<128x8xf32>, vector<8x8xf32>, vector<128x8xf32> -> vector<128x8xf32>
      %132 = arith.addf %127, %131 : vector<128x8xf32>
      %c-1_i32 = arith.constant -1 : i32
      %133 = arith.addi %112, %c-1_i32 : i32
      %134 = arith.index_cast %133 : i32 to index
      %c0_87 = arith.constant 0 : index
      %135 = vector.load %arg0[%134, %c0_87] : memref<960x8xf32, #tpu.memory_space<vmem>>, vector<128x8xf32>
      %cst_88 = arith.constant dense<0.000000e+00> : vector<128x8xf32>
      %136 = tpu.matmul %135, %14, %cst_88 {dimension_numbers = #tpu.dot_dimension_numbers<[1], [0], [0], [1], [0, 0, 1, 1], [], []>} : vector<128x8xf32>, vector<8x8xf32>, vector<128x8xf32> -> vector<128x8xf32>
      %137 = arith.addf %132, %136 : vector<128x8xf32>
      %c0_i32_89 = arith.constant 0 : i32
      %138 = arith.addi %112, %c0_i32_89 : i32
      %139 = tpu.assume_multiple %138, 8 : i32
      %140 = arith.index_cast %139 : i32 to index
      %c0_90 = arith.constant 0 : index
      %141 = vector.load %arg0[%140, %c0_90] : memref<960x8xf32, #tpu.memory_space<vmem>>, vector<128x8xf32>
      %cst_91 = arith.constant dense<0.000000e+00> : vector<128x8xf32>
      %142 = tpu.matmul %141, %16, %cst_91 {dimension_numbers = #tpu.dot_dimension_numbers<[1], [0], [0], [1], [0, 0, 1, 1], [], []>} : vector<128x8xf32>, vector<8x8xf32>, vector<128x8xf32> -> vector<128x8xf32>
      %143 = arith.addf %137, %142 : vector<128x8xf32>
      %c1_i32_92 = arith.constant 1 : i32
      %144 = arith.addi %112, %c1_i32_92 : i32
      %145 = arith.index_cast %144 : i32 to index
      %c0_93 = arith.constant 0 : index
      %146 = vector.load %arg0[%145, %c0_93] : memref<960x8xf32, #tpu.memory_space<vmem>>, vector<128x8xf32>
      %cst_94 = arith.constant dense<0.000000e+00> : vector<128x8xf32>
      %147 = tpu.matmul %146, %18, %cst_94 {dimension_numbers = #tpu.dot_dimension_numbers<[1], [0], [0], [1], [0, 0, 1, 1], [], []>} : vector<128x8xf32>, vector<8x8xf32>, vector<128x8xf32> -> vector<128x8xf32>
      %148 = arith.addf %143, %147 : vector<128x8xf32>
      %c23_i32 = arith.constant 23 : i32
      %149 = arith.addi %112, %c23_i32 : i32
      %150 = arith.index_cast %149 : i32 to index
      %c0_95 = arith.constant 0 : index
      %151 = vector.load %arg0[%150, %c0_95] : memref<960x8xf32, #tpu.memory_space<vmem>>, vector<128x8xf32>
      %cst_96 = arith.constant dense<0.000000e+00> : vector<128x8xf32>
      %152 = tpu.matmul %151, %20, %cst_96 {dimension_numbers = #tpu.dot_dimension_numbers<[1], [0], [0], [1], [0, 0, 1, 1], [], []>} : vector<128x8xf32>, vector<8x8xf32>, vector<128x8xf32> -> vector<128x8xf32>
      %153 = arith.addf %148, %152 : vector<128x8xf32>
      %c24_i32 = arith.constant 24 : i32
      %154 = arith.addi %112, %c24_i32 : i32
      %155 = tpu.assume_multiple %154, 8 : i32
      %156 = arith.index_cast %155 : i32 to index
      %c0_97 = arith.constant 0 : index
      %157 = vector.load %arg0[%156, %c0_97] : memref<960x8xf32, #tpu.memory_space<vmem>>, vector<128x8xf32>
      %cst_98 = arith.constant dense<0.000000e+00> : vector<128x8xf32>
      %158 = tpu.matmul %157, %22, %cst_98 {dimension_numbers = #tpu.dot_dimension_numbers<[1], [0], [0], [1], [0, 0, 1, 1], [], []>} : vector<128x8xf32>, vector<8x8xf32>, vector<128x8xf32> -> vector<128x8xf32>
      %159 = arith.addf %153, %158 : vector<128x8xf32>
      %c25_i32 = arith.constant 25 : i32
      %160 = arith.addi %112, %c25_i32 : i32
      %161 = arith.index_cast %160 : i32 to index
      %c0_99 = arith.constant 0 : index
      %162 = vector.load %arg0[%161, %c0_99] : memref<960x8xf32, #tpu.memory_space<vmem>>, vector<128x8xf32>
      %cst_100 = arith.constant dense<0.000000e+00> : vector<128x8xf32>
      %163 = tpu.matmul %162, %24, %cst_100 {dimension_numbers = #tpu.dot_dimension_numbers<[1], [0], [0], [1], [0, 0, 1, 1], [], []>} : vector<128x8xf32>, vector<8x8xf32>, vector<128x8xf32> -> vector<128x8xf32>
      %164 = arith.addf %159, %163 : vector<128x8xf32>
      %165 = arith.index_cast %112 : i32 to index
      %c0_101 = arith.constant 0 : index
      %166 = vector.load %arg5[%165, %c0_101] : memref<960x8xf32, #tpu.memory_space<vmem>>, vector<128x8xf32>
      tpu.vector_store %arg5[%165, %c0_101], %164 {strides = array<i32>} : memref<960x8xf32, #tpu.memory_space<vmem>>, vector<128x8xf32>,
      %167 = vector.broadcast %115 : vector<128x1xf32> to vector<128x8xf32>
      %168 = arith.mulf %164, %167 : vector<128x8xf32>
      %cst_102 = arith.constant dense<0.000000e+00> : vector<8xf32>
      %169 = vector.multi_reduction <add>, %168, %cst_102 [0] : vector<128x8xf32> to vector<8xf32>
      %170 = vector.shape_cast %169 : vector<8xf32> to vector<1x8xf32>
      %171 = arith.addf %arg7, %170 : vector<1x8xf32>
      %172 = arith.mulf %168, %164 : vector<128x8xf32>
      %cst_103 = arith.constant dense<0.000000e+00> : vector<8xf32>
      %173 = vector.multi_reduction <add>, %172, %cst_103 [0] : vector<128x8xf32> to vector<8xf32>
      %174 = vector.shape_cast %173 : vector<8xf32> to vector<1x8xf32>
      %175 = arith.addf %arg8, %174 : vector<1x8xf32>
      %cst_104 = arith.constant dense<0.000000e+00> : vector<128x8xf32>
      %176 = tpu.matmul %114, %6, %cst_104 {dimension_numbers = #tpu.dot_dimension_numbers<[1], [0], [0], [1], [0, 0, 1, 1], [], []>} : vector<128x8xf32>, vector<8x8xf32>, vector<128x8xf32> -> vector<128x8xf32>
      %177 = vector.broadcast %115 : vector<128x1xf32> to vector<128x8xf32>
      %178 = arith.mulf %176, %177 : vector<128x8xf32>
      %cst_105 = arith.constant dense<0.000000e+00> : vector<8xf32>
      %179 = vector.multi_reduction <add>, %178, %cst_105 [0] : vector<128x8xf32> to vector<8xf32>
      %180 = vector.shape_cast %179 : vector<8xf32> to vector<1x8xf32>
      %181 = arith.addf %arg9, %180 : vector<1x8xf32>
      %182 = arith.mulf %178, %176 : vector<128x8xf32>
      %cst_106 = arith.constant dense<0.000000e+00> : vector<8xf32>
      %183 = vector.multi_reduction <add>, %182, %cst_106 [0] : vector<128x8xf32> to vector<8xf32>
      %184 = vector.shape_cast %183 : vector<8xf32> to vector<1x8xf32>
      %185 = arith.addf %arg10, %184 : vector<1x8xf32>
      scf.yield %171, %175, %181, %185 : vector<1x8xf32>, vector<1x8xf32>, vector<1x8xf32>, vector<1x8xf32>
    }
    %c7_i32_27 = arith.constant 7 : i32
    %28 = vector.extract_strided_slice %4 {offsets = [0, 0], sizes = [1, 8], strides = [1, 1]} : vector<6x8xf32> to vector<1x8xf32>
    %29 = vector.extract_strided_slice %4 {offsets = [1, 0], sizes = [1, 8], strides = [1, 1]} : vector<6x8xf32> to vector<1x8xf32>
    %cst_28 = arith.constant 0.001953125 : f32
    %30 = vector.broadcast %cst_28 : f32 to vector<1x8xf32>
    %31 = arith.mulf %27#0, %30 : vector<1x8xf32>
    %cst_29 = arith.constant 0.001953125 : f32
    %32 = vector.broadcast %cst_29 : f32 to vector<1x8xf32>
    %33 = arith.mulf %27#1, %32 : vector<1x8xf32>
    %34 = arith.mulf %31, %31 : vector<1x8xf32>
    %35 = arith.subf %33, %34 : vector<1x8xf32>
    %cst_30 = arith.constant 0.000000e+00 : f32
    %36 = vector.broadcast %cst_30 : f32 to vector<1x8xf32>
    %37 = arith.maximumf %35, %36 : vector<1x8xf32>
    %cst_31 = arith.constant 9.99999974E-6 : f32
    %38 = vector.broadcast %cst_31 : f32 to vector<1x8xf32>
    %39 = arith.addf %37, %38 : vector<1x8xf32>
    %40 = math.rsqrt %39 : vector<1x8xf32>
    %41 = arith.mulf %28, %40 : vector<1x8xf32>
    %42 = arith.mulf %31, %41 : vector<1x8xf32>
    %43 = arith.subf %29, %42 : vector<1x8xf32>
    %44 = vector.extract_strided_slice %4 {offsets = [4, 0], sizes = [1, 8], strides = [1, 1]} : vector<6x8xf32> to vector<1x8xf32>
    %45 = vector.extract_strided_slice %4 {offsets = [5, 0], sizes = [1, 8], strides = [1, 1]} : vector<6x8xf32> to vector<1x8xf32>
    %cst_32 = arith.constant 0.001953125 : f32
    %46 = vector.broadcast %cst_32 : f32 to vector<1x8xf32>
    %47 = arith.mulf %27#2, %46 : vector<1x8xf32>
    %cst_33 = arith.constant 0.001953125 : f32
    %48 = vector.broadcast %cst_33 : f32 to vector<1x8xf32>
    %49 = arith.mulf %27#3, %48 : vector<1x8xf32>
    %50 = arith.mulf %47, %47 : vector<1x8xf32>
    %51 = arith.subf %49, %50 : vector<1x8xf32>
    %cst_34 = arith.constant 0.000000e+00 : f32
    %52 = vector.broadcast %cst_34 : f32 to vector<1x8xf32>
    %53 = arith.maximumf %51, %52 : vector<1x8xf32>
    %cst_35 = arith.constant 9.99999974E-6 : f32
    %54 = vector.broadcast %cst_35 : f32 to vector<1x8xf32>
    %55 = arith.addf %53, %54 : vector<1x8xf32>
    %56 = math.rsqrt %55 : vector<1x8xf32>
    %57 = arith.mulf %44, %56 : vector<1x8xf32>
    %58 = arith.mulf %47, %57 : vector<1x8xf32>
    %59 = arith.subf %45, %58 : vector<1x8xf32>
    %60 = vector.shape_cast %41 : vector<1x8xf32> to vector<1x8xf32>
    %61 = vector.broadcast %60 : vector<1x8xf32> to vector<128x8xf32>
    %62 = vector.shape_cast %43 : vector<1x8xf32> to vector<1x8xf32>
    %63 = vector.broadcast %62 : vector<1x8xf32> to vector<128x8xf32>
    %c0_i32_36 = arith.constant 0 : i32
    %c7_i32_37 = arith.constant 7 : i32
    %64 = arith.addi %c0_i32_36, %c7_i32_37 : i32
    %c1_i32_38 = arith.constant 1 : i32
    scf.for %arg6 = %c0_i32_36 to %64 step %c1_i32_38  : i32 {
      %c128_i32 = arith.constant 128 : i32
      %110 = arith.muli %arg6, %c128_i32 : i32
      %c32_i32 = arith.constant 32 : i32
      %111 = arith.addi %c32_i32, %110 : i32
      %112 = tpu.assume_multiple %111, 8 : i32
      %113 = arith.index_cast %112 : i32 to index
      %c0_79 = arith.constant 0 : index
      %114 = vector.load %arg0[%113, %c0_79] : memref<960x8xf32, #tpu.memory_space<vmem>>, vector<128x8xf32>
      %115 = vector.extract_strided_slice %114 {offsets = [0, 4], sizes = [128, 1], strides = [1, 1]} : vector<128x8xf32> to vector<128x1xf32>
      %116 = arith.index_cast %112 : i32 to index
      %c0_80 = arith.constant 0 : index
      %117 = vector.load %arg5[%116, %c0_80] : memref<960x8xf32, #tpu.memory_space<vmem>>, vector<128x8xf32>
      %118 = arith.mulf %117, %61 : vector<128x8xf32>
      %119 = arith.addf %118, %63 : vector<128x8xf32>
      %cst_81 = arith.constant 0.000000e+00 : f32
      %120 = vector.broadcast %cst_81 : f32 to vector<128x8xf32>
      %121 = arith.cmpf ogt, %119, %120 : vector<128x8xf32>
      %cst_82 = arith.constant 0.00999999977 : f32
      %122 = vector.broadcast %cst_82 : f32 to vector<128x8xf32>
      %123 = arith.mulf %122, %119 : vector<128x8xf32>
      %124 = arith.select %121, %119, %123 : vector<128x8xi1>, vector<128x8xf32>
      %125 = vector.broadcast %115 : vector<128x1xf32> to vector<128x8xf32>
      %126 = arith.mulf %124, %125 : vector<128x8xf32>
      %127 = arith.index_cast %112 : i32 to index
      %c0_83 = arith.constant 0 : index
      %128 = vector.load %arg5[%127, %c0_83] : memref<960x8xf32, #tpu.memory_space<vmem>>, vector<128x8xf32>
      tpu.vector_store %arg5[%127, %c0_83], %126 {strides = array<i32>} : memref<960x8xf32, #tpu.memory_space<vmem>>, vector<128x8xf32>,
    }
    %c7_i32_39 = arith.constant 7 : i32
    %c0_40 = arith.constant 0 : index
    %c0_41 = arith.constant 0 : index
    %c0_42 = arith.constant 0 : index
    %65 = vector.load %arg2[%c0_40, %c0_41, %c0_42] : memref<9x8x8xf32, #tpu.memory_space<vmem>>, vector<1x8x8xf32>
    %66 = vector.shape_cast %65 : vector<1x8x8xf32> to vector<8x8xf32>
    %c1_43 = arith.constant 1 : index
    %c0_44 = arith.constant 0 : index
    %c0_45 = arith.constant 0 : index
    %67 = vector.load %arg2[%c1_43, %c0_44, %c0_45] : memref<9x8x8xf32, #tpu.memory_space<vmem>>, vector<1x8x8xf32>
    %68 = vector.shape_cast %67 : vector<1x8x8xf32> to vector<8x8xf32>
    %c2_46 = arith.constant 2 : index
    %c0_47 = arith.constant 0 : index
    %c0_48 = arith.constant 0 : index
    %69 = vector.load %arg2[%c2_46, %c0_47, %c0_48] : memref<9x8x8xf32, #tpu.memory_space<vmem>>, vector<1x8x8xf32>
    %70 = vector.shape_cast %69 : vector<1x8x8xf32> to vector<8x8xf32>
    %c3_49 = arith.constant 3 : index
    %c0_50 = arith.constant 0 : index
    %c0_51 = arith.constant 0 : index
    %71 = vector.load %arg2[%c3_49, %c0_50, %c0_51] : memref<9x8x8xf32, #tpu.memory_space<vmem>>, vector<1x8x8xf32>
    %72 = vector.shape_cast %71 : vector<1x8x8xf32> to vector<8x8xf32>
    %c4_52 = arith.constant 4 : index
    %c0_53 = arith.constant 0 : index
    %c0_54 = arith.constant 0 : index
    %73 = vector.load %arg2[%c4_52, %c0_53, %c0_54] : memref<9x8x8xf32, #tpu.memory_space<vmem>>, vector<1x8x8xf32>
    %74 = vector.shape_cast %73 : vector<1x8x8xf32> to vector<8x8xf32>
    %c5_55 = arith.constant 5 : index
    %c0_56 = arith.constant 0 : index
    %c0_57 = arith.constant 0 : index
    %75 = vector.load %arg2[%c5_55, %c0_56, %c0_57] : memref<9x8x8xf32, #tpu.memory_space<vmem>>, vector<1x8x8xf32>
    %76 = vector.shape_cast %75 : vector<1x8x8xf32> to vector<8x8xf32>
    %c6_58 = arith.constant 6 : index
    %c0_59 = arith.constant 0 : index
    %c0_60 = arith.constant 0 : index
    %77 = vector.load %arg2[%c6_58, %c0_59, %c0_60] : memref<9x8x8xf32, #tpu.memory_space<vmem>>, vector<1x8x8xf32>
    %78 = vector.shape_cast %77 : vector<1x8x8xf32> to vector<8x8xf32>
    %c7_61 = arith.constant 7 : index
    %c0_62 = arith.constant 0 : index
    %c0_63 = arith.constant 0 : index
    %79 = vector.load %arg2[%c7_61, %c0_62, %c0_63] : memref<9x8x8xf32, #tpu.memory_space<vmem>>, vector<1x8x8xf32>
    %80 = vector.shape_cast %79 : vector<1x8x8xf32> to vector<8x8xf32>
    %c8_64 = arith.constant 8 : index
    %c0_65 = arith.constant 0 : index
    %c0_66 = arith.constant 0 : index
    %81 = vector.load %arg2[%c8_64, %c0_65, %c0_66] : memref<9x8x8xf32, #tpu.memory_space<vmem>>, vector<1x8x8xf32>
    %82 = vector.shape_cast %81 : vector<1x8x8xf32> to vector<8x8xf32>
    %c0_i32_67 = arith.constant 0 : i32
    %c7_i32_68 = arith.constant 7 : i32
    %83 = arith.addi %c0_i32_67, %c7_i32_68 : i32
    %c1_i32_69 = arith.constant 1 : i32
    %84:2 = scf.for %arg6 = %c0_i32_67 to %83 step %c1_i32_69 iter_args(%arg7 = %25, %arg8 = %25) -> (vector<1x8xf32>, vector<1x8xf32>)  : i32 {
      %c128_i32 = arith.constant 128 : i32
      %110 = arith.muli %arg6, %c128_i32 : i32
      %c32_i32 = arith.constant 32 : i32
      %111 = arith.addi %c32_i32, %110 : i32
      %112 = tpu.assume_multiple %111, 8 : i32
      %113 = arith.index_cast %112 : i32 to index
      %c0_79 = arith.constant 0 : index
      %114 = vector.load %arg0[%113, %c0_79] : memref<960x8xf32, #tpu.memory_space<vmem>>, vector<128x8xf32>
      %115 = vector.extract_strided_slice %114 {offsets = [0, 4], sizes = [128, 1], strides = [1, 1]} : vector<128x8xf32> to vector<128x1xf32>
      %cst_80 = arith.constant 0.000000e+00 : f32
      %116 = vector.broadcast %cst_80 : f32 to vector<128x8xf32>
      %c-25_i32 = arith.constant -25 : i32
      %117 = arith.addi %112, %c-25_i32 : i32
      %118 = arith.index_cast %117 : i32 to index
      %c0_81 = arith.constant 0 : index
      %119 = vector.load %arg5[%118, %c0_81] : memref<960x8xf32, #tpu.memory_space<vmem>>, vector<128x8xf32>
      %cst_82 = arith.constant dense<0.000000e+00> : vector<128x8xf32>
      %120 = tpu.matmul %119, %66, %cst_82 {dimension_numbers = #tpu.dot_dimension_numbers<[1], [0], [0], [1], [0, 0, 1, 1], [], []>} : vector<128x8xf32>, vector<8x8xf32>, vector<128x8xf32> -> vector<128x8xf32>
      %121 = arith.addf %116, %120 : vector<128x8xf32>
      %c-24_i32 = arith.constant -24 : i32
      %122 = arith.addi %112, %c-24_i32 : i32
      %123 = tpu.assume_multiple %122, 8 : i32
      %124 = arith.index_cast %123 : i32 to index
      %c0_83 = arith.constant 0 : index
      %125 = vector.load %arg5[%124, %c0_83] : memref<960x8xf32, #tpu.memory_space<vmem>>, vector<128x8xf32>
      %cst_84 = arith.constant dense<0.000000e+00> : vector<128x8xf32>
      %126 = tpu.matmul %125, %68, %cst_84 {dimension_numbers = #tpu.dot_dimension_numbers<[1], [0], [0], [1], [0, 0, 1, 1], [], []>} : vector<128x8xf32>, vector<8x8xf32>, vector<128x8xf32> -> vector<128x8xf32>
      %127 = arith.addf %121, %126 : vector<128x8xf32>
      %c-23_i32 = arith.constant -23 : i32
      %128 = arith.addi %112, %c-23_i32 : i32
      %129 = arith.index_cast %128 : i32 to index
      %c0_85 = arith.constant 0 : index
      %130 = vector.load %arg5[%129, %c0_85] : memref<960x8xf32, #tpu.memory_space<vmem>>, vector<128x8xf32>
      %cst_86 = arith.constant dense<0.000000e+00> : vector<128x8xf32>
      %131 = tpu.matmul %130, %70, %cst_86 {dimension_numbers = #tpu.dot_dimension_numbers<[1], [0], [0], [1], [0, 0, 1, 1], [], []>} : vector<128x8xf32>, vector<8x8xf32>, vector<128x8xf32> -> vector<128x8xf32>
      %132 = arith.addf %127, %131 : vector<128x8xf32>
      %c-1_i32 = arith.constant -1 : i32
      %133 = arith.addi %112, %c-1_i32 : i32
      %134 = arith.index_cast %133 : i32 to index
      %c0_87 = arith.constant 0 : index
      %135 = vector.load %arg5[%134, %c0_87] : memref<960x8xf32, #tpu.memory_space<vmem>>, vector<128x8xf32>
      %cst_88 = arith.constant dense<0.000000e+00> : vector<128x8xf32>
      %136 = tpu.matmul %135, %72, %cst_88 {dimension_numbers = #tpu.dot_dimension_numbers<[1], [0], [0], [1], [0, 0, 1, 1], [], []>} : vector<128x8xf32>, vector<8x8xf32>, vector<128x8xf32> -> vector<128x8xf32>
      %137 = arith.addf %132, %136 : vector<128x8xf32>
      %c0_i32_89 = arith.constant 0 : i32
      %138 = arith.addi %112, %c0_i32_89 : i32
      %139 = tpu.assume_multiple %138, 8 : i32
      %140 = arith.index_cast %139 : i32 to index
      %c0_90 = arith.constant 0 : index
      %141 = vector.load %arg5[%140, %c0_90] : memref<960x8xf32, #tpu.memory_space<vmem>>, vector<128x8xf32>
      %cst_91 = arith.constant dense<0.000000e+00> : vector<128x8xf32>
      %142 = tpu.matmul %141, %74, %cst_91 {dimension_numbers = #tpu.dot_dimension_numbers<[1], [0], [0], [1], [0, 0, 1, 1], [], []>} : vector<128x8xf32>, vector<8x8xf32>, vector<128x8xf32> -> vector<128x8xf32>
      %143 = arith.addf %137, %142 : vector<128x8xf32>
      %c1_i32_92 = arith.constant 1 : i32
      %144 = arith.addi %112, %c1_i32_92 : i32
      %145 = arith.index_cast %144 : i32 to index
      %c0_93 = arith.constant 0 : index
      %146 = vector.load %arg5[%145, %c0_93] : memref<960x8xf32, #tpu.memory_space<vmem>>, vector<128x8xf32>
      %cst_94 = arith.constant dense<0.000000e+00> : vector<128x8xf32>
      %147 = tpu.matmul %146, %76, %cst_94 {dimension_numbers = #tpu.dot_dimension_numbers<[1], [0], [0], [1], [0, 0, 1, 1], [], []>} : vector<128x8xf32>, vector<8x8xf32>, vector<128x8xf32> -> vector<128x8xf32>
      %148 = arith.addf %143, %147 : vector<128x8xf32>
      %c23_i32 = arith.constant 23 : i32
      %149 = arith.addi %112, %c23_i32 : i32
      %150 = arith.index_cast %149 : i32 to index
      %c0_95 = arith.constant 0 : index
      %151 = vector.load %arg5[%150, %c0_95] : memref<960x8xf32, #tpu.memory_space<vmem>>, vector<128x8xf32>
      %cst_96 = arith.constant dense<0.000000e+00> : vector<128x8xf32>
      %152 = tpu.matmul %151, %78, %cst_96 {dimension_numbers = #tpu.dot_dimension_numbers<[1], [0], [0], [1], [0, 0, 1, 1], [], []>} : vector<128x8xf32>, vector<8x8xf32>, vector<128x8xf32> -> vector<128x8xf32>
      %153 = arith.addf %148, %152 : vector<128x8xf32>
      %c24_i32 = arith.constant 24 : i32
      %154 = arith.addi %112, %c24_i32 : i32
      %155 = tpu.assume_multiple %154, 8 : i32
      %156 = arith.index_cast %155 : i32 to index
      %c0_97 = arith.constant 0 : index
      %157 = vector.load %arg5[%156, %c0_97] : memref<960x8xf32, #tpu.memory_space<vmem>>, vector<128x8xf32>
      %cst_98 = arith.constant dense<0.000000e+00> : vector<128x8xf32>
      %158 = tpu.matmul %157, %80, %cst_98 {dimension_numbers = #tpu.dot_dimension_numbers<[1], [0], [0], [1], [0, 0, 1, 1], [], []>} : vector<128x8xf32>, vector<8x8xf32>, vector<128x8xf32> -> vector<128x8xf32>
      %159 = arith.addf %153, %158 : vector<128x8xf32>
      %c25_i32 = arith.constant 25 : i32
      %160 = arith.addi %112, %c25_i32 : i32
      %161 = arith.index_cast %160 : i32 to index
      %c0_99 = arith.constant 0 : index
      %162 = vector.load %arg5[%161, %c0_99] : memref<960x8xf32, #tpu.memory_space<vmem>>, vector<128x8xf32>
      %cst_100 = arith.constant dense<0.000000e+00> : vector<128x8xf32>
      %163 = tpu.matmul %162, %82, %cst_100 {dimension_numbers = #tpu.dot_dimension_numbers<[1], [0], [0], [1], [0, 0, 1, 1], [], []>} : vector<128x8xf32>, vector<8x8xf32>, vector<128x8xf32> -> vector<128x8xf32>
      %164 = arith.addf %159, %163 : vector<128x8xf32>
      %c128_i32_101 = arith.constant 128 : i32
      %165 = arith.muli %arg6, %c128_i32_101 : i32
      %166 = tpu.assume_multiple %165, 8 : i32
      %167 = arith.index_cast %166 : i32 to index
      %c0_102 = arith.constant 0 : index
      %168 = vector.load %arg4[%167, %c0_102] : memref<896x8xf32, #tpu.memory_space<vmem>>, vector<128x8xf32>
      tpu.vector_store %arg4[%167, %c0_102], %164 {strides = array<i32>} : memref<896x8xf32, #tpu.memory_space<vmem>>, vector<128x8xf32>,
      %169 = vector.broadcast %115 : vector<128x1xf32> to vector<128x8xf32>
      %170 = arith.mulf %164, %169 : vector<128x8xf32>
      %cst_103 = arith.constant dense<0.000000e+00> : vector<8xf32>
      %171 = vector.multi_reduction <add>, %170, %cst_103 [0] : vector<128x8xf32> to vector<8xf32>
      %172 = vector.shape_cast %171 : vector<8xf32> to vector<1x8xf32>
      %173 = arith.addf %arg7, %172 : vector<1x8xf32>
      %174 = arith.mulf %170, %164 : vector<128x8xf32>
      %cst_104 = arith.constant dense<0.000000e+00> : vector<8xf32>
      %175 = vector.multi_reduction <add>, %174, %cst_104 [0] : vector<128x8xf32> to vector<8xf32>
      %176 = vector.shape_cast %175 : vector<8xf32> to vector<1x8xf32>
      %177 = arith.addf %arg8, %176 : vector<1x8xf32>
      scf.yield %173, %177 : vector<1x8xf32>, vector<1x8xf32>
    }
    %c7_i32_70 = arith.constant 7 : i32
    %85 = vector.extract_strided_slice %4 {offsets = [2, 0], sizes = [1, 8], strides = [1, 1]} : vector<6x8xf32> to vector<1x8xf32>
    %86 = vector.extract_strided_slice %4 {offsets = [3, 0], sizes = [1, 8], strides = [1, 1]} : vector<6x8xf32> to vector<1x8xf32>
    %cst_71 = arith.constant 0.001953125 : f32
    %87 = vector.broadcast %cst_71 : f32 to vector<1x8xf32>
    %88 = arith.mulf %84#0, %87 : vector<1x8xf32>
    %cst_72 = arith.constant 0.001953125 : f32
    %89 = vector.broadcast %cst_72 : f32 to vector<1x8xf32>
    %90 = arith.mulf %84#1, %89 : vector<1x8xf32>
    %91 = arith.mulf %88, %88 : vector<1x8xf32>
    %92 = arith.subf %90, %91 : vector<1x8xf32>
    %cst_73 = arith.constant 0.000000e+00 : f32
    %93 = vector.broadcast %cst_73 : f32 to vector<1x8xf32>
    %94 = arith.maximumf %92, %93 : vector<1x8xf32>
    %cst_74 = arith.constant 9.99999974E-6 : f32
    %95 = vector.broadcast %cst_74 : f32 to vector<1x8xf32>
    %96 = arith.addf %94, %95 : vector<1x8xf32>
    %97 = math.rsqrt %96 : vector<1x8xf32>
    %98 = arith.mulf %85, %97 : vector<1x8xf32>
    %99 = arith.mulf %88, %98 : vector<1x8xf32>
    %100 = arith.subf %86, %99 : vector<1x8xf32>
    %101 = vector.shape_cast %98 : vector<1x8xf32> to vector<1x8xf32>
    %102 = vector.broadcast %101 : vector<1x8xf32> to vector<128x8xf32>
    %103 = vector.shape_cast %100 : vector<1x8xf32> to vector<1x8xf32>
    %104 = vector.broadcast %103 : vector<1x8xf32> to vector<128x8xf32>
    %105 = vector.shape_cast %57 : vector<1x8xf32> to vector<1x8xf32>
    %106 = vector.broadcast %105 : vector<1x8xf32> to vector<128x8xf32>
    %107 = vector.shape_cast %59 : vector<1x8xf32> to vector<1x8xf32>
    %108 = vector.broadcast %107 : vector<1x8xf32> to vector<128x8xf32>
    %c0_i32_75 = arith.constant 0 : i32
    %c7_i32_76 = arith.constant 7 : i32
    %109 = arith.addi %c0_i32_75, %c7_i32_76 : i32
    %c1_i32_77 = arith.constant 1 : i32
    scf.for %arg6 = %c0_i32_75 to %109 step %c1_i32_77  : i32 {
      %c128_i32 = arith.constant 128 : i32
      %110 = arith.muli %arg6, %c128_i32 : i32
      %c32_i32 = arith.constant 32 : i32
      %111 = arith.addi %c32_i32, %110 : i32
      %112 = tpu.assume_multiple %111, 8 : i32
      %c128_i32_79 = arith.constant 128 : i32
      %113 = arith.muli %arg6, %c128_i32_79 : i32
      %114 = tpu.assume_multiple %113, 8 : i32
      %115 = arith.index_cast %114 : i32 to index
      %c0_80 = arith.constant 0 : index
      %116 = vector.load %arg4[%115, %c0_80] : memref<896x8xf32, #tpu.memory_space<vmem>>, vector<128x8xf32>
      %117 = arith.mulf %116, %102 : vector<128x8xf32>
      %118 = arith.addf %117, %104 : vector<128x8xf32>
      %cst_81 = arith.constant 0.000000e+00 : f32
      %119 = vector.broadcast %cst_81 : f32 to vector<128x8xf32>
      %120 = arith.cmpf ogt, %118, %119 : vector<128x8xf32>
      %cst_82 = arith.constant 0.00999999977 : f32
      %121 = vector.broadcast %cst_82 : f32 to vector<128x8xf32>
      %122 = arith.mulf %121, %118 : vector<128x8xf32>
      %123 = arith.select %120, %118, %122 : vector<128x8xi1>, vector<128x8xf32>
      %124 = arith.index_cast %112 : i32 to index
      %c0_83 = arith.constant 0 : index
      %125 = vector.load %arg0[%124, %c0_83] : memref<960x8xf32, #tpu.memory_space<vmem>>, vector<128x8xf32>
      %cst_84 = arith.constant dense<0.000000e+00> : vector<128x8xf32>
      %126 = tpu.matmul %125, %6, %cst_84 {dimension_numbers = #tpu.dot_dimension_numbers<[1], [0], [0], [1], [0, 0, 1, 1], [], []>} : vector<128x8xf32>, vector<8x8xf32>, vector<128x8xf32> -> vector<128x8xf32>
      %127 = arith.mulf %126, %106 : vector<128x8xf32>
      %128 = arith.addf %123, %127 : vector<128x8xf32>
      %129 = arith.addf %128, %108 : vector<128x8xf32>
      %130 = arith.index_cast %114 : i32 to index
      %c0_85 = arith.constant 0 : index
      %131 = vector.load %arg4[%130, %c0_85] : memref<896x8xf32, #tpu.memory_space<vmem>>, vector<128x8xf32>
      tpu.vector_store %arg4[%130, %c0_85], %129 {strides = array<i32>} : memref<896x8xf32, #tpu.memory_space<vmem>>, vector<128x8xf32>,
    }
    %c7_i32_78 = arith.constant 7 : i32
    return
  }
}

</mosaic_0001>

<llo_original>
// kernel: tpu_custom_call.1
$region0: #{tpu_custom_call.1}
  #allocation0 [shape = 'u32[]', space=smem, size = 0x4, offset = 0x4, fixed_abs, tag = 'smem constant byte address 0x4 - core index']
  #allocation1 [shape = 'u32[144,128]{1,0:T(1,128)}', space=vmem, size = 0x12000, scoped, tag = 'internal scratch']
  #allocation2 [shape = 'f32[960,8]{1,0:T(8,128)}', space=vmem, size = 0x78000, scoped, tag = 'scratch operand']
  %s0 = inlined_call_operand.vmem [shape: f32[960,8], index: 0, kind: input, shape index: {}]
  %s1 = inlined_call_operand.vmem [shape: f32[10,8,8], index: 1, kind: input, shape index: {}]
  %s2 = inlined_call_operand.vmem [shape: f32[9,8,8], index: 2, kind: input, shape index: {}]
  %s3 = inlined_call_operand.vmem [shape: f32[6,8], index: 3, kind: input, shape index: {}]
  %s4 = inlined_call_operand.vmem [shape: f32[896,8], index: 4, kind: output, shape index: {}]
  %s5 = sld [smem:[#allocation0]]
  $region54: #{tpu_custom_call.1} parent=0
    _
  %s7 = ssub.s32 1, %s5
  %s8 = scalar_select 0, %s7, %s5
  // Predicated region
  $region2: #{tpu_custom_call.1} parent=0 // pred_check
    _
  $region3: #{tpu_custom_call.1} parent=0 // pred_check_branch
    %10 = sbr.rel (0) target = $region5
  $region4: #{tpu_custom_call.1} parent=0 // pred_region
    _
  $region5: #{tpu_custom_call.1} parent=0 // pred_fallthru
    _
  // Predicated region
  $region6: #{tpu_custom_call.1} parent=0 // pred_check
    _
  $region7: #{tpu_custom_call.1} parent=0 // pred_check_branch
    %12 = sbr.rel (0) target = $region9
  $region8: #{tpu_custom_call.1} parent=0 // pred_region
    _
  $region9: #{tpu_custom_call.1} parent=0 // pred_fallthru
    _
  // Predicated region
  $region10: #{tpu_custom_call.1} parent=0 // pred_check
    _
  $region11: #{tpu_custom_call.1} parent=0 // pred_check_branch
    %14 = sbr.rel (0) target = $region13
  $region12: #{tpu_custom_call.1} parent=0 // pred_region
    _
  $region13: #{tpu_custom_call.1} parent=0 // pred_fallthru
    _
  // Predicated region
  $region14: #{tpu_custom_call.1} parent=0 // pred_check
    _
  $region15: #{tpu_custom_call.1} parent=0 // pred_check_branch
    %16 = sbr.rel (0) target = $region17
  $region16: #{tpu_custom_call.1} parent=0 // pred_region
    _
  $region17: #{tpu_custom_call.1} parent=0 // pred_fallthru
    _
  %vm17 = vcmask 64512
  %18 = vst.msk [vmem:[#allocation2] sm:$0xff] %vm17, 0.0
  %19 = vst.msk [vmem:[#allocation2 + $0x8] sm:$0xff] %vm17, 0.0
  %20 = vst.msk [vmem:[#allocation2 + $0x10] sm:$0xff] %vm17, 0.0
  %21 = vst.msk [vmem:[#allocation2 + $0x18] sm:$0xff] %vm17, 0.0
  %22 = vst.msk [vmem:[#allocation2 + $0x3a0] sm:$0xff] %vm17, 0.0
  %23 = vst.msk [vmem:[#allocation2 + $0x3a8] sm:$0xff] %vm17, 0.0
  %24 = vst.msk [vmem:[#allocation2 + $0x3b0] sm:$0xff] %vm17, 0.0
  %25 = vst.msk [vmem:[#allocation2 + $0x3b8] sm:$0xff] %vm17, 0.0
  %v26 = vld [vmem:[%s3] sm:$0x3f]
  %s27 = scalar_lea.vmem %s1, 72
  %v28 = vld [vmem:[%s27] sm:$0xff]
  %v29 = vld [vmem:[%s1] sm:$0xff]
  %s30 = scalar_lea.vmem %s1, 8
  %v31 = vld [vmem:[%s30] sm:$0xff]
  %s32 = scalar_lea.vmem %s1, 16
  %v33 = vld [vmem:[%s32] sm:$0xff]
  %s34 = scalar_lea.vmem %s1, 24
  %v35 = vld [vmem:[%s34] sm:$0xff]
  %s36 = scalar_lea.vmem %s1, 32
  %v37 = vld [vmem:[%s36] sm:$0xff]
  %s38 = scalar_lea.vmem %s1, 40
  %v39 = vld [vmem:[%s38] sm:$0xff]
  %s40 = scalar_lea.vmem %s1, 48
  %v41 = vld [vmem:[%s40] sm:$0xff]
  %s42 = scalar_lea.vmem %s1, 56
  %v43 = vld [vmem:[%s42] sm:$0xff]
  %s44 = scalar_lea.vmem %s1, 64
  %v45 = vld [vmem:[%s44] sm:$0xff]
  loop: start=0, step=1, limit=7
  $region18: #{tpu_custom_call.1} parent=0 // loop_pre_header
    _
  $region19: #{tpu_custom_call.1} parent=0 // loop_header
    %s47 = sphi 0, %s51
    %p48 = scmp.ge.s32.totalorder %s47, 7
    %v52 = vphi 0.0, %v2235
    %v53 = vphi 0.0, %v2289
    %v54 = vphi 0.0, %v2520
    %v55 = vphi 0.0, %v2574
  $region20: #{tpu_custom_call.1} parent=0 // loop_header_branch
    %50 = sbr.rel (%p48) target = $region24
  $region21: #{tpu_custom_call.1} parent=0 // loop_body
    %s56 = smul.u32 %s47, 128
    %s57 = sadd.s32 %s56, 32
    %s58 = scalar_lea.vmem %s0, %s57
    %v59 = vld [vmem:[%s58] sm:$0xff]
    %v60 = vld [vmem:[%s58 + $0x8] sm:$0xff]
    %v61 = vld [vmem:[%s58 + $0x10] sm:$0xff]
    %v62 = vld [vmem:[%s58 + $0x18] sm:$0xff]
    %v63 = vld [vmem:[%s58 + $0x20] sm:$0xff]
    %v64 = vld [vmem:[%s58 + $0x28] sm:$0xff]
    %v65 = vld [vmem:[%s58 + $0x30] sm:$0xff]
    %v66 = vld [vmem:[%s58 + $0x38] sm:$0xff]
    %v67 = vld [vmem:[%s58 + $0x40] sm:$0xff]
    %v68 = vld [vmem:[%s58 + $0x48] sm:$0xff]
    %v69 = vld [vmem:[%s58 + $0x50] sm:$0xff]
    %v70 = vld [vmem:[%s58 + $0x58] sm:$0xff]
    %v71 = vld [vmem:[%s58 + $0x60] sm:$0xff]
    %v72 = vld [vmem:[%s58 + $0x68] sm:$0xff]
    %v73 = vld [vmem:[%s58 + $0x70] sm:$0xff]
    %v74 = vld [vmem:[%s58 + $0x78] sm:$0xff]
    %s75 = sadd.s32 %s57, 4294967271
    %s76 = scalar_lea.vmem %s0, %s75
    %v77 = vld [vmem:[%s76] sm:$0xff]
    %v78 = vld [vmem:[%s76 + $0x8] sm:$0xff]
    %v79 = vld [vmem:[%s76 + $0x10] sm:$0xff]
    %v80 = vld [vmem:[%s76 + $0x18] sm:$0xff]
    %v81 = vld [vmem:[%s76 + $0x20] sm:$0xff]
    %v82 = vld [vmem:[%s76 + $0x28] sm:$0xff]
    %v83 = vld [vmem:[%s76 + $0x30] sm:$0xff]
    %v84 = vld [vmem:[%s76 + $0x38] sm:$0xff]
    %v85 = vld [vmem:[%s76 + $0x40] sm:$0xff]
    %v86 = vld [vmem:[%s76 + $0x48] sm:$0xff]
    %v87 = vld [vmem:[%s76 + $0x50] sm:$0xff]
    %v88 = vld [vmem:[%s76 + $0x58] sm:$0xff]
    %v89 = vld [vmem:[%s76 + $0x60] sm:$0xff]
    %v90 = vld [vmem:[%s76 + $0x68] sm:$0xff]
    %v91 = vld [vmem:[%s76 + $0x70] sm:$0xff]
    %v92 = vld [vmem:[%s76 + $0x78] sm:$0xff]
    %s93 = sadd.s32 %s57, 4294967272
    %s94 = scalar_lea.vmem %s0, %s93
    %v95 = vld [vmem:[%s94] sm:$0xff]
    %v96 = vld [vmem:[%s94 + $0x8] sm:$0xff]
    %v97 = vld [vmem:[%s94 + $0x10] sm:$0xff]
    %v98 = vld [vmem:[%s94 + $0x18] sm:$0xff]
    %v99 = vld [vmem:[%s94 + $0x20] sm:$0xff]
    %v100 = vld [vmem:[%s94 + $0x28] sm:$0xff]
    %v101 = vld [vmem:[%s94 + $0x30] sm:$0xff]
    %v102 = vld [vmem:[%s94 + $0x38] sm:$0xff]
    %v103 = vld [vmem:[%s94 + $0x40] sm:$0xff]
    %v104 = vld [vmem:[%s94 + $0x48] sm:$0xff]
    %v105 = vld [vmem:[%s94 + $0x50] sm:$0xff]
    %v106 = vld [vmem:[%s94 + $0x58] sm:$0xff]
    %v107 = vld [vmem:[%s94 + $0x60] sm:$0xff]
    %v108 = vld [vmem:[%s94 + $0x68] sm:$0xff]
    %v109 = vld [vmem:[%s94 + $0x70] sm:$0xff]
    %v110 = vld [vmem:[%s94 + $0x78] sm:$0xff]
    %v112 = vsel %vm17, %v95, 0
    %v115 = vsel %vm17, %v96, 0
    %v118 = vsel %vm17, %v97, 0
    %v121 = vsel %vm17, %v98, 0
    %v124 = vsel %vm17, %v99, 0
    %v127 = vsel %vm17, %v100, 0
    %v130 = vsel %vm17, %v101, 0
    %v133 = vsel %vm17, %v102, 0
    %v136 = vsel %vm17, %v103, 0
    %v139 = vsel %vm17, %v104, 0
    %v142 = vsel %vm17, %v105, 0
    %v145 = vsel %vm17, %v106, 0
    %v148 = vsel %vm17, %v107, 0
    %v151 = vsel %vm17, %v108, 0
    %v154 = vsel %vm17, %v109, 0
    %v157 = vsel %vm17, %v110, 0
    %159 = vmatprep.subr.mxu0 0.0
    %160 = vmatpush1.msra.mxu0 %v31
    %161 = vmatprep.subr.mxu0 0.0
    %162 = vmatpush1.msra.mxu0 0.0
    %163 = vmatprep.subr.mxu0 0.0
    %164 = vmatpush1.msra.mxu0 0.0
    %165 = vmatprep.subr.mxu0 0.0
    %166 = vmatpush1.msra.mxu0 0.0
    %167 = vmatprep.subr.mxu0 0.0
    %168 = vmatpush1.msra.mxu0 0.0
    %169 = vmatprep.subr.mxu0 0.0
    %170 = vmatpush1.msra.mxu0 0.0
    %171 = vmatprep.subr.mxu0 0.0
    %172 = vmatpush1.msra.mxu0 0.0
    %173 = vmatprep.subr.mxu0 0.0
    %174 = vmatpush1.msra.mxu0 0.0
    %175 = vmatprep.subr.mxu0 0.0
    %176 = vmatpush1.msra.mxu0 0.0
    %177 = vmatprep.subr.mxu0 0.0
    %178 = vmatpush1.msra.mxu0 0.0
    %179 = vmatprep.subr.mxu0 0.0
    %180 = vmatpush1.msra.mxu0 0.0
    %181 = vmatprep.subr.mxu0 0.0
    %182 = vmatpush1.msra.mxu0 0.0
    %183 = vmatprep.subr.mxu0 0.0
    %184 = vmatpush1.msra.mxu0 0.0
    %185 = vmatprep.subr.mxu0 0.0
    %186 = vmatpush1.msra.mxu0 0.0
    %187 = vmatprep.subr.mxu0 0.0
    %188 = vmatpush1.msra.mxu0 0.0
    %189 = vmatprep.subr.mxu0 0.0
    %190 = vmatpush1.msra.mxu0 0.0
    %191 = vmatprep.subr.mxu0 0.0
    %192 = vmatpush1.msra.mxu0 0.0
    %193 = vmatprep.subr.mxu0 0.0
    %194 = vmatpush1.msra.mxu0 0.0
    %195 = vmatprep.subr.mxu0 0.0
    %196 = vmatpush1.msra.mxu0 0.0
    %197 = vmatprep.subr.mxu0 0.0
    %198 = vmatpush1.msra.mxu0 0.0
    %199 = vmatprep.subr.mxu0 0.0
    %200 = vmatpush1.msra.mxu0 0.0
    %201 = vmatprep.subr.mxu0 0.0
    %202 = vmatpush1.msra.mxu0 0.0
    %203 = vmatprep.subr.mxu0 0.0
    %204 = vmatpush1.msra.mxu0 0.0
    %205 = vmatprep.subr.mxu0 0.0
    %206 = vmatpush1.msra.mxu0 0.0
    %207 = vmatprep.subr.mxu0 0.0
    %208 = vmatpush1.msra.mxu0 0.0
    %209 = vmatprep.subr.mxu0 0.0
    %210 = vmatpush1.msra.mxu0 0.0
    %211 = vmatprep.subr.mxu0 0.0
    %212 = vmatpush1.msra.mxu0 0.0
    %213 = vmatprep.subr.mxu0 0.0
    %214 = vmatpush1.msra.mxu0 0.0
    %215 = vmatprep.subr.mxu0 0.0
    %216 = vmatpush1.msra.mxu0 0.0
    %217 = vmatprep.subr.mxu0 0.0
    %218 = vmatpush1.msra.mxu0 0.0
    %219 = vmatprep.subr.mxu0 0.0
    %220 = vmatpush1.msra.mxu0 0.0
    %221 = vmatprep.subr.mxu0 0.0
    %222 = vmatpush1.msra.mxu0 0.0
    %223 = vmatprep.mubr.f32.mxu0 0.0
    %224 = vmatmul.mubr.f32.gmra.mrb[0].mxu0 %v112
    %v225 = vpop.f32.mrb[0].mxu0
    %v226 = vadd.f32 0.0, %v225
    %v227 = vpop.f32.mrb[0].mxu0
    %228 = vmatprep.mubr.f32.mxu0 0.0
    %229 = vmatmul.mubr.f32.gmra.mrb[0].mxu0 %v115
    %v230 = vpop.f32.mrb[0].mxu0
    %v231 = vadd.f32 0.0, %v230
    %v232 = vpop.f32.mrb[0].mxu0
    %233 = vmatprep.mubr.f32.mxu0 0.0
    %234 = vmatmul.mubr.f32.gmra.mrb[0].mxu0 %v118
    %v235 = vpop.f32.mrb[0].mxu0
    %v236 = vadd.f32 0.0, %v235
    %v237 = vpop.f32.mrb[0].mxu0
    %238 = vmatprep.mubr.f32.mxu0 0.0
    %239 = vmatmul.mubr.f32.gmra.mrb[0].mxu0 %v121
    %v240 = vpop.f32.mrb[0].mxu0
    %v241 = vadd.f32 0.0, %v240
    %v242 = vpop.f32.mrb[0].mxu0
    %243 = vmatprep.mubr.f32.mxu0 0.0
    %244 = vmatmul.mubr.f32.gmra.mrb[0].mxu0 %v124
    %v245 = vpop.f32.mrb[0].mxu0
    %v246 = vadd.f32 0.0, %v245
    %v247 = vpop.f32.mrb[0].mxu0
    %248 = vmatprep.mubr.f32.mxu0 0.0
    %249 = vmatmul.mubr.f32.gmra.mrb[0].mxu0 %v127
    %v250 = vpop.f32.mrb[0].mxu0
    %v251 = vadd.f32 0.0, %v250
    %v252 = vpop.f32.mrb[0].mxu0
    %253 = vmatprep.mubr.f32.mxu0 0.0
    %254 = vmatmul.mubr.f32.gmra.mrb[0].mxu0 %v130
    %v255 = vpop.f32.mrb[0].mxu0
    %v256 = vadd.f32 0.0, %v255
    %v257 = vpop.f32.mrb[0].mxu0
    %258 = vmatprep.mubr.f32.mxu0 0.0
    %259 = vmatmul.mubr.f32.gmra.mrb[0].mxu0 %v133
    %v260 = vpop.f32.mrb[0].mxu0
    %v261 = vadd.f32 0.0, %v260
    %v262 = vpop.f32.mrb[0].mxu0
    %263 = vmatprep.mubr.f32.mxu0 0.0
    %264 = vmatmul.mubr.f32.gmra.mrb[0].mxu0 %v136
    %v265 = vpop.f32.mrb[0].mxu0
    %v266 = vadd.f32 0.0, %v265
    %v267 = vpop.f32.mrb[0].mxu0
    %268 = vmatprep.mubr.f32.mxu0 0.0
    %269 = vmatmul.mubr.f32.gmra.mrb[0].mxu0 %v139
    %v270 = vpop.f32.mrb[0].mxu0
    %v271 = vadd.f32 0.0, %v270
    %v272 = vpop.f32.mrb[0].mxu0
    %273 = vmatprep.mubr.f32.mxu0 0.0
    %274 = vmatmul.mubr.f32.gmra.mrb[0].mxu0 %v142
    %v275 = vpop.f32.mrb[0].mxu0
    %v276 = vadd.f32 0.0, %v275
    %v277 = vpop.f32.mrb[0].mxu0
    %278 = vmatprep.mubr.f32.mxu0 0.0
    %279 = vmatmul.mubr.f32.gmra.mrb[0].mxu0 %v145
    %v280 = vpop.f32.mrb[0].mxu0
    %v281 = vadd.f32 0.0, %v280
    %v282 = vpop.f32.mrb[0].mxu0
    %283 = vmatprep.mubr.f32.mxu0 0.0
    %284 = vmatmul.mubr.f32.gmra.mrb[0].mxu0 %v148
    %v285 = vpop.f32.mrb[0].mxu0
    %v286 = vadd.f32 0.0, %v285
    %v287 = vpop.f32.mrb[0].mxu0
    %288 = vmatprep.mubr.f32.mxu0 0.0
    %289 = vmatmul.mubr.f32.gmra.mrb[0].mxu0 %v151
    %v290 = vpop.f32.mrb[0].mxu0
    %v291 = vadd.f32 0.0, %v290
    %v292 = vpop.f32.mrb[0].mxu0
    %293 = vmatprep.mubr.f32.mxu0 0.0
    %294 = vmatmul.mubr.f32.gmra.mrb[0].mxu0 %v154
    %v295 = vpop.f32.mrb[0].mxu0
    %v296 = vadd.f32 0.0, %v295
    %v297 = vpop.f32.mrb[0].mxu0
    %298 = vmatprep.mubr.f32.mxu0 0.0
    %299 = vmatmul.mubr.f32.gmra.mrb[0].mxu0 %v157
    %v300 = vpop.f32.mrb[0].mxu0
    %v301 = vadd.f32 0.0, %v300
    %v302 = vpop.f32.mrb[0].mxu0
    %303 = vdwg.mxu0
    %v305 = vsel %vm17, %v77, 0
    %v308 = vsel %vm17, %v78, 0
    %v311 = vsel %vm17, %v79, 0
    %v314 = vsel %vm17, %v80, 0
    %v317 = vsel %vm17, %v81, 0
    %v320 = vsel %vm17, %v82, 0
    %v323 = vsel %vm17, %v83, 0
    %v326 = vsel %vm17, %v84, 0
    %v329 = vsel %vm17, %v85, 0
    %v332 = vsel %vm17, %v86, 0
    %v335 = vsel %vm17, %v87, 0
    %v338 = vsel %vm17, %v88, 0
    %v341 = vsel %vm17, %v89, 0
    %v344 = vsel %vm17, %v90, 0
    %v347 = vsel %vm17, %v91, 0
    %v350 = vsel %vm17, %v92, 0
    %352 = vmatprep.subr.mxu0 0.0
    %353 = vmatpush1.msra.mxu0 %v29
    %354 = vmatprep.subr.mxu0 0.0
    %355 = vmatpush1.msra.mxu0 0.0
    %356 = vmatprep.subr.mxu0 0.0
    %357 = vmatpush1.msra.mxu0 0.0
    %358 = vmatprep.subr.mxu0 0.0
    %359 = vmatpush1.msra.mxu0 0.0
    %360 = vmatprep.subr.mxu0 0.0
    %361 = vmatpush1.msra.mxu0 0.0
    %362 = vmatprep.subr.mxu0 0.0
    %363 = vmatpush1.msra.mxu0 0.0
    %364 = vmatprep.subr.mxu0 0.0
    %365 = vmatpush1.msra.mxu0 0.0
    %366 = vmatprep.subr.mxu0 0.0
    %367 = vmatpush1.msra.mxu0 0.0
    %368 = vmatprep.subr.mxu0 0.0
    %369 = vmatpush1.msra.mxu0 0.0
    %370 = vmatprep.subr.mxu0 0.0
    %371 = vmatpush1.msra.mxu0 0.0
    %372 = vmatprep.subr.mxu0 0.0
    %373 = vmatpush1.msra.mxu0 0.0
    %374 = vmatprep.subr.mxu0 0.0
    %375 = vmatpush1.msra.mxu0 0.0
    %376 = vmatprep.subr.mxu0 0.0
    %377 = vmatpush1.msra.mxu0 0.0
    %378 = vmatprep.subr.mxu0 0.0
    %379 = vmatpush1.msra.mxu0 0.0
    %380 = vmatprep.subr.mxu0 0.0
    %381 = vmatpush1.msra.mxu0 0.0
    %382 = vmatprep.subr.mxu0 0.0
    %383 = vmatpush1.msra.mxu0 0.0
    %384 = vmatprep.subr.mxu0 0.0
    %385 = vmatpush1.msra.mxu0 0.0
    %386 = vmatprep.subr.mxu0 0.0
    %387 = vmatpush1.msra.mxu0 0.0
    %388 = vmatprep.subr.mxu0 0.0
    %389 = vmatpush1.msra.mxu0 0.0
    %390 = vmatprep.subr.mxu0 0.0
    %391 = vmatpush1.msra.mxu0 0.0
    %392 = vmatprep.subr.mxu0 0.0
    %393 = vmatpush1.msra.mxu0 0.0
    %394 = vmatprep.subr.mxu0 0.0
    %395 = vmatpush1.msra.mxu0 0.0
    %396 = vmatprep.subr.mxu0 0.0
    %397 = vmatpush1.msra.mxu0 0.0
    %398 = vmatprep.subr.mxu0 0.0
    %399 = vmatpush1.msra.mxu0 0.0
    %400 = vmatprep.subr.mxu0 0.0
    %401 = vmatpush1.msra.mxu0 0.0
    %402 = vmatprep.subr.mxu0 0.0
    %403 = vmatpush1.msra.mxu0 0.0
    %404 = vmatprep.subr.mxu0 0.0
    %405 = vmatpush1.msra.mxu0 0.0
    %406 = vmatprep.subr.mxu0 0.0
    %407 = vmatpush1.msra.mxu0 0.0
    %408 = vmatprep.subr.mxu0 0.0
    %409 = vmatpush1.msra.mxu0 0.0
    %410 = vmatprep.subr.mxu0 0.0
    %411 = vmatpush1.msra.mxu0 0.0
    %412 = vmatprep.subr.mxu0 0.0
    %413 = vmatpush1.msra.mxu0 0.0
    %414 = vmatprep.subr.mxu0 0.0
    %415 = vmatpush1.msra.mxu0 0.0
    %416 = vmatprep.mubr.f32.mxu0 0.0
    %417 = vmatmul.mubr.f32.gmra.mrb[0].mxu0 %v305
    %v418 = vpop.f32.mrb[0].mxu0
    %v419 = vadd.f32 %v226, %v418
    %v420 = vpop.f32.mrb[0].mxu0
    %421 = vmatprep.mubr.f32.mxu0 0.0
    %422 = vmatmul.mubr.f32.gmra.mrb[0].mxu0 %v308
    %v423 = vpop.f32.mrb[0].mxu0
    %v424 = vadd.f32 %v231, %v423
    %v425 = vpop.f32.mrb[0].mxu0
    %426 = vmatprep.mubr.f32.mxu0 0.0
    %427 = vmatmul.mubr.f32.gmra.mrb[0].mxu0 %v311
    %v428 = vpop.f32.mrb[0].mxu0
    %v429 = vadd.f32 %v236, %v428
    %v430 = vpop.f32.mrb[0].mxu0
    %431 = vmatprep.mubr.f32.mxu0 0.0
    %432 = vmatmul.mubr.f32.gmra.mrb[0].mxu0 %v314
    %v433 = vpop.f32.mrb[0].mxu0
    %v434 = vadd.f32 %v241, %v433
    %v435 = vpop.f32.mrb[0].mxu0
    %436 = vmatprep.mubr.f32.mxu0 0.0
    %437 = vmatmul.mubr.f32.gmra.mrb[0].mxu0 %v317
    %v438 = vpop.f32.mrb[0].mxu0
    %v439 = vadd.f32 %v246, %v438
    %v440 = vpop.f32.mrb[0].mxu0
    %441 = vmatprep.mubr.f32.mxu0 0.0
    %442 = vmatmul.mubr.f32.gmra.mrb[0].mxu0 %v320
    %v443 = vpop.f32.mrb[0].mxu0
    %v444 = vadd.f32 %v251, %v443
    %v445 = vpop.f32.mrb[0].mxu0
    %446 = vmatprep.mubr.f32.mxu0 0.0
    %447 = vmatmul.mubr.f32.gmra.mrb[0].mxu0 %v323
    %v448 = vpop.f32.mrb[0].mxu0
    %v449 = vadd.f32 %v256, %v448
    %v450 = vpop.f32.mrb[0].mxu0
    %451 = vmatprep.mubr.f32.mxu0 0.0
    %452 = vmatmul.mubr.f32.gmra.mrb[0].mxu0 %v326
    %v453 = vpop.f32.mrb[0].mxu0
    %v454 = vadd.f32 %v261, %v453
    %v455 = vpop.f32.mrb[0].mxu0
    %456 = vmatprep.mubr.f32.mxu0 0.0
    %457 = vmatmul.mubr.f32.gmra.mrb[0].mxu0 %v329
    %v458 = vpop.f32.mrb[0].mxu0
    %v459 = vadd.f32 %v266, %v458
    %v460 = vpop.f32.mrb[0].mxu0
    %461 = vmatprep.mubr.f32.mxu0 0.0
    %462 = vmatmul.mubr.f32.gmra.mrb[0].mxu0 %v332
    %v463 = vpop.f32.mrb[0].mxu0
    %v464 = vadd.f32 %v271, %v463
    %v465 = vpop.f32.mrb[0].mxu0
    %466 = vmatprep.mubr.f32.mxu0 0.0
    %467 = vmatmul.mubr.f32.gmra.mrb[0].mxu0 %v335
    %v468 = vpop.f32.mrb[0].mxu0
    %v469 = vadd.f32 %v276, %v468
    %v470 = vpop.f32.mrb[0].mxu0
    %471 = vmatprep.mubr.f32.mxu0 0.0
    %472 = vmatmul.mubr.f32.gmra.mrb[0].mxu0 %v338
    %v473 = vpop.f32.mrb[0].mxu0
    %v474 = vadd.f32 %v281, %v473
    %v475 = vpop.f32.mrb[0].mxu0
    %476 = vmatprep.mubr.f32.mxu0 0.0
    %477 = vmatmul.mubr.f32.gmra.mrb[0].mxu0 %v341
    %v478 = vpop.f32.mrb[0].mxu0
    %v479 = vadd.f32 %v286, %v478
    %v480 = vpop.f32.mrb[0].mxu0
    %481 = vmatprep.mubr.f32.mxu0 0.0
    %482 = vmatmul.mubr.f32.gmra.mrb[0].mxu0 %v344
    %v483 = vpop.f32.mrb[0].mxu0
    %v484 = vadd.f32 %v291, %v483
    %v485 = vpop.f32.mrb[0].mxu0
    %486 = vmatprep.mubr.f32.mxu0 0.0
    %487 = vmatmul.mubr.f32.gmra.mrb[0].mxu0 %v347
    %v488 = vpop.f32.mrb[0].mxu0
    %v489 = vadd.f32 %v296, %v488
    %v490 = vpop.f32.mrb[0].mxu0
    %491 = vmatprep.mubr.f32.mxu0 0.0
    %492 = vmatmul.mubr.f32.gmra.mrb[0].mxu0 %v350
    %v493 = vpop.f32.mrb[0].mxu0
    %v494 = vadd.f32 %v301, %v493
    %v495 = vpop.f32.mrb[0].mxu0
    %496 = vdwg.mxu0
    %s497 = sadd.s32 %s57, 4294967273
    %s498 = scalar_lea.vmem %s0, %s497
    %v499 = vld [vmem:[%s498] sm:$0xff]
    %v500 = vld [vmem:[%s498 + $0x8] sm:$0xff]
    %v501 = vld [vmem:[%s498 + $0x10] sm:$0xff]
    %v502 = vld [vmem:[%s498 + $0x18] sm:$0xff]
    %v503 = vld [vmem:[%s498 + $0x20] sm:$0xff]
    %v504 = vld [vmem:[%s498 + $0x28] sm:$0xff]
    %v505 = vld [vmem:[%s498 + $0x30] sm:$0xff]
    %v506 = vld [vmem:[%s498 + $0x38] sm:$0xff]
    %v507 = vld [vmem:[%s498 + $0x40] sm:$0xff]
    %v508 = vld [vmem:[%s498 + $0x48] sm:$0xff]
    %v509 = vld [vmem:[%s498 + $0x50] sm:$0xff]
    %v510 = vld [vmem:[%s498 + $0x58] sm:$0xff]
    %v511 = vld [vmem:[%s498 + $0x60] sm:$0xff]
    %v512 = vld [vmem:[%s498 + $0x68] sm:$0xff]
    %v513 = vld [vmem:[%s498 + $0x70] sm:$0xff]
    %v514 = vld [vmem:[%s498 + $0x78] sm:$0xff]
    %v516 = vsel %vm17, %v499, 0
    %v519 = vsel %vm17, %v500, 0
    %v522 = vsel %vm17, %v501, 0
    %v525 = vsel %vm17, %v502, 0
    %v528 = vsel %vm17, %v503, 0
    %v531 = vsel %vm17, %v504, 0
    %v534 = vsel %vm17, %v505, 0
    %v537 = vsel %vm17, %v506, 0
    %v540 = vsel %vm17, %v507, 0
    %v543 = vsel %vm17, %v508, 0
    %v546 = vsel %vm17, %v509, 0
    %v549 = vsel %vm17, %v510, 0
    %v552 = vsel %vm17, %v511, 0
    %v555 = vsel %vm17, %v512, 0
    %v558 = vsel %vm17, %v513, 0
    %v561 = vsel %vm17, %v514, 0
    %563 = vmatprep.subr.mxu0 0.0
    %564 = vmatpush1.msra.mxu0 %v33
    %565 = vmatprep.subr.mxu0 0.0
    %566 = vmatpush1.msra.mxu0 0.0
    %567 = vmatprep.subr.mxu0 0.0
    %568 = vmatpush1.msra.mxu0 0.0
    %569 = vmatprep.subr.mxu0 0.0
    %570 = vmatpush1.msra.mxu0 0.0
    %571 = vmatprep.subr.mxu0 0.0
    %572 = vmatpush1.msra.mxu0 0.0
    %573 = vmatprep.subr.mxu0 0.0
    %574 = vmatpush1.msra.mxu0 0.0
    %575 = vmatprep.subr.mxu0 0.0
    %576 = vmatpush1.msra.mxu0 0.0
    %577 = vmatprep.subr.mxu0 0.0
    %578 = vmatpush1.msra.mxu0 0.0
    %579 = vmatprep.subr.mxu0 0.0
    %580 = vmatpush1.msra.mxu0 0.0
    %581 = vmatprep.subr.mxu0 0.0
    %582 = vmatpush1.msra.mxu0 0.0
    %583 = vmatprep.subr.mxu0 0.0
    %584 = vmatpush1.msra.mxu0 0.0
    %585 = vmatprep.subr.mxu0 0.0
    %586 = vmatpush1.msra.mxu0 0.0
    %587 = vmatprep.subr.mxu0 0.0
    %588 = vmatpush1.msra.mxu0 0.0
    %589 = vmatprep.subr.mxu0 0.0
    %590 = vmatpush1.msra.mxu0 0.0
    %591 = vmatprep.subr.mxu0 0.0
    %592 = vmatpush1.msra.mxu0 0.0
    %593 = vmatprep.subr.mxu0 0.0
    %594 = vmatpush1.msra.mxu0 0.0
    %595 = vmatprep.subr.mxu0 0.0
    %596 = vmatpush1.msra.mxu0 0.0
    %597 = vmatprep.subr.mxu0 0.0
    %598 = vmatpush1.msra.mxu0 0.0
    %599 = vmatprep.subr.mxu0 0.0
    %600 = vmatpush1.msra.mxu0 0.0
    %601 = vmatprep.subr.mxu0 0.0
    %602 = vmatpush1.msra.mxu0 0.0
    %603 = vmatprep.subr.mxu0 0.0
    %604 = vmatpush1.msra.mxu0 0.0
    %605 = vmatprep.subr.mxu0 0.0
    %606 = vmatpush1.msra.mxu0 0.0
    %607 = vmatprep.subr.mxu0 0.0
    %608 = vmatpush1.msra.mxu0 0.0
    %609 = vmatprep.subr.mxu0 0.0
    %610 = vmatpush1.msra.mxu0 0.0
    %611 = vmatprep.subr.mxu0 0.0
    %612 = vmatpush1.msra.mxu0 0.0
    %613 = vmatprep.subr.mxu0 0.0
    %614 = vmatpush1.msra.mxu0 0.0
    %615 = vmatprep.subr.mxu0 0.0
    %616 = vmatpush1.msra.mxu0 0.0
    %617 = vmatprep.subr.mxu0 0.0
    %618 = vmatpush1.msra.mxu0 0.0
    %619 = vmatprep.subr.mxu0 0.0
    %620 = vmatpush1.msra.mxu0 0.0
    %621 = vmatprep.subr.mxu0 0.0
    %622 = vmatpush1.msra.mxu0 0.0
    %623 = vmatprep.subr.mxu0 0.0
    %624 = vmatpush1.msra.mxu0 0.0
    %625 = vmatprep.subr.mxu0 0.0
    %626 = vmatpush1.msra.mxu0 0.0
    %627 = vmatprep.mubr.f32.mxu0 0.0
    %628 = vmatmul.mubr.f32.gmra.mrb[0].mxu0 %v516
    %v629 = vpop.f32.mrb[0].mxu0
    %v630 = vadd.f32 0.0, %v629
    %v631 = vpop.f32.mrb[0].mxu0
    %632 = vmatprep.mubr.f32.mxu0 0.0
    %633 = vmatmul.mubr.f32.gmra.mrb[0].mxu0 %v519
    %v634 = vpop.f32.mrb[0].mxu0
    %v635 = vadd.f32 0.0, %v634
    %v636 = vpop.f32.mrb[0].mxu0
    %637 = vmatprep.mubr.f32.mxu0 0.0
    %638 = vmatmul.mubr.f32.gmra.mrb[0].mxu0 %v522
    %v639 = vpop.f32.mrb[0].mxu0
    %v640 = vadd.f32 0.0, %v639
    %v641 = vpop.f32.mrb[0].mxu0
    %642 = vmatprep.mubr.f32.mxu0 0.0
    %643 = vmatmul.mubr.f32.gmra.mrb[0].mxu0 %v525
    %v644 = vpop.f32.mrb[0].mxu0
    %v645 = vadd.f32 0.0, %v644
    %v646 = vpop.f32.mrb[0].mxu0
    %647 = vmatprep.mubr.f32.mxu0 0.0
    %648 = vmatmul.mubr.f32.gmra.mrb[0].mxu0 %v528
    %v649 = vpop.f32.mrb[0].mxu0
    %v650 = vadd.f32 0.0, %v649
    %v651 = vpop.f32.mrb[0].mxu0
    %652 = vmatprep.mubr.f32.mxu0 0.0
    %653 = vmatmul.mubr.f32.gmra.mrb[0].mxu0 %v531
    %v654 = vpop.f32.mrb[0].mxu0
    %v655 = vadd.f32 0.0, %v654
    %v656 = vpop.f32.mrb[0].mxu0
    %657 = vmatprep.mubr.f32.mxu0 0.0
    %658 = vmatmul.mubr.f32.gmra.mrb[0].mxu0 %v534
    %v659 = vpop.f32.mrb[0].mxu0
    %v660 = vadd.f32 0.0, %v659
    %v661 = vpop.f32.mrb[0].mxu0
    %662 = vmatprep.mubr.f32.mxu0 0.0
    %663 = vmatmul.mubr.f32.gmra.mrb[0].mxu0 %v537
    %v664 = vpop.f32.mrb[0].mxu0
    %v665 = vadd.f32 0.0, %v664
    %v666 = vpop.f32.mrb[0].mxu0
    %667 = vmatprep.mubr.f32.mxu0 0.0
    %668 = vmatmul.mubr.f32.gmra.mrb[0].mxu0 %v540
    %v669 = vpop.f32.mrb[0].mxu0
    %v670 = vadd.f32 0.0, %v669
    %v671 = vpop.f32.mrb[0].mxu0
    %672 = vmatprep.mubr.f32.mxu0 0.0
    %673 = vmatmul.mubr.f32.gmra.mrb[0].mxu0 %v543
    %v674 = vpop.f32.mrb[0].mxu0
    %v675 = vadd.f32 0.0, %v674
    %v676 = vpop.f32.mrb[0].mxu0
    %677 = vmatprep.mubr.f32.mxu0 0.0
    %678 = vmatmul.mubr.f32.gmra.mrb[0].mxu0 %v546
    %v679 = vpop.f32.mrb[0].mxu0
    %v680 = vadd.f32 0.0, %v679
    %v681 = vpop.f32.mrb[0].mxu0
    %682 = vmatprep.mubr.f32.mxu0 0.0
    %683 = vmatmul.mubr.f32.gmra.mrb[0].mxu0 %v549
    %v684 = vpop.f32.mrb[0].mxu0
    %v685 = vadd.f32 0.0, %v684
    %v686 = vpop.f32.mrb[0].mxu0
    %687 = vmatprep.mubr.f32.mxu0 0.0
    %688 = vmatmul.mubr.f32.gmra.mrb[0].mxu0 %v552
    %v689 = vpop.f32.mrb[0].mxu0
    %v690 = vadd.f32 0.0, %v689
    %v691 = vpop.f32.mrb[0].mxu0
    %692 = vmatprep.mubr.f32.mxu0 0.0
    %693 = vmatmul.mubr.f32.gmra.mrb[0].mxu0 %v555
    %v694 = vpop.f32.mrb[0].mxu0
    %v695 = vadd.f32 0.0, %v694
    %v696 = vpop.f32.mrb[0].mxu0
    %697 = vmatprep.mubr.f32.mxu0 0.0
    %698 = vmatmul.mubr.f32.gmra.mrb[0].mxu0 %v558
    %v699 = vpop.f32.mrb[0].mxu0
    %v700 = vadd.f32 0.0, %v699
    %v701 = vpop.f32.mrb[0].mxu0
    %702 = vmatprep.mubr.f32.mxu0 0.0
    %703 = vmatmul.mubr.f32.gmra.mrb[0].mxu0 %v561
    %v704 = vpop.f32.mrb[0].mxu0
    %v705 = vadd.f32 0.0, %v704
    %v706 = vpop.f32.mrb[0].mxu0
    %707 = vdwg.mxu0
    %v708 = vadd.f32 %v419, %v630
    %v709 = vadd.f32 %v424, %v635
    %v710 = vadd.f32 %v429, %v640
    %v711 = vadd.f32 %v434, %v645
    %v712 = vadd.f32 %v439, %v650
    %v713 = vadd.f32 %v444, %v655
    %v714 = vadd.f32 %v449, %v660
    %v715 = vadd.f32 %v454, %v665
    %v716 = vadd.f32 %v459, %v670
    %v717 = vadd.f32 %v464, %v675
    %v718 = vadd.f32 %v469, %v680
    %v719 = vadd.f32 %v474, %v685
    %v720 = vadd.f32 %v479, %v690
    %v721 = vadd.f32 %v484, %v695
    %v722 = vadd.f32 %v489, %v700
    %v723 = vadd.f32 %v494, %v705
    %s724 = sadd.s32 %s57, 4294967295
    %s725 = scalar_lea.vmem %s0, %s724
    %v726 = vld [vmem:[%s725] sm:$0xff]
    %v727 = vld [vmem:[%s725 + $0x8] sm:$0xff]
    %v728 = vld [vmem:[%s725 + $0x10] sm:$0xff]
    %v729 = vld [vmem:[%s725 + $0x18] sm:$0xff]
    %v730 = vld [vmem:[%s725 + $0x20] sm:$0xff]
    %v731 = vld [vmem:[%s725 + $0x28] sm:$0xff]
    %v732 = vld [vmem:[%s725 + $0x30] sm:$0xff]
    %v733 = vld [vmem:[%s725 + $0x38] sm:$0xff]
    %v734 = vld [vmem:[%s725 + $0x40] sm:$0xff]
    %v735 = vld [vmem:[%s725 + $0x48] sm:$0xff]
    %v736 = vld [vmem:[%s725 + $0x50] sm:$0xff]
    %v737 = vld [vmem:[%s725 + $0x58] sm:$0xff]
    %v738 = vld [vmem:[%s725 + $0x60] sm:$0xff]
    %v739 = vld [vmem:[%s725 + $0x68] sm:$0xff]
    %v740 = vld [vmem:[%s725 + $0x70] sm:$0xff]
    %v741 = vld [vmem:[%s725 + $0x78] sm:$0xff]
    %v743 = vsel %vm17, %v726, 0
    %v746 = vsel %vm17, %v727, 0
    %v749 = vsel %vm17, %v728, 0
    %v752 = vsel %vm17, %v729, 0
    %v755 = vsel %vm17, %v730, 0
    %v758 = vsel %vm17, %v731, 0
    %v761 = vsel %vm17, %v732, 0
    %v764 = vsel %vm17, %v733, 0
    %v767 = vsel %vm17, %v734, 0
    %v770 = vsel %vm17, %v735, 0
    %v773 = vsel %vm17, %v736, 0
    %v776 = vsel %vm17, %v737, 0
    %v779 = vsel %vm17, %v738, 0
    %v782 = vsel %vm17, %v739, 0
    %v785 = vsel %vm17, %v740, 0
    %v788 = vsel %vm17, %v741, 0
    %790 = vmatprep.subr.mxu0 0.0
    %791 = vmatpush1.msra.mxu0 %v35
    %792 = vmatprep.subr.mxu0 0.0
    %793 = vmatpush1.msra.mxu0 0.0
    %794 = vmatprep.subr.mxu0 0.0
    %795 = vmatpush1.msra.mxu0 0.0
    %796 = vmatprep.subr.mxu0 0.0
    %797 = vmatpush1.msra.mxu0 0.0
    %798 = vmatprep.subr.mxu0 0.0
    %799 = vmatpush1.msra.mxu0 0.0
    %800 = vmatprep.subr.mxu0 0.0
    %801 = vmatpush1.msra.mxu0 0.0
    %802 = vmatprep.subr.mxu0 0.0
    %803 = vmatpush1.msra.mxu0 0.0
    %804 = vmatprep.subr.mxu0 0.0
    %805 = vmatpush1.msra.mxu0 0.0
    %806 = vmatprep.subr.mxu0 0.0
    %807 = vmatpush1.msra.mxu0 0.0
    %808 = vmatprep.subr.mxu0 0.0
    %809 = vmatpush1.msra.mxu0 0.0
    %810 = vmatprep.subr.mxu0 0.0
    %811 = vmatpush1.msra.mxu0 0.0
    %812 = vmatprep.subr.mxu0 0.0
    %813 = vmatpush1.msra.mxu0 0.0
    %814 = vmatprep.subr.mxu0 0.0
    %815 = vmatpush1.msra.mxu0 0.0
    %816 = vmatprep.subr.mxu0 0.0
    %817 = vmatpush1.msra.mxu0 0.0
    %818 = vmatprep.subr.mxu0 0.0
    %819 = vmatpush1.msra.mxu0 0.0
    %820 = vmatprep.subr.mxu0 0.0
    %821 = vmatpush1.msra.mxu0 0.0
    %822 = vmatprep.subr.mxu0 0.0
    %823 = vmatpush1.msra.mxu0 0.0
    %824 = vmatprep.subr.mxu0 0.0
    %825 = vmatpush1.msra.mxu0 0.0
    %826 = vmatprep.subr.mxu0 0.0
    %827 = vmatpush1.msra.mxu0 0.0
    %828 = vmatprep.subr.mxu0 0.0
    %829 = vmatpush1.msra.mxu0 0.0
    %830 = vmatprep.subr.mxu0 0.0
    %831 = vmatpush1.msra.mxu0 0.0
    %832 = vmatprep.subr.mxu0 0.0
    %833 = vmatpush1.msra.mxu0 0.0
    %834 = vmatprep.subr.mxu0 0.0
    %835 = vmatpush1.msra.mxu0 0.0
    %836 = vmatprep.subr.mxu0 0.0
    %837 = vmatpush1.msra.mxu0 0.0
    %838 = vmatprep.subr.mxu0 0.0
    %839 = vmatpush1.msra.mxu0 0.0
    %840 = vmatprep.subr.mxu0 0.0
    %841 = vmatpush1.msra.mxu0 0.0
    %842 = vmatprep.subr.mxu0 0.0
    %843 = vmatpush1.msra.mxu0 0.0
    %844 = vmatprep.subr.mxu0 0.0
    %845 = vmatpush1.msra.mxu0 0.0
    %846 = vmatprep.subr.mxu0 0.0
    %847 = vmatpush1.msra.mxu0 0.0
    %848 = vmatprep.subr.mxu0 0.0
    %849 = vmatpush1.msra.mxu0 0.0
    %850 = vmatprep.subr.mxu0 0.0
    %851 = vmatpush1.msra.mxu0 0.0
    %852 = vmatprep.subr.mxu0 0.0
    %853 = vmatpush1.msra.mxu0 0.0
    %854 = vmatprep.mubr.f32.mxu0 0.0
    %855 = vmatmul.mubr.f32.gmra.mrb[0].mxu0 %v743
    %v856 = vpop.f32.mrb[0].mxu0
    %v857 = vadd.f32 0.0, %v856
    %v858 = vpop.f32.mrb[0].mxu0
    %859 = vmatprep.mubr.f32.mxu0 0.0
    %860 = vmatmul.mubr.f32.gmra.mrb[0].mxu0 %v746
    %v861 = vpop.f32.mrb[0].mxu0
    %v862 = vadd.f32 0.0, %v861
    %v863 = vpop.f32.mrb[0].mxu0
    %864 = vmatprep.mubr.f32.mxu0 0.0
    %865 = vmatmul.mubr.f32.gmra.mrb[0].mxu0 %v749
    %v866 = vpop.f32.mrb[0].mxu0
    %v867 = vadd.f32 0.0, %v866
    %v868 = vpop.f32.mrb[0].mxu0
    %869 = vmatprep.mubr.f32.mxu0 0.0
    %870 = vmatmul.mubr.f32.gmra.mrb[0].mxu0 %v752
    %v871 = vpop.f32.mrb[0].mxu0
    %v872 = vadd.f32 0.0, %v871
    %v873 = vpop.f32.mrb[0].mxu0
    %874 = vmatprep.mubr.f32.mxu0 0.0
    %875 = vmatmul.mubr.f32.gmra.mrb[0].mxu0 %v755
    %v876 = vpop.f32.mrb[0].mxu0
    %v877 = vadd.f32 0.0, %v876
    %v878 = vpop.f32.mrb[0].mxu0
    %879 = vmatprep.mubr.f32.mxu0 0.0
    %880 = vmatmul.mubr.f32.gmra.mrb[0].mxu0 %v758
    %v881 = vpop.f32.mrb[0].mxu0
    %v882 = vadd.f32 0.0, %v881
    %v883 = vpop.f32.mrb[0].mxu0
    %884 = vmatprep.mubr.f32.mxu0 0.0
    %885 = vmatmul.mubr.f32.gmra.mrb[0].mxu0 %v761
    %v886 = vpop.f32.mrb[0].mxu0
    %v887 = vadd.f32 0.0, %v886
    %v888 = vpop.f32.mrb[0].mxu0
    %889 = vmatprep.mubr.f32.mxu0 0.0
    %890 = vmatmul.mubr.f32.gmra.mrb[0].mxu0 %v764
    %v891 = vpop.f32.mrb[0].mxu0
    %v892 = vadd.f32 0.0, %v891
    %v893 = vpop.f32.mrb[0].mxu0
    %894 = vmatprep.mubr.f32.mxu0 0.0
    %895 = vmatmul.mubr.f32.gmra.mrb[0].mxu0 %v767
    %v896 = vpop.f32.mrb[0].mxu0
    %v897 = vadd.f32 0.0, %v896
    %v898 = vpop.f32.mrb[0].mxu0
    %899 = vmatprep.mubr.f32.mxu0 0.0
    %900 = vmatmul.mubr.f32.gmra.mrb[0].mxu0 %v770
    %v901 = vpop.f32.mrb[0].mxu0
    %v902 = vadd.f32 0.0, %v901
    %v903 = vpop.f32.mrb[0].mxu0
    %904 = vmatprep.mubr.f32.mxu0 0.0
    %905 = vmatmul.mubr.f32.gmra.mrb[0].mxu0 %v773
    %v906 = vpop.f32.mrb[0].mxu0
    %v907 = vadd.f32 0.0, %v906
    %v908 = vpop.f32.mrb[0].mxu0
    %909 = vmatprep.mubr.f32.mxu0 0.0
    %910 = vmatmul.mubr.f32.gmra.mrb[0].mxu0 %v776
    %v911 = vpop.f32.mrb[0].mxu0
    %v912 = vadd.f32 0.0, %v911
    %v913 = vpop.f32.mrb[0].mxu0
    %914 = vmatprep.mubr.f32.mxu0 0.0
    %915 = vmatmul.mubr.f32.gmra.mrb[0].mxu0 %v779
    %v916 = vpop.f32.mrb[0].mxu0
    %v917 = vadd.f32 0.0, %v916
    %v918 = vpop.f32.mrb[0].mxu0
    %919 = vmatprep.mubr.f32.mxu0 0.0
    %920 = vmatmul.mubr.f32.gmra.mrb[0].mxu0 %v782
    %v921 = vpop.f32.mrb[0].mxu0
    %v922 = vadd.f32 0.0, %v921
    %v923 = vpop.f32.mrb[0].mxu0
    %924 = vmatprep.mubr.f32.mxu0 0.0
    %925 = vmatmul.mubr.f32.gmra.mrb[0].mxu0 %v785
    %v926 = vpop.f32.mrb[0].mxu0
    %v927 = vadd.f32 0.0, %v926
    %v928 = vpop.f32.mrb[0].mxu0
    %929 = vmatprep.mubr.f32.mxu0 0.0
    %930 = vmatmul.mubr.f32.gmra.mrb[0].mxu0 %v788
    %v931 = vpop.f32.mrb[0].mxu0
    %v932 = vadd.f32 0.0, %v931
    %v933 = vpop.f32.mrb[0].mxu0
    %934 = vdwg.mxu0
    %v935 = vadd.f32 %v708, %v857
    %v936 = vadd.f32 %v709, %v862
    %v937 = vadd.f32 %v710, %v867
    %v938 = vadd.f32 %v711, %v872
    %v939 = vadd.f32 %v712, %v877
    %v940 = vadd.f32 %v713, %v882
    %v941 = vadd.f32 %v714, %v887
    %v942 = vadd.f32 %v715, %v892
    %v943 = vadd.f32 %v716, %v897
    %v944 = vadd.f32 %v717, %v902
    %v945 = vadd.f32 %v718, %v907
    %v946 = vadd.f32 %v719, %v912
    %v947 = vadd.f32 %v720, %v917
    %v948 = vadd.f32 %v721, %v922
    %v949 = vadd.f32 %v722, %v927
    %v950 = vadd.f32 %v723, %v932
    %s951 = scalar_lea.vmem %s0, %s57
    %v952 = vld [vmem:[%s951] sm:$0xff]
    %v953 = vld [vmem:[%s951 + $0x8] sm:$0xff]
    %v954 = vld [vmem:[%s951 + $0x10] sm:$0xff]
    %v955 = vld [vmem:[%s951 + $0x18] sm:$0xff]
    %v956 = vld [vmem:[%s951 + $0x20] sm:$0xff]
    %v957 = vld [vmem:[%s951 + $0x28] sm:$0xff]
    %v958 = vld [vmem:[%s951 + $0x30] sm:$0xff]
    %v959 = vld [vmem:[%s951 + $0x38] sm:$0xff]
    %v960 = vld [vmem:[%s951 + $0x40] sm:$0xff]
    %v961 = vld [vmem:[%s951 + $0x48] sm:$0xff]
    %v962 = vld [vmem:[%s951 + $0x50] sm:$0xff]
    %v963 = vld [vmem:[%s951 + $0x58] sm:$0xff]
    %v964 = vld [vmem:[%s951 + $0x60] sm:$0xff]
    %v965 = vld [vmem:[%s951 + $0x68] sm:$0xff]
    %v966 = vld [vmem:[%s951 + $0x70] sm:$0xff]
    %v967 = vld [vmem:[%s951 + $0x78] sm:$0xff]
    %v969 = vsel %vm17, %v952, 0
    %v972 = vsel %vm17, %v953, 0
    %v975 = vsel %vm17, %v954, 0
    %v978 = vsel %vm17, %v955, 0
    %v981 = vsel %vm17, %v956, 0
    %v984 = vsel %vm17, %v957, 0
    %v987 = vsel %vm17, %v958, 0
    %v990 = vsel %vm17, %v959, 0
    %v993 = vsel %vm17, %v960, 0
    %v996 = vsel %vm17, %v961, 0
    %v999 = vsel %vm17, %v962, 0
    %v1002 = vsel %vm17, %v963, 0
    %v1005 = vsel %vm17, %v964, 0
    %v1008 = vsel %vm17, %v965, 0
    %v1011 = vsel %vm17, %v966, 0
    %v1014 = vsel %vm17, %v967, 0
    %1016 = vmatprep.subr.mxu0 0.0
    %1017 = vmatpush1.msra.mxu0 %v37
    %1018 = vmatprep.subr.mxu0 0.0
    %1019 = vmatpush1.msra.mxu0 0.0
    %1020 = vmatprep.subr.mxu0 0.0
    %1021 = vmatpush1.msra.mxu0 0.0
    %1022 = vmatprep.subr.mxu0 0.0
    %1023 = vmatpush1.msra.mxu0 0.0
    %1024 = vmatprep.subr.mxu0 0.0
    %1025 = vmatpush1.msra.mxu0 0.0
    %1026 = vmatprep.subr.mxu0 0.0
    %1027 = vmatpush1.msra.mxu0 0.0
    %1028 = vmatprep.subr.mxu0 0.0
    %1029 = vmatpush1.msra.mxu0 0.0
    %1030 = vmatprep.subr.mxu0 0.0
    %1031 = vmatpush1.msra.mxu0 0.0
    %1032 = vmatprep.subr.mxu0 0.0
    %1033 = vmatpush1.msra.mxu0 0.0
    %1034 = vmatprep.subr.mxu0 0.0
    %1035 = vmatpush1.msra.mxu0 0.0
    %1036 = vmatprep.subr.mxu0 0.0
    %1037 = vmatpush1.msra.mxu0 0.0
    %1038 = vmatprep.subr.mxu0 0.0
    %1039 = vmatpush1.msra.mxu0 0.0
    %1040 = vmatprep.subr.mxu0 0.0
    %1041 = vmatpush1.msra.mxu0 0.0
    %1042 = vmatprep.subr.mxu0 0.0
    %1043 = vmatpush1.msra.mxu0 0.0
    %1044 = vmatprep.subr.mxu0 0.0
    %1045 = vmatpush1.msra.mxu0 0.0
    %1046 = vmatprep.subr.mxu0 0.0
    %1047 = vmatpush1.msra.mxu0 0.0
    %1048 = vmatprep.subr.mxu0 0.0
    %1049 = vmatpush1.msra.mxu0 0.0
    %1050 = vmatprep.subr.mxu0 0.0
    %1051 = vmatpush1.msra.mxu0 0.0
    %1052 = vmatprep.subr.mxu0 0.0
    %1053 = vmatpush1.msra.mxu0 0.0
    %1054 = vmatprep.subr.mxu0 0.0
    %1055 = vmatpush1.msra.mxu0 0.0
    %1056 = vmatprep.subr.mxu0 0.0
    %1057 = vmatpush1.msra.mxu0 0.0
    %1058 = vmatprep.subr.mxu0 0.0
    %1059 = vmatpush1.msra.mxu0 0.0
    %1060 = vmatprep.subr.mxu0 0.0
    %1061 = vmatpush1.msra.mxu0 0.0
    %1062 = vmatprep.subr.mxu0 0.0
    %1063 = vmatpush1.msra.mxu0 0.0
    %1064 = vmatprep.subr.mxu0 0.0
    %1065 = vmatpush1.msra.mxu0 0.0
    %1066 = vmatprep.subr.mxu0 0.0
    %1067 = vmatpush1.msra.mxu0 0.0
    %1068 = vmatprep.subr.mxu0 0.0
    %1069 = vmatpush1.msra.mxu0 0.0
    %1070 = vmatprep.subr.mxu0 0.0
    %1071 = vmatpush1.msra.mxu0 0.0
    %1072 = vmatprep.subr.mxu0 0.0
    %1073 = vmatpush1.msra.mxu0 0.0
    %1074 = vmatprep.subr.mxu0 0.0
    %1075 = vmatpush1.msra.mxu0 0.0
    %1076 = vmatprep.subr.mxu0 0.0
    %1077 = vmatpush1.msra.mxu0 0.0
    %1078 = vmatprep.subr.mxu0 0.0
    %1079 = vmatpush1.msra.mxu0 0.0
    %1080 = vmatprep.mubr.f32.mxu0 0.0
    %1081 = vmatmul.mubr.f32.gmra.mrb[0].mxu0 %v969
    %v1082 = vpop.f32.mrb[0].mxu0
    %v1083 = vadd.f32 0.0, %v1082
    %v1084 = vpop.f32.mrb[0].mxu0
    %1085 = vmatprep.mubr.f32.mxu0 0.0
    %1086 = vmatmul.mubr.f32.gmra.mrb[0].mxu0 %v972
    %v1087 = vpop.f32.mrb[0].mxu0
    %v1088 = vadd.f32 0.0, %v1087
    %v1089 = vpop.f32.mrb[0].mxu0
    %1090 = vmatprep.mubr.f32.mxu0 0.0
    %1091 = vmatmul.mubr.f32.gmra.mrb[0].mxu0 %v975
    %v1092 = vpop.f32.mrb[0].mxu0
    %v1093 = vadd.f32 0.0, %v1092
    %v1094 = vpop.f32.mrb[0].mxu0
    %1095 = vmatprep.mubr.f32.mxu0 0.0
    %1096 = vmatmul.mubr.f32.gmra.mrb[0].mxu0 %v978
    %v1097 = vpop.f32.mrb[0].mxu0
    %v1098 = vadd.f32 0.0, %v1097
    %v1099 = vpop.f32.mrb[0].mxu0
    %1100 = vmatprep.mubr.f32.mxu0 0.0
    %1101 = vmatmul.mubr.f32.gmra.mrb[0].mxu0 %v981
    %v1102 = vpop.f32.mrb[0].mxu0
    %v1103 = vadd.f32 0.0, %v1102
    %v1104 = vpop.f32.mrb[0].mxu0
    %1105 = vmatprep.mubr.f32.mxu0 0.0
    %1106 = vmatmul.mubr.f32.gmra.mrb[0].mxu0 %v984
    %v1107 = vpop.f32.mrb[0].mxu0
    %v1108 = vadd.f32 0.0, %v1107
    %v1109 = vpop.f32.mrb[0].mxu0
    %1110 = vmatprep.mubr.f32.mxu0 0.0
    %1111 = vmatmul.mubr.f32.gmra.mrb[0].mxu0 %v987
    %v1112 = vpop.f32.mrb[0].mxu0
    %v1113 = vadd.f32 0.0, %v1112
    %v1114 = vpop.f32.mrb[0].mxu0
    %1115 = vmatprep.mubr.f32.mxu0 0.0
    %1116 = vmatmul.mubr.f32.gmra.mrb[0].mxu0 %v990
    %v1117 = vpop.f32.mrb[0].mxu0
    %v1118 = vadd.f32 0.0, %v1117
    %v1119 = vpop.f32.mrb[0].mxu0
    %1120 = vmatprep.mubr.f32.mxu0 0.0
    %1121 = vmatmul.mubr.f32.gmra.mrb[0].mxu0 %v993
    %v1122 = vpop.f32.mrb[0].mxu0
    %v1123 = vadd.f32 0.0, %v1122
    %v1124 = vpop.f32.mrb[0].mxu0
    %1125 = vmatprep.mubr.f32.mxu0 0.0
    %1126 = vmatmul.mubr.f32.gmra.mrb[0].mxu0 %v996
    %v1127 = vpop.f32.mrb[0].mxu0
    %v1128 = vadd.f32 0.0, %v1127
    %v1129 = vpop.f32.mrb[0].mxu0
    %1130 = vmatprep.mubr.f32.mxu0 0.0
    %1131 = vmatmul.mubr.f32.gmra.mrb[0].mxu0 %v999
    %v1132 = vpop.f32.mrb[0].mxu0
    %v1133 = vadd.f32 0.0, %v1132
    %v1134 = vpop.f32.mrb[0].mxu0
    %1135 = vmatprep.mubr.f32.mxu0 0.0
    %1136 = vmatmul.mubr.f32.gmra.mrb[0].mxu0 %v1002
    %v1137 = vpop.f32.mrb[0].mxu0
    %v1138 = vadd.f32 0.0, %v1137
    %v1139 = vpop.f32.mrb[0].mxu0
    %1140 = vmatprep.mubr.f32.mxu0 0.0
    %1141 = vmatmul.mubr.f32.gmra.mrb[0].mxu0 %v1005
    %v1142 = vpop.f32.mrb[0].mxu0
    %v1143 = vadd.f32 0.0, %v1142
    %v1144 = vpop.f32.mrb[0].mxu0
    %1145 = vmatprep.mubr.f32.mxu0 0.0
    %1146 = vmatmul.mubr.f32.gmra.mrb[0].mxu0 %v1008
    %v1147 = vpop.f32.mrb[0].mxu0
    %v1148 = vadd.f32 0.0, %v1147
    %v1149 = vpop.f32.mrb[0].mxu0
    %1150 = vmatprep.mubr.f32.mxu0 0.0
    %1151 = vmatmul.mubr.f32.gmra.mrb[0].mxu0 %v1011
    %v1152 = vpop.f32.mrb[0].mxu0
    %v1153 = vadd.f32 0.0, %v1152
    %v1154 = vpop.f32.mrb[0].mxu0
    %1155 = vmatprep.mubr.f32.mxu0 0.0
    %1156 = vmatmul.mubr.f32.gmra.mrb[0].mxu0 %v1014
    %v1157 = vpop.f32.mrb[0].mxu0
    %v1158 = vadd.f32 0.0, %v1157
    %v1159 = vpop.f32.mrb[0].mxu0
    %1160 = vdwg.mxu0
    %v1161 = vadd.f32 %v935, %v1083
    %v1162 = vadd.f32 %v936, %v1088
    %v1163 = vadd.f32 %v937, %v1093
    %v1164 = vadd.f32 %v938, %v1098
    %v1165 = vadd.f32 %v939, %v1103
    %v1166 = vadd.f32 %v940, %v1108
    %v1167 = vadd.f32 %v941, %v1113
    %v1168 = vadd.f32 %v942, %v1118
    %v1169 = vadd.f32 %v943, %v1123
    %v1170 = vadd.f32 %v944, %v1128
    %v1171 = vadd.f32 %v945, %v1133
    %v1172 = vadd.f32 %v946, %v1138
    %v1173 = vadd.f32 %v947, %v1143
    %v1174 = vadd.f32 %v948, %v1148
    %v1175 = vadd.f32 %v949, %v1153
    %v1176 = vadd.f32 %v950, %v1158
    %s1177 = sadd.s32 %s57, 1
    %s1178 = scalar_lea.vmem %s0, %s1177
    %v1179 = vld [vmem:[%s1178] sm:$0xff]
    %v1180 = vld [vmem:[%s1178 + $0x8] sm:$0xff]
    %v1181 = vld [vmem:[%s1178 + $0x10] sm:$0xff]
    %v1182 = vld [vmem:[%s1178 + $0x18] sm:$0xff]
    %v1183 = vld [vmem:[%s1178 + $0x20] sm:$0xff]
    %v1184 = vld [vmem:[%s1178 + $0x28] sm:$0xff]
    %v1185 = vld [vmem:[%s1178 + $0x30] sm:$0xff]
    %v1186 = vld [vmem:[%s1178 + $0x38] sm:$0xff]
    %v1187 = vld [vmem:[%s1178 + $0x40] sm:$0xff]
    %v1188 = vld [vmem:[%s1178 + $0x48] sm:$0xff]
    %v1189 = vld [vmem:[%s1178 + $0x50] sm:$0xff]
    %v1190 = vld [vmem:[%s1178 + $0x58] sm:$0xff]
    %v1191 = vld [vmem:[%s1178 + $0x60] sm:$0xff]
    %v1192 = vld [vmem:[%s1178 + $0x68] sm:$0xff]
    %v1193 = vld [vmem:[%s1178 + $0x70] sm:$0xff]
    %v1194 = vld [vmem:[%s1178 + $0x78] sm:$0xff]
    %v1196 = vsel %vm17, %v1179, 0
    %v1199 = vsel %vm17, %v1180, 0
    %v1202 = vsel %vm17, %v1181, 0
    %v1205 = vsel %vm17, %v1182, 0
    %v1208 = vsel %vm17, %v1183, 0
    %v1211 = vsel %vm17, %v1184, 0
    %v1214 = vsel %vm17, %v1185, 0
    %v1217 = vsel %vm17, %v1186, 0
    %v1220 = vsel %vm17, %v1187, 0
    %v1223 = vsel %vm17, %v1188, 0
    %v1226 = vsel %vm17, %v1189, 0
    %v1229 = vsel %vm17, %v1190, 0
    %v1232 = vsel %vm17, %v1191, 0
    %v1235 = vsel %vm17, %v1192, 0
    %v1238 = vsel %vm17, %v1193, 0
    %v1241 = vsel %vm17, %v1194, 0
    %1243 = vmatprep.subr.mxu0 0.0
    %1244 = vmatpush1.msra.mxu0 %v39
    %1245 = vmatprep.subr.mxu0 0.0
    %1246 = vmatpush1.msra.mxu0 0.0
    %1247 = vmatprep.subr.mxu0 0.0
    %1248 = vmatpush1.msra.mxu0 0.0
    %1249 = vmatprep.subr.mxu0 0.0
    %1250 = vmatpush1.msra.mxu0 0.0
    %1251 = vmatprep.subr.mxu0 0.0
    %1252 = vmatpush1.msra.mxu0 0.0
    %1253 = vmatprep.subr.mxu0 0.0
    %1254 = vmatpush1.msra.mxu0 0.0
    %1255 = vmatprep.subr.mxu0 0.0
    %1256 = vmatpush1.msra.mxu0 0.0
    %1257 = vmatprep.subr.mxu0 0.0
    %1258 = vmatpush1.msra.mxu0 0.0
    %1259 = vmatprep.subr.mxu0 0.0
    %1260 = vmatpush1.msra.mxu0 0.0
    %1261 = vmatprep.subr.mxu0 0.0
    %1262 = vmatpush1.msra.mxu0 0.0
    %1263 = vmatprep.subr.mxu0 0.0
    %1264 = vmatpush1.msra.mxu0 0.0
    %1265 = vmatprep.subr.mxu0 0.0
    %1266 = vmatpush1.msra.mxu0 0.0
    %1267 = vmatprep.subr.mxu0 0.0
    %1268 = vmatpush1.msra.mxu0 0.0
    %1269 = vmatprep.subr.mxu0 0.0
    %1270 = vmatpush1.msra.mxu0 0.0
    %1271 = vmatprep.subr.mxu0 0.0
    %1272 = vmatpush1.msra.mxu0 0.0
    %1273 = vmatprep.subr.mxu0 0.0
    %1274 = vmatpush1.msra.mxu0 0.0
    %1275 = vmatprep.subr.mxu0 0.0
    %1276 = vmatpush1.msra.mxu0 0.0
    %1277 = vmatprep.subr.mxu0 0.0
    %1278 = vmatpush1.msra.mxu0 0.0
    %1279 = vmatprep.subr.mxu0 0.0
    %1280 = vmatpush1.msra.mxu0 0.0
    %1281 = vmatprep.subr.mxu0 0.0
    %1282 = vmatpush1.msra.mxu0 0.0
    %1283 = vmatprep.subr.mxu0 0.0
    %1284 = vmatpush1.msra.mxu0 0.0
    %1285 = vmatprep.subr.mxu0 0.0
    %1286 = vmatpush1.msra.mxu0 0.0
    %1287 = vmatprep.subr.mxu0 0.0
    %1288 = vmatpush1.msra.mxu0 0.0
    %1289 = vmatprep.subr.mxu0 0.0
    %1290 = vmatpush1.msra.mxu0 0.0
    %1291 = vmatprep.subr.mxu0 0.0
    %1292 = vmatpush1.msra.mxu0 0.0
    %1293 = vmatprep.subr.mxu0 0.0
    %1294 = vmatpush1.msra.mxu0 0.0
    %1295 = vmatprep.subr.mxu0 0.0
    %1296 = vmatpush1.msra.mxu0 0.0
    %1297 = vmatprep.subr.mxu0 0.0
    %1298 = vmatpush1.msra.mxu0 0.0
    %1299 = vmatprep.subr.mxu0 0.0
    %1300 = vmatpush1.msra.mxu0 0.0
    %1301 = vmatprep.subr.mxu0 0.0
    %1302 = vmatpush1.msra.mxu0 0.0
    %1303 = vmatprep.subr.mxu0 0.0
    %1304 = vmatpush1.msra.mxu0 0.0
    %1305 = vmatprep.subr.mxu0 0.0
    %1306 = vmatpush1.msra.mxu0 0.0
    %1307 = vmatprep.mubr.f32.mxu0 0.0
    %1308 = vmatmul.mubr.f32.gmra.mrb[0].mxu0 %v1196
    %v1309 = vpop.f32.mrb[0].mxu0
    %v1310 = vadd.f32 0.0, %v1309
    %v1311 = vpop.f32.mrb[0].mxu0
    %1312 = vmatprep.mubr.f32.mxu0 0.0
    %1313 = vmatmul.mubr.f32.gmra.mrb[0].mxu0 %v1199
    %v1314 = vpop.f32.mrb[0].mxu0
    %v1315 = vadd.f32 0.0, %v1314
    %v1316 = vpop.f32.mrb[0].mxu0
    %1317 = vmatprep.mubr.f32.mxu0 0.0
    %1318 = vmatmul.mubr.f32.gmra.mrb[0].mxu0 %v1202
    %v1319 = vpop.f32.mrb[0].mxu0
    %v1320 = vadd.f32 0.0, %v1319
    %v1321 = vpop.f32.mrb[0].mxu0
    %1322 = vmatprep.mubr.f32.mxu0 0.0
    %1323 = vmatmul.mubr.f32.gmra.mrb[0].mxu0 %v1205
    %v1324 = vpop.f32.mrb[0].mxu0
    %v1325 = vadd.f32 0.0, %v1324
    %v1326 = vpop.f32.mrb[0].mxu0
    %1327 = vmatprep.mubr.f32.mxu0 0.0
    %1328 = vmatmul.mubr.f32.gmra.mrb[0].mxu0 %v1208
    %v1329 = vpop.f32.mrb[0].mxu0
    %v1330 = vadd.f32 0.0, %v1329
    %v1331 = vpop.f32.mrb[0].mxu0
    %1332 = vmatprep.mubr.f32.mxu0 0.0
    %1333 = vmatmul.mubr.f32.gmra.mrb[0].mxu0 %v1211
    %v1334 = vpop.f32.mrb[0].mxu0
    %v1335 = vadd.f32 0.0, %v1334
    %v1336 = vpop.f32.mrb[0].mxu0
    %1337 = vmatprep.mubr.f32.mxu0 0.0
    %1338 = vmatmul.mubr.f32.gmra.mrb[0].mxu0 %v1214
    %v1339 = vpop.f32.mrb[0].mxu0
    %v1340 = vadd.f32 0.0, %v1339
    %v1341 = vpop.f32.mrb[0].mxu0
    %1342 = vmatprep.mubr.f32.mxu0 0.0
    %1343 = vmatmul.mubr.f32.gmra.mrb[0].mxu0 %v1217
    %v1344 = vpop.f32.mrb[0].mxu0
    %v1345 = vadd.f32 0.0, %v1344
    %v1346 = vpop.f32.mrb[0].mxu0
    %1347 = vmatprep.mubr.f32.mxu0 0.0
    %1348 = vmatmul.mubr.f32.gmra.mrb[0].mxu0 %v1220
    %v1349 = vpop.f32.mrb[0].mxu0
    %v1350 = vadd.f32 0.0, %v1349
    %v1351 = vpop.f32.mrb[0].mxu0
    %1352 = vmatprep.mubr.f32.mxu0 0.0
    %1353 = vmatmul.mubr.f32.gmra.mrb[0].mxu0 %v1223
    %v1354 = vpop.f32.mrb[0].mxu0
    %v1355 = vadd.f32 0.0, %v1354
    %v1356 = vpop.f32.mrb[0].mxu0
    %1357 = vmatprep.mubr.f32.mxu0 0.0
    %1358 = vmatmul.mubr.f32.gmra.mrb[0].mxu0 %v1226
    %v1359 = vpop.f32.mrb[0].mxu0
    %v1360 = vadd.f32 0.0, %v1359
    %v1361 = vpop.f32.mrb[0].mxu0
    %1362 = vmatprep.mubr.f32.mxu0 0.0
    %1363 = vmatmul.mubr.f32.gmra.mrb[0].mxu0 %v1229
    %v1364 = vpop.f32.mrb[0].mxu0
    %v1365 = vadd.f32 0.0, %v1364
    %v1366 = vpop.f32.mrb[0].mxu0
    %1367 = vmatprep.mubr.f32.mxu0 0.0
    %1368 = vmatmul.mubr.f32.gmra.mrb[0].mxu0 %v1232
    %v1369 = vpop.f32.mrb[0].mxu0
    %v1370 = vadd.f32 0.0, %v1369
    %v1371 = vpop.f32.mrb[0].mxu0
    %1372 = vmatprep.mubr.f32.mxu0 0.0
    %1373 = vmatmul.mubr.f32.gmra.mrb[0].mxu0 %v1235
    %v1374 = vpop.f32.mrb[0].mxu0
    %v1375 = vadd.f32 0.0, %v1374
    %v1376 = vpop.f32.mrb[0].mxu0
    %1377 = vmatprep.mubr.f32.mxu0 0.0
    %1378 = vmatmul.mubr.f32.gmra.mrb[0].mxu0 %v1238
    %v1379 = vpop.f32.mrb[0].mxu0
    %v1380 = vadd.f32 0.0, %v1379
    %v1381 = vpop.f32.mrb[0].mxu0
    %1382 = vmatprep.mubr.f32.mxu0 0.0
    %1383 = vmatmul.mubr.f32.gmra.mrb[0].mxu0 %v1241
    %v1384 = vpop.f32.mrb[0].mxu0
    %v1385 = vadd.f32 0.0, %v1384
    %v1386 = vpop.f32.mrb[0].mxu0
    %1387 = vdwg.mxu0
    %v1388 = vadd.f32 %v1161, %v1310
    %v1389 = vadd.f32 %v1162, %v1315
    %v1390 = vadd.f32 %v1163, %v1320
    %v1391 = vadd.f32 %v1164, %v1325
    %v1392 = vadd.f32 %v1165, %v1330
    %v1393 = vadd.f32 %v1166, %v1335
    %v1394 = vadd.f32 %v1167, %v1340
    %v1395 = vadd.f32 %v1168, %v1345
    %v1396 = vadd.f32 %v1169, %v1350
    %v1397 = vadd.f32 %v1170, %v1355
    %v1398 = vadd.f32 %v1171, %v1360
    %v1399 = vadd.f32 %v1172, %v1365
    %v1400 = vadd.f32 %v1173, %v1370
    %v1401 = vadd.f32 %v1174, %v1375
    %v1402 = vadd.f32 %v1175, %v1380
    %v1403 = vadd.f32 %v1176, %v1385
    %s1404 = sadd.s32 %s57, 23
    %s1405 = scalar_lea.vmem %s0, %s1404
    %v1406 = vld [vmem:[%s1405] sm:$0xff]
    %v1407 = vld [vmem:[%s1405 + $0x8] sm:$0xff]
    %v1408 = vld [vmem:[%s1405 + $0x10] sm:$0xff]
    %v1409 = vld [vmem:[%s1405 + $0x18] sm:$0xff]
    %v1410 = vld [vmem:[%s1405 + $0x20] sm:$0xff]
    %v1411 = vld [vmem:[%s1405 + $0x28] sm:$0xff]
    %v1412 = vld [vmem:[%s1405 + $0x30] sm:$0xff]
    %v1413 = vld [vmem:[%s1405 + $0x38] sm:$0xff]
    %v1414 = vld [vmem:[%s1405 + $0x40] sm:$0xff]
    %v1415 = vld [vmem:[%s1405 + $0x48] sm:$0xff]
    %v1416 = vld [vmem:[%s1405 + $0x50] sm:$0xff]
    %v1417 = vld [vmem:[%s1405 + $0x58] sm:$0xff]
    %v1418 = vld [vmem:[%s1405 + $0x60] sm:$0xff]
    %v1419 = vld [vmem:[%s1405 + $0x68] sm:$0xff]
    %v1420 = vld [vmem:[%s1405 + $0x70] sm:$0xff]
    %v1421 = vld [vmem:[%s1405 + $0x78] sm:$0xff]
    %v1423 = vsel %vm17, %v1406, 0
    %v1426 = vsel %vm17, %v1407, 0
    %v1429 = vsel %vm17, %v1408, 0
    %v1432 = vsel %vm17, %v1409, 0
    %v1435 = vsel %vm17, %v1410, 0
    %v1438 = vsel %vm17, %v1411, 0
    %v1441 = vsel %vm17, %v1412, 0
    %v1444 = vsel %vm17, %v1413, 0
    %v1447 = vsel %vm17, %v1414, 0
    %v1450 = vsel %vm17, %v1415, 0
    %v1453 = vsel %vm17, %v1416, 0
    %v1456 = vsel %vm17, %v1417, 0
    %v1459 = vsel %vm17, %v1418, 0
    %v1462 = vsel %vm17, %v1419, 0
    %v1465 = vsel %vm17, %v1420, 0
    %v1468 = vsel %vm17, %v1421, 0
    %1470 = vmatprep.subr.mxu0 0.0
    %1471 = vmatpush1.msra.mxu0 %v41
    %1472 = vmatprep.subr.mxu0 0.0
    %1473 = vmatpush1.msra.mxu0 0.0
    %1474 = vmatprep.subr.mxu0 0.0
    %1475 = vmatpush1.msra.mxu0 0.0
    %1476 = vmatprep.subr.mxu0 0.0
    %1477 = vmatpush1.msra.mxu0 0.0
    %1478 = vmatprep.subr.mxu0 0.0
    %1479 = vmatpush1.msra.mxu0 0.0
    %1480 = vmatprep.subr.mxu0 0.0
    %1481 = vmatpush1.msra.mxu0 0.0
    %1482 = vmatprep.subr.mxu0 0.0
    %1483 = vmatpush1.msra.mxu0 0.0
    %1484 = vmatprep.subr.mxu0 0.0
    %1485 = vmatpush1.msra.mxu0 0.0
    %1486 = vmatprep.subr.mxu0 0.0
    %1487 = vmatpush1.msra.mxu0 0.0
    %1488 = vmatprep.subr.mxu0 0.0
    %1489 = vmatpush1.msra.mxu0 0.0
    %1490 = vmatprep.subr.mxu0 0.0
    %1491 = vmatpush1.msra.mxu0 0.0
    %1492 = vmatprep.subr.mxu0 0.0
    %1493 = vmatpush1.msra.mxu0 0.0
    %1494 = vmatprep.subr.mxu0 0.0
    %1495 = vmatpush1.msra.mxu0 0.0
    %1496 = vmatprep.subr.mxu0 0.0
    %1497 = vmatpush1.msra.mxu0 0.0
    %1498 = vmatprep.subr.mxu0 0.0
    %1499 = vmatpush1.msra.mxu0 0.0
    %1500 = vmatprep.subr.mxu0 0.0
    %1501 = vmatpush1.msra.mxu0 0.0
    %1502 = vmatprep.subr.mxu0 0.0
    %1503 = vmatpush1.msra.mxu0 0.0
    %1504 = vmatprep.subr.mxu0 0.0
    %1505 = vmatpush1.msra.mxu0 0.0
    %1506 = vmatprep.subr.mxu0 0.0
    %1507 = vmatpush1.msra.mxu0 0.0
    %1508 = vmatprep.subr.mxu0 0.0
    %1509 = vmatpush1.msra.mxu0 0.0
    %1510 = vmatprep.subr.mxu0 0.0
    %1511 = vmatpush1.msra.mxu0 0.0
    %1512 = vmatprep.subr.mxu0 0.0
    %1513 = vmatpush1.msra.mxu0 0.0
    %1514 = vmatprep.subr.mxu0 0.0
    %1515 = vmatpush1.msra.mxu0 0.0
    %1516 = vmatprep.subr.mxu0 0.0
    %1517 = vmatpush1.msra.mxu0 0.0
    %1518 = vmatprep.subr.mxu0 0.0
    %1519 = vmatpush1.msra.mxu0 0.0
    %1520 = vmatprep.subr.mxu0 0.0
    %1521 = vmatpush1.msra.mxu0 0.0
    %1522 = vmatprep.subr.mxu0 0.0
    %1523 = vmatpush1.msra.mxu0 0.0
    %1524 = vmatprep.subr.mxu0 0.0
    %1525 = vmatpush1.msra.mxu0 0.0
    %1526 = vmatprep.subr.mxu0 0.0
    %1527 = vmatpush1.msra.mxu0 0.0
    %1528 = vmatprep.subr.mxu0 0.0
    %1529 = vmatpush1.msra.mxu0 0.0
    %1530 = vmatprep.subr.mxu0 0.0
    %1531 = vmatpush1.msra.mxu0 0.0
    %1532 = vmatprep.subr.mxu0 0.0
    %1533 = vmatpush1.msra.mxu0 0.0
    %1534 = vmatprep.mubr.f32.mxu0 0.0
    %1535 = vmatmul.mubr.f32.gmra.mrb[0].mxu0 %v1423
    %v1536 = vpop.f32.mrb[0].mxu0
    %v1537 = vadd.f32 0.0, %v1536
    %v1538 = vpop.f32.mrb[0].mxu0
    %1539 = vmatprep.mubr.f32.mxu0 0.0
    %1540 = vmatmul.mubr.f32.gmra.mrb[0].mxu0 %v1426
    %v1541 = vpop.f32.mrb[0].mxu0
    %v1542 = vadd.f32 0.0, %v1541
    %v1543 = vpop.f32.mrb[0].mxu0
    %1544 = vmatprep.mubr.f32.mxu0 0.0
    %1545 = vmatmul.mubr.f32.gmra.mrb[0].mxu0 %v1429
    %v1546 = vpop.f32.mrb[0].mxu0
    %v1547 = vadd.f32 0.0, %v1546
    %v1548 = vpop.f32.mrb[0].mxu0
    %1549 = vmatprep.mubr.f32.mxu0 0.0
    %1550 = vmatmul.mubr.f32.gmra.mrb[0].mxu0 %v1432
    %v1551 = vpop.f32.mrb[0].mxu0
    %v1552 = vadd.f32 0.0, %v1551
    %v1553 = vpop.f32.mrb[0].mxu0
    %1554 = vmatprep.mubr.f32.mxu0 0.0
    %1555 = vmatmul.mubr.f32.gmra.mrb[0].mxu0 %v1435
    %v1556 = vpop.f32.mrb[0].mxu0
    %v1557 = vadd.f32 0.0, %v1556
    %v1558 = vpop.f32.mrb[0].mxu0
    %1559 = vmatprep.mubr.f32.mxu0 0.0
    %1560 = vmatmul.mubr.f32.gmra.mrb[0].mxu0 %v1438
    %v1561 = vpop.f32.mrb[0].mxu0
    %v1562 = vadd.f32 0.0, %v1561
    %v1563 = vpop.f32.mrb[0].mxu0
    %1564 = vmatprep.mubr.f32.mxu0 0.0
    %1565 = vmatmul.mubr.f32.gmra.mrb[0].mxu0 %v1441
    %v1566 = vpop.f32.mrb[0].mxu0
    %v1567 = vadd.f32 0.0, %v1566
    %v1568 = vpop.f32.mrb[0].mxu0
    %1569 = vmatprep.mubr.f32.mxu0 0.0
    %1570 = vmatmul.mubr.f32.gmra.mrb[0].mxu0 %v1444
    %v1571 = vpop.f32.mrb[0].mxu0
    %v1572 = vadd.f32 0.0, %v1571
    %v1573 = vpop.f32.mrb[0].mxu0
    %1574 = vmatprep.mubr.f32.mxu0 0.0
    %1575 = vmatmul.mubr.f32.gmra.mrb[0].mxu0 %v1447
    %v1576 = vpop.f32.mrb[0].mxu0
    %v1577 = vadd.f32 0.0, %v1576
    %v1578 = vpop.f32.mrb[0].mxu0
    %1579 = vmatprep.mubr.f32.mxu0 0.0
    %1580 = vmatmul.mubr.f32.gmra.mrb[0].mxu0 %v1450
    %v1581 = vpop.f32.mrb[0].mxu0
    %v1582 = vadd.f32 0.0, %v1581
    %v1583 = vpop.f32.mrb[0].mxu0
    %1584 = vmatprep.mubr.f32.mxu0 0.0
    %1585 = vmatmul.mubr.f32.gmra.mrb[0].mxu0 %v1453
    %v1586 = vpop.f32.mrb[0].mxu0
    %v1587 = vadd.f32 0.0, %v1586
    %v1588 = vpop.f32.mrb[0].mxu0
    %1589 = vmatprep.mubr.f32.mxu0 0.0
    %1590 = vmatmul.mubr.f32.gmra.mrb[0].mxu0 %v1456
    %v1591 = vpop.f32.mrb[0].mxu0
    %v1592 = vadd.f32 0.0, %v1591
    %v1593 = vpop.f32.mrb[0].mxu0
    %1594 = vmatprep.mubr.f32.mxu0 0.0
    %1595 = vmatmul.mubr.f32.gmra.mrb[0].mxu0 %v1459
    %v1596 = vpop.f32.mrb[0].mxu0
    %v1597 = vadd.f32 0.0, %v1596
    %v1598 = vpop.f32.mrb[0].mxu0
    %1599 = vmatprep.mubr.f32.mxu0 0.0
    %1600 = vmatmul.mubr.f32.gmra.mrb[0].mxu0 %v1462
    %v1601 = vpop.f32.mrb[0].mxu0
    %v1602 = vadd.f32 0.0, %v1601
    %v1603 = vpop.f32.mrb[0].mxu0
    %1604 = vmatprep.mubr.f32.mxu0 0.0
    %1605 = vmatmul.mubr.f32.gmra.mrb[0].mxu0 %v1465
    %v1606 = vpop.f32.mrb[0].mxu0
    %v1607 = vadd.f32 0.0, %v1606
    %v1608 = vpop.f32.mrb[0].mxu0
    %1609 = vmatprep.mubr.f32.mxu0 0.0
    %1610 = vmatmul.mubr.f32.gmra.mrb[0].mxu0 %v1468
    %v1611 = vpop.f32.mrb[0].mxu0
    %v1612 = vadd.f32 0.0, %v1611
    %v1613 = vpop.f32.mrb[0].mxu0
    %1614 = vdwg.mxu0
    %v1615 = vadd.f32 %v1388, %v1537
    %v1616 = vadd.f32 %v1389, %v1542
    %v1617 = vadd.f32 %v1390, %v1547
    %v1618 = vadd.f32 %v1391, %v1552
    %v1619 = vadd.f32 %v1392, %v1557
    %v1620 = vadd.f32 %v1393, %v1562
    %v1621 = vadd.f32 %v1394, %v1567
    %v1622 = vadd.f32 %v1395, %v1572
    %v1623 = vadd.f32 %v1396, %v1577
    %v1624 = vadd.f32 %v1397, %v1582
    %v1625 = vadd.f32 %v1398, %v1587
    %v1626 = vadd.f32 %v1399, %v1592
    %v1627 = vadd.f32 %v1400, %v1597
    %v1628 = vadd.f32 %v1401, %v1602
    %v1629 = vadd.f32 %v1402, %v1607
    %v1630 = vadd.f32 %v1403, %v1612
    %s1631 = sadd.s32 %s57, 24
    %s1632 = scalar_lea.vmem %s0, %s1631
    %v1633 = vld [vmem:[%s1632] sm:$0xff]
    %v1634 = vld [vmem:[%s1632 + $0x8] sm:$0xff]
    %v1635 = vld [vmem:[%s1632 + $0x10] sm:$0xff]
    %v1636 = vld [vmem:[%s1632 + $0x18] sm:$0xff]
    %v1637 = vld [vmem:[%s1632 + $0x20] sm:$0xff]
    %v1638 = vld [vmem:[%s1632 + $0x28] sm:$0xff]
    %v1639 = vld [vmem:[%s1632 + $0x30] sm:$0xff]
    %v1640 = vld [vmem:[%s1632 + $0x38] sm:$0xff]
    %v1641 = vld [vmem:[%s1632 + $0x40] sm:$0xff]
    %v1642 = vld [vmem:[%s1632 + $0x48] sm:$0xff]
    %v1643 = vld [vmem:[%s1632 + $0x50] sm:$0xff]
    %v1644 = vld [vmem:[%s1632 + $0x58] sm:$0xff]
    %v1645 = vld [vmem:[%s1632 + $0x60] sm:$0xff]
    %v1646 = vld [vmem:[%s1632 + $0x68] sm:$0xff]
    %v1647 = vld [vmem:[%s1632 + $0x70] sm:$0xff]
    %v1648 = vld [vmem:[%s1632 + $0x78] sm:$0xff]
    %v1650 = vsel %vm17, %v1633, 0
    %v1653 = vsel %vm17, %v1634, 0
    %v1656 = vsel %vm17, %v1635, 0
    %v1659 = vsel %vm17, %v1636, 0
    %v1662 = vsel %vm17, %v1637, 0
    %v1665 = vsel %vm17, %v1638, 0
    %v1668 = vsel %vm17, %v1639, 0
    %v1671 = vsel %vm17, %v1640, 0
    %v1674 = vsel %vm17, %v1641, 0
    %v1677 = vsel %vm17, %v1642, 0
    %v1680 = vsel %vm17, %v1643, 0
    %v1683 = vsel %vm17, %v1644, 0
    %v1686 = vsel %vm17, %v1645, 0
    %v1689 = vsel %vm17, %v1646, 0
    %v1692 = vsel %vm17, %v1647, 0
    %v1695 = vsel %vm17, %v1648, 0
    %1697 = vmatprep.subr.mxu0 0.0
    %1698 = vmatpush1.msra.mxu0 %v43
    %1699 = vmatprep.subr.mxu0 0.0
    %1700 = vmatpush1.msra.mxu0 0.0
    %1701 = vmatprep.subr.mxu0 0.0
    %1702 = vmatpush1.msra.mxu0 0.0
    %1703 = vmatprep.subr.mxu0 0.0
    %1704 = vmatpush1.msra.mxu0 0.0
    %1705 = vmatprep.subr.mxu0 0.0
    %1706 = vmatpush1.msra.mxu0 0.0
    %1707 = vmatprep.subr.mxu0 0.0
    %1708 = vmatpush1.msra.mxu0 0.0
    %1709 = vmatprep.subr.mxu0 0.0
    %1710 = vmatpush1.msra.mxu0 0.0
    %1711 = vmatprep.subr.mxu0 0.0
    %1712 = vmatpush1.msra.mxu0 0.0
    %1713 = vmatprep.subr.mxu0 0.0
    %1714 = vmatpush1.msra.mxu0 0.0
    %1715 = vmatprep.subr.mxu0 0.0
    %1716 = vmatpush1.msra.mxu0 0.0
    %1717 = vmatprep.subr.mxu0 0.0
    %1718 = vmatpush1.msra.mxu0 0.0
    %1719 = vmatprep.subr.mxu0 0.0
    %1720 = vmatpush1.msra.mxu0 0.0
    %1721 = vmatprep.subr.mxu0 0.0
    %1722 = vmatpush1.msra.mxu0 0.0
    %1723 = vmatprep.subr.mxu0 0.0
    %1724 = vmatpush1.msra.mxu0 0.0
    %1725 = vmatprep.subr.mxu0 0.0
    %1726 = vmatpush1.msra.mxu0 0.0
    %1727 = vmatprep.subr.mxu0 0.0
    %1728 = vmatpush1.msra.mxu0 0.0
    %1729 = vmatprep.subr.mxu0 0.0
    %1730 = vmatpush1.msra.mxu0 0.0
    %1731 = vmatprep.subr.mxu0 0.0
    %1732 = vmatpush1.msra.mxu0 0.0
    %1733 = vmatprep.subr.mxu0 0.0
    %1734 = vmatpush1.msra.mxu0 0.0
    %1735 = vmatprep.subr.mxu0 0.0
    %1736 = vmatpush1.msra.mxu0 0.0
    %1737 = vmatprep.subr.mxu0 0.0
    %1738 = vmatpush1.msra.mxu0 0.0
    %1739 = vmatprep.subr.mxu0 0.0
    %1740 = vmatpush1.msra.mxu0 0.0
    %1741 = vmatprep.subr.mxu0 0.0
    %1742 = vmatpush1.msra.mxu0 0.0
    %1743 = vmatprep.subr.mxu0 0.0
    %1744 = vmatpush1.msra.mxu0 0.0
    %1745 = vmatprep.subr.mxu0 0.0
    %1746 = vmatpush1.msra.mxu0 0.0
    %1747 = vmatprep.subr.mxu0 0.0
    %1748 = vmatpush1.msra.mxu0 0.0
    %1749 = vmatprep.subr.mxu0 0.0
    %1750 = vmatpush1.msra.mxu0 0.0
    %1751 = vmatprep.subr.mxu0 0.0
    %1752 = vmatpush1.msra.mxu0 0.0
    %1753 = vmatprep.subr.mxu0 0.0
    %1754 = vmatpush1.msra.mxu0 0.0
    %1755 = vmatprep.subr.mxu0 0.0
    %1756 = vmatpush1.msra.mxu0 0.0
    %1757 = vmatprep.subr.mxu0 0.0
    %1758 = vmatpush1.msra.mxu0 0.0
    %1759 = vmatprep.subr.mxu0 0.0
    %1760 = vmatpush1.msra.mxu0 0.0
    %1761 = vmatprep.mubr.f32.mxu0 0.0
    %1762 = vmatmul.mubr.f32.gmra.mrb[0].mxu0 %v1650
    %v1763 = vpop.f32.mrb[0].mxu0
    %v1764 = vadd.f32 0.0, %v1763
    %v1765 = vpop.f32.mrb[0].mxu0
    %1766 = vmatprep.mubr.f32.mxu0 0.0
    %1767 = vmatmul.mubr.f32.gmra.mrb[0].mxu0 %v1653
    %v1768 = vpop.f32.mrb[0].mxu0
    %v1769 = vadd.f32 0.0, %v1768
    %v1770 = vpop.f32.mrb[0].mxu0
    %1771 = vmatprep.mubr.f32.mxu0 0.0
    %1772 = vmatmul.mubr.f32.gmra.mrb[0].mxu0 %v1656
    %v1773 = vpop.f32.mrb[0].mxu0
    %v1774 = vadd.f32 0.0, %v1773
    %v1775 = vpop.f32.mrb[0].mxu0
    %1776 = vmatprep.mubr.f32.mxu0 0.0
    %1777 = vmatmul.mubr.f32.gmra.mrb[0].mxu0 %v1659
    %v1778 = vpop.f32.mrb[0].mxu0
    %v1779 = vadd.f32 0.0, %v1778
    %v1780 = vpop.f32.mrb[0].mxu0
    %1781 = vmatprep.mubr.f32.mxu0 0.0
    %1782 = vmatmul.mubr.f32.gmra.mrb[0].mxu0 %v1662
    %v1783 = vpop.f32.mrb[0].mxu0
    %v1784 = vadd.f32 0.0, %v1783
    %v1785 = vpop.f32.mrb[0].mxu0
    %1786 = vmatprep.mubr.f32.mxu0 0.0
    %1787 = vmatmul.mubr.f32.gmra.mrb[0].mxu0 %v1665
    %v1788 = vpop.f32.mrb[0].mxu0
    %v1789 = vadd.f32 0.0, %v1788
    %v1790 = vpop.f32.mrb[0].mxu0
    %1791 = vmatprep.mubr.f32.mxu0 0.0
    %1792 = vmatmul.mubr.f32.gmra.mrb[0].mxu0 %v1668
    %v1793 = vpop.f32.mrb[0].mxu0
    %v1794 = vadd.f32 0.0, %v1793
    %v1795 = vpop.f32.mrb[0].mxu0
    %1796 = vmatprep.mubr.f32.mxu0 0.0
    %1797 = vmatmul.mubr.f32.gmra.mrb[0].mxu0 %v1671
    %v1798 = vpop.f32.mrb[0].mxu0
    %v1799 = vadd.f32 0.0, %v1798
    %v1800 = vpop.f32.mrb[0].mxu0
    %1801 = vmatprep.mubr.f32.mxu0 0.0
    %1802 = vmatmul.mubr.f32.gmra.mrb[0].mxu0 %v1674
    %v1803 = vpop.f32.mrb[0].mxu0
    %v1804 = vadd.f32 0.0, %v1803
    %v1805 = vpop.f32.mrb[0].mxu0
    %1806 = vmatprep.mubr.f32.mxu0 0.0
    %1807 = vmatmul.mubr.f32.gmra.mrb[0].mxu0 %v1677
    %v1808 = vpop.f32.mrb[0].mxu0
    %v1809 = vadd.f32 0.0, %v1808
    %v1810 = vpop.f32.mrb[0].mxu0
    %1811 = vmatprep.mubr.f32.mxu0 0.0
    %1812 = vmatmul.mubr.f32.gmra.mrb[0].mxu0 %v1680
    %v1813 = vpop.f32.mrb[0].mxu0
    %v1814 = vadd.f32 0.0, %v1813
    %v1815 = vpop.f32.mrb[0].mxu0
    %1816 = vmatprep.mubr.f32.mxu0 0.0
    %1817 = vmatmul.mubr.f32.gmra.mrb[0].mxu0 %v1683
    %v1818 = vpop.f32.mrb[0].mxu0
    %v1819 = vadd.f32 0.0, %v1818
    %v1820 = vpop.f32.mrb[0].mxu0
    %1821 = vmatprep.mubr.f32.mxu0 0.0
    %1822 = vmatmul.mubr.f32.gmra.mrb[0].mxu0 %v1686
    %v1823 = vpop.f32.mrb[0].mxu0
    %v1824 = vadd.f32 0.0, %v1823
    %v1825 = vpop.f32.mrb[0].mxu0
    %1826 = vmatprep.mubr.f32.mxu0 0.0
    %1827 = vmatmul.mubr.f32.gmra.mrb[0].mxu0 %v1689
    %v1828 = vpop.f32.mrb[0].mxu0
    %v1829 = vadd.f32 0.0, %v1828
    %v1830 = vpop.f32.mrb[0].mxu0
    %1831 = vmatprep.mubr.f32.mxu0 0.0
    %1832 = vmatmul.mubr.f32.gmra.mrb[0].mxu0 %v1692
    %v1833 = vpop.f32.mrb[0].mxu0
    %v1834 = vadd.f32 0.0, %v1833
    %v1835 = vpop.f32.mrb[0].mxu0
    %1836 = vmatprep.mubr.f32.mxu0 0.0
    %1837 = vmatmul.mubr.f32.gmra.mrb[0].mxu0 %v1695
    %v1838 = vpop.f32.mrb[0].mxu0
    %v1839 = vadd.f32 0.0, %v1838
    %v1840 = vpop.f32.mrb[0].mxu0
    %1841 = vdwg.mxu0
    %v1842 = vadd.f32 %v1615, %v1764
    %v1843 = vadd.f32 %v1616, %v1769
    %v1844 = vadd.f32 %v1617, %v1774
    %v1845 = vadd.f32 %v1618, %v1779
    %v1846 = vadd.f32 %v1619, %v1784
    %v1847 = vadd.f32 %v1620, %v1789
    %v1848 = vadd.f32 %v1621, %v1794
    %v1849 = vadd.f32 %v1622, %v1799
    %v1850 = vadd.f32 %v1623, %v1804
    %v1851 = vadd.f32 %v1624, %v1809
    %v1852 = vadd.f32 %v1625, %v1814
    %v1853 = vadd.f32 %v1626, %v1819
    %v1854 = vadd.f32 %v1627, %v1824
    %v1855 = vadd.f32 %v1628, %v1829
    %v1856 = vadd.f32 %v1629, %v1834
    %v1857 = vadd.f32 %v1630, %v1839
    %s1858 = sadd.s32 %s57, 25
    %s1859 = scalar_lea.vmem %s0, %s1858
    %v1860 = vld [vmem:[%s1859] sm:$0xff]
    %v1861 = vld [vmem:[%s1859 + $0x8] sm:$0xff]
    %v1862 = vld [vmem:[%s1859 + $0x10] sm:$0xff]
    %v1863 = vld [vmem:[%s1859 + $0x18] sm:$0xff]
    %v1864 = vld [vmem:[%s1859 + $0x20] sm:$0xff]
    %v1865 = vld [vmem:[%s1859 + $0x28] sm:$0xff]
    %v1866 = vld [vmem:[%s1859 + $0x30] sm:$0xff]
    %v1867 = vld [vmem:[%s1859 + $0x38] sm:$0xff]
    %v1868 = vld [vmem:[%s1859 + $0x40] sm:$0xff]
    %v1869 = vld [vmem:[%s1859 + $0x48] sm:$0xff]
    %v1870 = vld [vmem:[%s1859 + $0x50] sm:$0xff]
    %v1871 = vld [vmem:[%s1859 + $0x58] sm:$0xff]
    %v1872 = vld [vmem:[%s1859 + $0x60] sm:$0xff]
    %v1873 = vld [vmem:[%s1859 + $0x68] sm:$0xff]
    %v1874 = vld [vmem:[%s1859 + $0x70] sm:$0xff]
    %v1875 = vld [vmem:[%s1859 + $0x78] sm:$0xff]
    %v1877 = vsel %vm17, %v1860, 0
    %v1880 = vsel %vm17, %v1861, 0
    %v1883 = vsel %vm17, %v1862, 0
    %v1886 = vsel %vm17, %v1863, 0
    %v1889 = vsel %vm17, %v1864, 0
    %v1892 = vsel %vm17, %v1865, 0
    %v1895 = vsel %vm17, %v1866, 0
    %v1898 = vsel %vm17, %v1867, 0
    %v1901 = vsel %vm17, %v1868, 0
    %v1904 = vsel %vm17, %v1869, 0
    %v1907 = vsel %vm17, %v1870, 0
    %v1910 = vsel %vm17, %v1871, 0
    %v1913 = vsel %vm17, %v1872, 0
    %v1916 = vsel %vm17, %v1873, 0
    %v1919 = vsel %vm17, %v1874, 0
    %v1922 = vsel %vm17, %v1875, 0
    %1924 = vmatprep.subr.mxu0 0.0
    %1925 = vmatpush1.msra.mxu0 %v45
    %1926 = vmatprep.subr.mxu0 0.0
    %1927 = vmatpush1.msra.mxu0 0.0
    %1928 = vmatprep.subr.mxu0 0.0
    %1929 = vmatpush1.msra.mxu0 0.0
    %1930 = vmatprep.subr.mxu0 0.0
    %1931 = vmatpush1.msra.mxu0 0.0
    %1932 = vmatprep.subr.mxu0 0.0
    %1933 = vmatpush1.msra.mxu0 0.0
    %1934 = vmatprep.subr.mxu0 0.0
    %1935 = vmatpush1.msra.mxu0 0.0
    %1936 = vmatprep.subr.mxu0 0.0
    %1937 = vmatpush1.msra.mxu0 0.0
    %1938 = vmatprep.subr.mxu0 0.0
    %1939 = vmatpush1.msra.mxu0 0.0
    %1940 = vmatprep.subr.mxu0 0.0
    %1941 = vmatpush1.msra.mxu0 0.0
    %1942 = vmatprep.subr.mxu0 0.0
    %1943 = vmatpush1.msra.mxu0 0.0
    %1944 = vmatprep.subr.mxu0 0.0
    %1945 = vmatpush1.msra.mxu0 0.0
    %1946 = vmatprep.subr.mxu0 0.0
    %1947 = vmatpush1.msra.mxu0 0.0
    %1948 = vmatprep.subr.mxu0 0.0
    %1949 = vmatpush1.msra.mxu0 0.0
    %1950 = vmatprep.subr.mxu0 0.0
    %1951 = vmatpush1.msra.mxu0 0.0
    %1952 = vmatprep.subr.mxu0 0.0
    %1953 = vmatpush1.msra.mxu0 0.0
    %1954 = vmatprep.subr.mxu0 0.0
    %1955 = vmatpush1.msra.mxu0 0.0
    %1956 = vmatprep.subr.mxu0 0.0
    %1957 = vmatpush1.msra.mxu0 0.0
    %1958 = vmatprep.subr.mxu0 0.0
    %1959 = vmatpush1.msra.mxu0 0.0
    %1960 = vmatprep.subr.mxu0 0.0
    %1961 = vmatpush1.msra.mxu0 0.0
    %1962 = vmatprep.subr.mxu0 0.0
    %1963 = vmatpush1.msra.mxu0 0.0
    %1964 = vmatprep.subr.mxu0 0.0
    %1965 = vmatpush1.msra.mxu0 0.0
    %1966 = vmatprep.subr.mxu0 0.0
    %1967 = vmatpush1.msra.mxu0 0.0
    %1968 = vmatprep.subr.mxu0 0.0
    %1969 = vmatpush1.msra.mxu0 0.0
    %1970 = vmatprep.subr.mxu0 0.0
    %1971 = vmatpush1.msra.mxu0 0.0
    %1972 = vmatprep.subr.mxu0 0.0
    %1973 = vmatpush1.msra.mxu0 0.0
    %1974 = vmatprep.subr.mxu0 0.0
    %1975 = vmatpush1.msra.mxu0 0.0
    %1976 = vmatprep.subr.mxu0 0.0
    %1977 = vmatpush1.msra.mxu0 0.0
    %1978 = vmatprep.subr.mxu0 0.0
    %1979 = vmatpush1.msra.mxu0 0.0
    %1980 = vmatprep.subr.mxu0 0.0
    %1981 = vmatpush1.msra.mxu0 0.0
    %1982 = vmatprep.subr.mxu0 0.0
    %1983 = vmatpush1.msra.mxu0 0.0
    %1984 = vmatprep.subr.mxu0 0.0
    %1985 = vmatpush1.msra.mxu0 0.0
    %1986 = vmatprep.subr.mxu0 0.0
    %1987 = vmatpush1.msra.mxu0 0.0
    %1988 = vmatprep.mubr.f32.mxu0 0.0
    %1989 = vmatmul.mubr.f32.gmra.mrb[0].mxu0 %v1877
    %v1990 = vpop.f32.mrb[0].mxu0
    %v1991 = vadd.f32 0.0, %v1990
    %v1992 = vpop.f32.mrb[0].mxu0
    %1993 = vmatprep.mubr.f32.mxu0 0.0
    %1994 = vmatmul.mubr.f32.gmra.mrb[0].mxu0 %v1880
    %v1995 = vpop.f32.mrb[0].mxu0
    %v1996 = vadd.f32 0.0, %v1995
    %v1997 = vpop.f32.mrb[0].mxu0
    %1998 = vmatprep.mubr.f32.mxu0 0.0
    %1999 = vmatmul.mubr.f32.gmra.mrb[0].mxu0 %v1883
    %v2000 = vpop.f32.mrb[0].mxu0
    %v2001 = vadd.f32 0.0, %v2000
    %v2002 = vpop.f32.mrb[0].mxu0
    %2003 = vmatprep.mubr.f32.mxu0 0.0
    %2004 = vmatmul.mubr.f32.gmra.mrb[0].mxu0 %v1886
    %v2005 = vpop.f32.mrb[0].mxu0
    %v2006 = vadd.f32 0.0, %v2005
    %v2007 = vpop.f32.mrb[0].mxu0
    %2008 = vmatprep.mubr.f32.mxu0 0.0
    %2009 = vmatmul.mubr.f32.gmra.mrb[0].mxu0 %v1889
    %v2010 = vpop.f32.mrb[0].mxu0
    %v2011 = vadd.f32 0.0, %v2010
    %v2012 = vpop.f32.mrb[0].mxu0
    %2013 = vmatprep.mubr.f32.mxu0 0.0
    %2014 = vmatmul.mubr.f32.gmra.mrb[0].mxu0 %v1892
    %v2015 = vpop.f32.mrb[0].mxu0
    %v2016 = vadd.f32 0.0, %v2015
    %v2017 = vpop.f32.mrb[0].mxu0
    %2018 = vmatprep.mubr.f32.mxu0 0.0
    %2019 = vmatmul.mubr.f32.gmra.mrb[0].mxu0 %v1895
    %v2020 = vpop.f32.mrb[0].mxu0
    %v2021 = vadd.f32 0.0, %v2020
    %v2022 = vpop.f32.mrb[0].mxu0
    %2023 = vmatprep.mubr.f32.mxu0 0.0
    %2024 = vmatmul.mubr.f32.gmra.mrb[0].mxu0 %v1898
    %v2025 = vpop.f32.mrb[0].mxu0
    %v2026 = vadd.f32 0.0, %v2025
    %v2027 = vpop.f32.mrb[0].mxu0
    %2028 = vmatprep.mubr.f32.mxu0 0.0
    %2029 = vmatmul.mubr.f32.gmra.mrb[0].mxu0 %v1901
    %v2030 = vpop.f32.mrb[0].mxu0
    %v2031 = vadd.f32 0.0, %v2030
    %v2032 = vpop.f32.mrb[0].mxu0
    %2033 = vmatprep.mubr.f32.mxu0 0.0
    %2034 = vmatmul.mubr.f32.gmra.mrb[0].mxu0 %v1904
    %v2035 = vpop.f32.mrb[0].mxu0
    %v2036 = vadd.f32 0.0, %v2035
    %v2037 = vpop.f32.mrb[0].mxu0
    %2038 = vmatprep.mubr.f32.mxu0 0.0
    %2039 = vmatmul.mubr.f32.gmra.mrb[0].mxu0 %v1907
    %v2040 = vpop.f32.mrb[0].mxu0
    %v2041 = vadd.f32 0.0, %v2040
    %v2042 = vpop.f32.mrb[0].mxu0
    %2043 = vmatprep.mubr.f32.mxu0 0.0
    %2044 = vmatmul.mubr.f32.gmra.mrb[0].mxu0 %v1910
    %v2045 = vpop.f32.mrb[0].mxu0
    %v2046 = vadd.f32 0.0, %v2045
    %v2047 = vpop.f32.mrb[0].mxu0
    %2048 = vmatprep.mubr.f32.mxu0 0.0
    %2049 = vmatmul.mubr.f32.gmra.mrb[0].mxu0 %v1913
    %v2050 = vpop.f32.mrb[0].mxu0
    %v2051 = vadd.f32 0.0, %v2050
    %v2052 = vpop.f32.mrb[0].mxu0
    %2053 = vmatprep.mubr.f32.mxu0 0.0
    %2054 = vmatmul.mubr.f32.gmra.mrb[0].mxu0 %v1916
    %v2055 = vpop.f32.mrb[0].mxu0
    %v2056 = vadd.f32 0.0, %v2055
    %v2057 = vpop.f32.mrb[0].mxu0
    %2058 = vmatprep.mubr.f32.mxu0 0.0
    %2059 = vmatmul.mubr.f32.gmra.mrb[0].mxu0 %v1919
    %v2060 = vpop.f32.mrb[0].mxu0
    %v2061 = vadd.f32 0.0, %v2060
    %v2062 = vpop.f32.mrb[0].mxu0
    %2063 = vmatprep.mubr.f32.mxu0 0.0
    %2064 = vmatmul.mubr.f32.gmra.mrb[0].mxu0 %v1922
    %v2065 = vpop.f32.mrb[0].mxu0
    %v2066 = vadd.f32 0.0, %v2065
    %v2067 = vpop.f32.mrb[0].mxu0
    %2068 = vdwg.mxu0
    %v2069 = vadd.f32 %v1842, %v1991
    %v2070 = vadd.f32 %v1843, %v1996
    %v2071 = vadd.f32 %v1844, %v2001
    %v2072 = vadd.f32 %v1845, %v2006
    %v2073 = vadd.f32 %v1846, %v2011
    %v2074 = vadd.f32 %v1847, %v2016
    %v2075 = vadd.f32 %v1848, %v2021
    %v2076 = vadd.f32 %v1849, %v2026
    %v2077 = vadd.f32 %v1850, %v2031
    %v2078 = vadd.f32 %v1851, %v2036
    %v2079 = vadd.f32 %v1852, %v2041
    %v2080 = vadd.f32 %v1853, %v2046
    %v2081 = vadd.f32 %v1854, %v2051
    %v2082 = vadd.f32 %v1855, %v2056
    %v2083 = vadd.f32 %v1856, %v2061
    %v2084 = vadd.f32 %v1857, %v2066
    %s2085 = scalar_lea.vmem [#allocation2], %s57
    %2086 = vst.msk [vmem:[%s2085] sm:$0xff] %vm17, %v2069
    %2087 = vst.msk [vmem:[%s2085 + $0x8] sm:$0xff] %vm17, %v2070
    %2088 = vst.msk [vmem:[%s2085 + $0x10] sm:$0xff] %vm17, %v2071
    %2089 = vst.msk [vmem:[%s2085 + $0x18] sm:$0xff] %vm17, %v2072
    %2090 = vst.msk [vmem:[%s2085 + $0x20] sm:$0xff] %vm17, %v2073
    %2091 = vst.msk [vmem:[%s2085 + $0x28] sm:$0xff] %vm17, %v2074
    %2092 = vst.msk [vmem:[%s2085 + $0x30] sm:$0xff] %vm17, %v2075
    %2093 = vst.msk [vmem:[%s2085 + $0x38] sm:$0xff] %vm17, %v2076
    %2094 = vst.msk [vmem:[%s2085 + $0x40] sm:$0xff] %vm17, %v2077
    %2095 = vst.msk [vmem:[%s2085 + $0x48] sm:$0xff] %vm17, %v2078
    %2096 = vst.msk [vmem:[%s2085 + $0x50] sm:$0xff] %vm17, %v2079
    %2097 = vst.msk [vmem:[%s2085 + $0x58] sm:$0xff] %vm17, %v2080
    %2098 = vst.msk [vmem:[%s2085 + $0x60] sm:$0xff] %vm17, %v2081
    %2099 = vst.msk [vmem:[%s2085 + $0x68] sm:$0xff] %vm17, %v2082
    %2100 = vst.msk [vmem:[%s2085 + $0x70] sm:$0xff] %vm17, %v2083
    %2101 = vst.msk [vmem:[%s2085 + $0x78] sm:$0xff] %vm17, %v2084
    %2103 = vset.pattern.permute.xlu0 4
    %2104 = vperm.xlu0 %2103, %v59
    %v2105 = vpop.permute.xlu0 %2104
    %2108 = vset.pattern.permute.xlu0 4
    %2109 = vperm.xlu0 %2108, %v60
    %v2110 = vpop.permute.xlu0 %2109
    %2113 = vset.pattern.permute.xlu0 4
    %2114 = vperm.xlu0 %2113, %v61
    %v2115 = vpop.permute.xlu0 %2114
    %2118 = vset.pattern.permute.xlu0 4
    %2119 = vperm.xlu0 %2118, %v62
    %v2120 = vpop.permute.xlu0 %2119
    %2123 = vset.pattern.permute.xlu0 4
    %2124 = vperm.xlu0 %2123, %v63
    %v2125 = vpop.permute.xlu0 %2124
    %2128 = vset.pattern.permute.xlu0 4
    %2129 = vperm.xlu0 %2128, %v64
    %v2130 = vpop.permute.xlu0 %2129
    %2133 = vset.pattern.permute.xlu0 4
    %2134 = vperm.xlu0 %2133, %v65
    %v2135 = vpop.permute.xlu0 %2134
    %2138 = vset.pattern.permute.xlu0 4
    %2139 = vperm.xlu0 %2138, %v66
    %v2140 = vpop.permute.xlu0 %2139
    %2143 = vset.pattern.permute.xlu0 4
    %2144 = vperm.xlu0 %2143, %v67
    %v2145 = vpop.permute.xlu0 %2144
    %2148 = vset.pattern.permute.xlu0 4
    %2149 = vperm.xlu0 %2148, %v68
    %v2150 = vpop.permute.xlu0 %2149
    %2153 = vset.pattern.permute.xlu0 4
    %2154 = vperm.xlu0 %2153, %v69
    %v2155 = vpop.permute.xlu0 %2154
    %2158 = vset.pattern.permute.xlu0 4
    %2159 = vperm.xlu0 %2158, %v70
    %v2160 = vpop.permute.xlu0 %2159
    %2163 = vset.pattern.permute.xlu0 4
    %2164 = vperm.xlu0 %2163, %v71
    %v2165 = vpop.permute.xlu0 %2164
    %2168 = vset.pattern.permute.xlu0 4
    %2169 = vperm.xlu0 %2168, %v72
    %v2170 = vpop.permute.xlu0 %2169
    %2173 = vset.pattern.permute.xlu0 4
    %2174 = vperm.xlu0 %2173, %v73
    %v2175 = vpop.permute.xlu0 %2174
    %2178 = vset.pattern.permute.xlu0 4
    %2179 = vperm.xlu0 %2178, %v74
    %v2180 = vpop.permute.xlu0 %2179
    %v2182 = vmul.f32 %v2069, %v2105
    %v2183 = vmul.f32 %v2070, %v2110
    %v2184 = vmul.f32 %v2071, %v2115
    %v2185 = vmul.f32 %v2072, %v2120
    %v2186 = vmul.f32 %v2073, %v2125
    %v2187 = vmul.f32 %v2074, %v2130
    %v2188 = vmul.f32 %v2075, %v2135
    %v2189 = vmul.f32 %v2076, %v2140
    %v2190 = vmul.f32 %v2077, %v2145
    %v2191 = vmul.f32 %v2078, %v2150
    %v2192 = vmul.f32 %v2079, %v2155
    %v2193 = vmul.f32 %v2080, %v2160
    %v2194 = vmul.f32 %v2081, %v2165
    %v2195 = vmul.f32 %v2082, %v2170
    %v2196 = vmul.f32 %v2083, %v2175
    %v2197 = vmul.f32 %v2084, %v2180
    %v2198 = vsel %vm17, %v2182, 0.0
    %v2199 = vsel %vm17, %v2183, 0.0
    %v2200 = vadd.f32 %v2198, %v2199
    %v2201 = vsel %vm17, %v2184, 0.0
    %v2202 = vadd.f32 %v2200, %v2201
    %v2203 = vsel %vm17, %v2185, 0.0
    %v2204 = vadd.f32 %v2202, %v2203
    %v2205 = vsel %vm17, %v2186, 0.0
    %v2206 = vadd.f32 %v2204, %v2205
    %v2207 = vsel %vm17, %v2187, 0.0
    %v2208 = vadd.f32 %v2206, %v2207
    %v2209 = vsel %vm17, %v2188, 0.0
    %v2210 = vadd.f32 %v2208, %v2209
    %v2211 = vsel %vm17, %v2189, 0.0
    %v2212 = vadd.f32 %v2210, %v2211
    %v2213 = vsel %vm17, %v2190, 0.0
    %v2214 = vadd.f32 %v2212, %v2213
    %v2215 = vsel %vm17, %v2191, 0.0
    %v2216 = vadd.f32 %v2214, %v2215
    %v2217 = vsel %vm17, %v2192, 0.0
    %v2218 = vadd.f32 %v2216, %v2217
    %v2219 = vsel %vm17, %v2193, 0.0
    %v2220 = vadd.f32 %v2218, %v2219
    %v2221 = vsel %vm17, %v2194, 0.0
    %v2222 = vadd.f32 %v2220, %v2221
    %v2223 = vsel %vm17, %v2195, 0.0
    %v2224 = vadd.f32 %v2222, %v2223
    %v2225 = vsel %vm17, %v2196, 0.0
    %v2226 = vadd.f32 %v2224, %v2225
    %v2227 = vsel %vm17, %v2197, 0.0
    %v2228 = vadd.f32 %v2226, %v2227
    %v2229 = vrot.slane %v2228, 4
    %v2230 = vadd.f32 %v2228, %v2229
    %v2231 = vrot.slane %v2230, 2
    %v2232 = vadd.f32 %v2230, %v2231
    %v2233 = vrot.slane %v2232, 1
    %v2234 = vadd.f32 %v2232, %v2233
    %v2235 = vadd.f32 %v52, %v2234
    %v2236 = vmul.f32 %v2182, %v2069
    %v2237 = vmul.f32 %v2183, %v2070
    %v2238 = vmul.f32 %v2184, %v2071
    %v2239 = vmul.f32 %v2185, %v2072
    %v2240 = vmul.f32 %v2186, %v2073
    %v2241 = vmul.f32 %v2187, %v2074
    %v2242 = vmul.f32 %v2188, %v2075
    %v2243 = vmul.f32 %v2189, %v2076
    %v2244 = vmul.f32 %v2190, %v2077
    %v2245 = vmul.f32 %v2191, %v2078
    %v2246 = vmul.f32 %v2192, %v2079
    %v2247 = vmul.f32 %v2193, %v2080
    %v2248 = vmul.f32 %v2194, %v2081
    %v2249 = vmul.f32 %v2195, %v2082
    %v2250 = vmul.f32 %v2196, %v2083
    %v2251 = vmul.f32 %v2197, %v2084
    %v2252 = vsel %vm17, %v2236, 0.0
    %v2253 = vsel %vm17, %v2237, 0.0
    %v2254 = vadd.f32 %v2252, %v2253
    %v2255 = vsel %vm17, %v2238, 0.0
    %v2256 = vadd.f32 %v2254, %v2255
    %v2257 = vsel %vm17, %v2239, 0.0
    %v2258 = vadd.f32 %v2256, %v2257
    %v2259 = vsel %vm17, %v2240, 0.0
    %v2260 = vadd.f32 %v2258, %v2259
    %v2261 = vsel %vm17, %v2241, 0.0
    %v2262 = vadd.f32 %v2260, %v2261
    %v2263 = vsel %vm17, %v2242, 0.0
    %v2264 = vadd.f32 %v2262, %v2263
    %v2265 = vsel %vm17, %v2243, 0.0
    %v2266 = vadd.f32 %v2264, %v2265
    %v2267 = vsel %vm17, %v2244, 0.0
    %v2268 = vadd.f32 %v2266, %v2267
    %v2269 = vsel %vm17, %v2245, 0.0
    %v2270 = vadd.f32 %v2268, %v2269
    %v2271 = vsel %vm17, %v2246, 0.0
    %v2272 = vadd.f32 %v2270, %v2271
    %v2273 = vsel %vm17, %v2247, 0.0
    %v2274 = vadd.f32 %v2272, %v2273
    %v2275 = vsel %vm17, %v2248, 0.0
    %v2276 = vadd.f32 %v2274, %v2275
    %v2277 = vsel %vm17, %v2249, 0.0
    %v2278 = vadd.f32 %v2276, %v2277
    %v2279 = vsel %vm17, %v2250, 0.0
    %v2280 = vadd.f32 %v2278, %v2279
    %v2281 = vsel %vm17, %v2251, 0.0
    %v2282 = vadd.f32 %v2280, %v2281
    %v2283 = vrot.slane %v2282, 4
    %v2284 = vadd.f32 %v2282, %v2283
    %v2285 = vrot.slane %v2284, 2
    %v2286 = vadd.f32 %v2284, %v2285
    %v2287 = vrot.slane %v2286, 1
    %v2288 = vadd.f32 %v2286, %v2287
    %v2289 = vadd.f32 %v53, %v2288
    %v2290 = vsel %vm17, %v59, 0
    %v2292 = vsel %vm17, %v60, 0
    %v2294 = vsel %vm17, %v61, 0
    %v2296 = vsel %vm17, %v62, 0
    %v2298 = vsel %vm17, %v63, 0
    %v2300 = vsel %vm17, %v64, 0
    %v2302 = vsel %vm17, %v65, 0
    %v2304 = vsel %vm17, %v66, 0
    %v2306 = vsel %vm17, %v67, 0
    %v2308 = vsel %vm17, %v68, 0
    %v2310 = vsel %vm17, %v69, 0
    %v2312 = vsel %vm17, %v70, 0
    %v2314 = vsel %vm17, %v71, 0
    %v2316 = vsel %vm17, %v72, 0
    %v2318 = vsel %vm17, %v73, 0
    %v2320 = vsel %vm17, %v74, 0
    %2322 = vmatprep.subr.mxu0 0.0
    %2323 = vmatpush1.msra.mxu0 %v28
    %2324 = vmatprep.subr.mxu0 0.0
    %2325 = vmatpush1.msra.mxu0 0.0
    %2326 = vmatprep.subr.mxu0 0.0
    %2327 = vmatpush1.msra.mxu0 0.0
    %2328 = vmatprep.subr.mxu0 0.0
    %2329 = vmatpush1.msra.mxu0 0.0
    %2330 = vmatprep.subr.mxu0 0.0
    %2331 = vmatpush1.msra.mxu0 0.0
    %2332 = vmatprep.subr.mxu0 0.0
    %2333 = vmatpush1.msra.mxu0 0.0
    %2334 = vmatprep.subr.mxu0 0.0
    %2335 = vmatpush1.msra.mxu0 0.0
    %2336 = vmatprep.subr.mxu0 0.0
    %2337 = vmatpush1.msra.mxu0 0.0
    %2338 = vmatprep.subr.mxu0 0.0
    %2339 = vmatpush1.msra.mxu0 0.0
    %2340 = vmatprep.subr.mxu0 0.0
    %2341 = vmatpush1.msra.mxu0 0.0
    %2342 = vmatprep.subr.mxu0 0.0
    %2343 = vmatpush1.msra.mxu0 0.0
    %2344 = vmatprep.subr.mxu0 0.0
    %2345 = vmatpush1.msra.mxu0 0.0
    %2346 = vmatprep.subr.mxu0 0.0
    %2347 = vmatpush1.msra.mxu0 0.0
    %2348 = vmatprep.subr.mxu0 0.0
    %2349 = vmatpush1.msra.mxu0 0.0
    %2350 = vmatprep.subr.mxu0 0.0
    %2351 = vmatpush1.msra.mxu0 0.0
    %2352 = vmatprep.subr.mxu0 0.0
    %2353 = vmatpush1.msra.mxu0 0.0
    %2354 = vmatprep.subr.mxu0 0.0
    %2355 = vmatpush1.msra.mxu0 0.0
    %2356 = vmatprep.subr.mxu0 0.0
    %2357 = vmatpush1.msra.mxu0 0.0
    %2358 = vmatprep.subr.mxu0 0.0
    %2359 = vmatpush1.msra.mxu0 0.0
    %2360 = vmatprep.subr.mxu0 0.0
    %2361 = vmatpush1.msra.mxu0 0.0
    %2362 = vmatprep.subr.mxu0 0.0
    %2363 = vmatpush1.msra.mxu0 0.0
    %2364 = vmatprep.subr.mxu0 0.0
    %2365 = vmatpush1.msra.mxu0 0.0
    %2366 = vmatprep.subr.mxu0 0.0
    %2367 = vmatpush1.msra.mxu0 0.0
    %2368 = vmatprep.subr.mxu0 0.0
    %2369 = vmatpush1.msra.mxu0 0.0
    %2370 = vmatprep.subr.mxu0 0.0
    %2371 = vmatpush1.msra.mxu0 0.0
    %2372 = vmatprep.subr.mxu0 0.0
    %2373 = vmatpush1.msra.mxu0 0.0
    %2374 = vmatprep.subr.mxu0 0.0
    %2375 = vmatpush1.msra.mxu0 0.0
    %2376 = vmatprep.subr.mxu0 0.0
    %2377 = vmatpush1.msra.mxu0 0.0
    %2378 = vmatprep.subr.mxu0 0.0
    %2379 = vmatpush1.msra.mxu0 0.0
    %2380 = vmatprep.subr.mxu0 0.0
    %2381 = vmatpush1.msra.mxu0 0.0
    %2382 = vmatprep.subr.mxu0 0.0
    %2383 = vmatpush1.msra.mxu0 0.0
    %2384 = vmatprep.subr.mxu0 0.0
    %2385 = vmatpush1.msra.mxu0 0.0
    %2386 = vmatprep.mubr.f32.mxu0 0.0
    %2387 = vmatmul.mubr.f32.gmra.mrb[0].mxu0 %v2290
    %v2388 = vpop.f32.mrb[0].mxu0
    %v2389 = vadd.f32 0.0, %v2388
    %v2390 = vpop.f32.mrb[0].mxu0
    %2391 = vmatprep.mubr.f32.mxu0 0.0
    %2392 = vmatmul.mubr.f32.gmra.mrb[0].mxu0 %v2292
    %v2393 = vpop.f32.mrb[0].mxu0
    %v2394 = vadd.f32 0.0, %v2393
    %v2395 = vpop.f32.mrb[0].mxu0
    %2396 = vmatprep.mubr.f32.mxu0 0.0
    %2397 = vmatmul.mubr.f32.gmra.mrb[0].mxu0 %v2294
    %v2398 = vpop.f32.mrb[0].mxu0
    %v2399 = vadd.f32 0.0, %v2398
    %v2400 = vpop.f32.mrb[0].mxu0
    %2401 = vmatprep.mubr.f32.mxu0 0.0
    %2402 = vmatmul.mubr.f32.gmra.mrb[0].mxu0 %v2296
    %v2403 = vpop.f32.mrb[0].mxu0
    %v2404 = vadd.f32 0.0, %v2403
    %v2405 = vpop.f32.mrb[0].mxu0
    %2406 = vmatprep.mubr.f32.mxu0 0.0
    %2407 = vmatmul.mubr.f32.gmra.mrb[0].mxu0 %v2298
    %v2408 = vpop.f32.mrb[0].mxu0
    %v2409 = vadd.f32 0.0, %v2408
    %v2410 = vpop.f32.mrb[0].mxu0
    %2411 = vmatprep.mubr.f32.mxu0 0.0
    %2412 = vmatmul.mubr.f32.gmra.mrb[0].mxu0 %v2300
    %v2413 = vpop.f32.mrb[0].mxu0
    %v2414 = vadd.f32 0.0, %v2413
    %v2415 = vpop.f32.mrb[0].mxu0
    %2416 = vmatprep.mubr.f32.mxu0 0.0
    %2417 = vmatmul.mubr.f32.gmra.mrb[0].mxu0 %v2302
    %v2418 = vpop.f32.mrb[0].mxu0
    %v2419 = vadd.f32 0.0, %v2418
    %v2420 = vpop.f32.mrb[0].mxu0
    %2421 = vmatprep.mubr.f32.mxu0 0.0
    %2422 = vmatmul.mubr.f32.gmra.mrb[0].mxu0 %v2304
    %v2423 = vpop.f32.mrb[0].mxu0
    %v2424 = vadd.f32 0.0, %v2423
    %v2425 = vpop.f32.mrb[0].mxu0
    %2426 = vmatprep.mubr.f32.mxu0 0.0
    %2427 = vmatmul.mubr.f32.gmra.mrb[0].mxu0 %v2306
    %v2428 = vpop.f32.mrb[0].mxu0
    %v2429 = vadd.f32 0.0, %v2428
    %v2430 = vpop.f32.mrb[0].mxu0
    %2431 = vmatprep.mubr.f32.mxu0 0.0
    %2432 = vmatmul.mubr.f32.gmra.mrb[0].mxu0 %v2308
    %v2433 = vpop.f32.mrb[0].mxu0
    %v2434 = vadd.f32 0.0, %v2433
    %v2435 = vpop.f32.mrb[0].mxu0
    %2436 = vmatprep.mubr.f32.mxu0 0.0
    %2437 = vmatmul.mubr.f32.gmra.mrb[0].mxu0 %v2310
    %v2438 = vpop.f32.mrb[0].mxu0
    %v2439 = vadd.f32 0.0, %v2438
    %v2440 = vpop.f32.mrb[0].mxu0
    %2441 = vmatprep.mubr.f32.mxu0 0.0
    %2442 = vmatmul.mubr.f32.gmra.mrb[0].mxu0 %v2312
    %v2443 = vpop.f32.mrb[0].mxu0
    %v2444 = vadd.f32 0.0, %v2443
    %v2445 = vpop.f32.mrb[0].mxu0
    %2446 = vmatprep.mubr.f32.mxu0 0.0
    %2447 = vmatmul.mubr.f32.gmra.mrb[0].mxu0 %v2314
    %v2448 = vpop.f32.mrb[0].mxu0
    %v2449 = vadd.f32 0.0, %v2448
    %v2450 = vpop.f32.mrb[0].mxu0
    %2451 = vmatprep.mubr.f32.mxu0 0.0
    %2452 = vmatmul.mubr.f32.gmra.mrb[0].mxu0 %v2316
    %v2453 = vpop.f32.mrb[0].mxu0
    %v2454 = vadd.f32 0.0, %v2453
    %v2455 = vpop.f32.mrb[0].mxu0
    %2456 = vmatprep.mubr.f32.mxu0 0.0
    %2457 = vmatmul.mubr.f32.gmra.mrb[0].mxu0 %v2318
    %v2458 = vpop.f32.mrb[0].mxu0
    %v2459 = vadd.f32 0.0, %v2458
    %v2460 = vpop.f32.mrb[0].mxu0
    %2461 = vmatprep.mubr.f32.mxu0 0.0
    %2462 = vmatmul.mubr.f32.gmra.mrb[0].mxu0 %v2320
    %v2463 = vpop.f32.mrb[0].mxu0
    %v2464 = vadd.f32 0.0, %v2463
    %v2465 = vpop.f32.mrb[0].mxu0
    %2466 = vdwg.mxu0
    %v2467 = vmul.f32 %v2389, %v2105
    %v2468 = vmul.f32 %v2394, %v2110
    %v2469 = vmul.f32 %v2399, %v2115
    %v2470 = vmul.f32 %v2404, %v2120
    %v2471 = vmul.f32 %v2409, %v2125
    %v2472 = vmul.f32 %v2414, %v2130
    %v2473 = vmul.f32 %v2419, %v2135
    %v2474 = vmul.f32 %v2424, %v2140
    %v2475 = vmul.f32 %v2429, %v2145
    %v2476 = vmul.f32 %v2434, %v2150
    %v2477 = vmul.f32 %v2439, %v2155
    %v2478 = vmul.f32 %v2444, %v2160
    %v2479 = vmul.f32 %v2449, %v2165
    %v2480 = vmul.f32 %v2454, %v2170
    %v2481 = vmul.f32 %v2459, %v2175
    %v2482 = vmul.f32 %v2464, %v2180
    %v2483 = vsel %vm17, %v2467, 0.0
    %v2484 = vsel %vm17, %v2468, 0.0
    %v2485 = vadd.f32 %v2483, %v2484
    %v2486 = vsel %vm17, %v2469, 0.0
    %v2487 = vadd.f32 %v2485, %v2486
    %v2488 = vsel %vm17, %v2470, 0.0
    %v2489 = vadd.f32 %v2487, %v2488
    %v2490 = vsel %vm17, %v2471, 0.0
    %v2491 = vadd.f32 %v2489, %v2490
    %v2492 = vsel %vm17, %v2472, 0.0
    %v2493 = vadd.f32 %v2491, %v2492
    %v2494 = vsel %vm17, %v2473, 0.0
    %v2495 = vadd.f32 %v2493, %v2494
    %v2496 = vsel %vm17, %v2474, 0.0
    %v2497 = vadd.f32 %v2495, %v2496
    %v2498 = vsel %vm17, %v2475, 0.0
    %v2499 = vadd.f32 %v2497, %v2498
    %v2500 = vsel %vm17, %v2476, 0.0
    %v2501 = vadd.f32 %v2499, %v2500
    %v2502 = vsel %vm17, %v2477, 0.0
    %v2503 = vadd.f32 %v2501, %v2502
    %v2504 = vsel %vm17, %v2478, 0.0
    %v2505 = vadd.f32 %v2503, %v2504
    %v2506 = vsel %vm17, %v2479, 0.0
    %v2507 = vadd.f32 %v2505, %v2506
    %v2508 = vsel %vm17, %v2480, 0.0
    %v2509 = vadd.f32 %v2507, %v2508
    %v2510 = vsel %vm17, %v2481, 0.0
    %v2511 = vadd.f32 %v2509, %v2510
    %v2512 = vsel %vm17, %v2482, 0.0
    %v2513 = vadd.f32 %v2511, %v2512
    %v2514 = vrot.slane %v2513, 4
    %v2515 = vadd.f32 %v2513, %v2514
    %v2516 = vrot.slane %v2515, 2
    %v2517 = vadd.f32 %v2515, %v2516
    %v2518 = vrot.slane %v2517, 1
    %v2519 = vadd.f32 %v2517, %v2518
    %v2520 = vadd.f32 %v54, %v2519
    %v2521 = vmul.f32 %v2467, %v2389
    %v2522 = vmul.f32 %v2468, %v2394
    %v2523 = vmul.f32 %v2469, %v2399
    %v2524 = vmul.f32 %v2470, %v2404
    %v2525 = vmul.f32 %v2471, %v2409
    %v2526 = vmul.f32 %v2472, %v2414
    %v2527 = vmul.f32 %v2473, %v2419
    %v2528 = vmul.f32 %v2474, %v2424
    %v2529 = vmul.f32 %v2475, %v2429
    %v2530 = vmul.f32 %v2476, %v2434
    %v2531 = vmul.f32 %v2477, %v2439
    %v2532 = vmul.f32 %v2478, %v2444
    %v2533 = vmul.f32 %v2479, %v2449
    %v2534 = vmul.f32 %v2480, %v2454
    %v2535 = vmul.f32 %v2481, %v2459
    %v2536 = vmul.f32 %v2482, %v2464
    %v2537 = vsel %vm17, %v2521, 0.0
    %v2538 = vsel %vm17, %v2522, 0.0
    %v2539 = vadd.f32 %v2537, %v2538
    %v2540 = vsel %vm17, %v2523, 0.0
    %v2541 = vadd.f32 %v2539, %v2540
    %v2542 = vsel %vm17, %v2524, 0.0
    %v2543 = vadd.f32 %v2541, %v2542
    %v2544 = vsel %vm17, %v2525, 0.0
    %v2545 = vadd.f32 %v2543, %v2544
    %v2546 = vsel %vm17, %v2526, 0.0
    %v2547 = vadd.f32 %v2545, %v2546
    %v2548 = vsel %vm17, %v2527, 0.0
    %v2549 = vadd.f32 %v2547, %v2548
    %v2550 = vsel %vm17, %v2528, 0.0
    %v2551 = vadd.f32 %v2549, %v2550
    %v2552 = vsel %vm17, %v2529, 0.0
    %v2553 = vadd.f32 %v2551, %v2552
    %v2554 = vsel %vm17, %v2530, 0.0
    %v2555 = vadd.f32 %v2553, %v2554
    %v2556 = vsel %vm17, %v2531, 0.0
    %v2557 = vadd.f32 %v2555, %v2556
    %v2558 = vsel %vm17, %v2532, 0.0
    %v2559 = vadd.f32 %v2557, %v2558
    %v2560 = vsel %vm17, %v2533, 0.0
    %v2561 = vadd.f32 %v2559, %v2560
    %v2562 = vsel %vm17, %v2534, 0.0
    %v2563 = vadd.f32 %v2561, %v2562
    %v2564 = vsel %vm17, %v2535, 0.0
    %v2565 = vadd.f32 %v2563, %v2564
    %v2566 = vsel %vm17, %v2536, 0.0
    %v2567 = vadd.f32 %v2565, %v2566
    %v2568 = vrot.slane %v2567, 4
    %v2569 = vadd.f32 %v2567, %v2568
    %v2570 = vrot.slane %v2569, 2
    %v2571 = vadd.f32 %v2569, %v2570
    %v2572 = vrot.slane %v2571, 1
    %v2573 = vadd.f32 %v2571, %v2572
    %v2574 = vadd.f32 %v55, %v2573
  $region22: #{tpu_custom_call.1} parent=0 // loop_footer
    %s51 = sadd.s32 1, %s47
  $region23: #{tpu_custom_call.1} parent=0 // loop_footer_branch
    %46 = sbr.rel target = $region19
  $region24: #{tpu_custom_call.1} parent=0 // loop_exit
    _
  %v2575 = vmul.f32 %v52, 0.001953125
  %v2576 = vmul.f32 %v53, 0.001953125
  %v2577 = vmul.f32 %v2575, %v2575
  %v2578 = vsub.f32 %v2576, %v2577
  %v2579 = vmax.f32 %v2578, 0.0
  %v2580 = vadd.f32 %v2579, 1e-05
  %v2581 = vrsqrt.pop %v2580
  %v2582 = vmul.f32 %v26, %v2581
  %v2583 = vmul.f32 %v2575, %v2582
  %v2585 = vrot.slane %v2583, 7
  %v2587 = vsub.f32 %v26, %v2585
  %v2588 = vmul.f32 %v54, 0.001953125
  %v2589 = vmul.f32 %v55, 0.001953125
  %v2590 = vmul.f32 %v2588, %v2588
  %v2591 = vsub.f32 %v2589, %v2590
  %v2592 = vmax.f32 %v2591, 0.0
  %v2593 = vadd.f32 %v2592, 1e-05
  %v2594 = vrsqrt.pop %v2593
  %v2595 = vmul.f32 %v26, %v2594
  %v2596 = vmul.f32 %v2588, %v2595
  %v2598 = vrot.slane %v2596, 7
  %v2600 = vsub.f32 %v26, %v2598
  %v2601 = vlaneseq
  %v2602 = vshrl.u32 %v2601, 7
  %v2603 = vsub.s32 0, %v2602
  %v2604 = vrot.slane %v2582, %v2603
  %v2605 = vlaneseq
  %v2606 = vshrl.u32 %v2605, 7
  %v2607 = vsub.s32 1, %v2606
  %v2608 = vrot.slane %v2587, %v2607
  loop: start=0, step=1, limit=7
  $region25: #{tpu_custom_call.1} parent=0 // loop_pre_header
    _
  $region26: #{tpu_custom_call.1} parent=0 // loop_header
    %s2610 = sphi 0, %s2614
    %p2611 = scmp.ge.s32.totalorder %s2610, 7
  $region27: #{tpu_custom_call.1} parent=0 // loop_header_branch
    %2613 = sbr.rel (%p2611) target = $region31
  $region28: #{tpu_custom_call.1} parent=0 // loop_body
    %s2615 = smul.u32 %s2610, 128
    %s2616 = sadd.s32 %s2615, 32
    %s2617 = scalar_lea.vmem %s0, %s2616
    %v2618 = vld [vmem:[%s2617] sm:$0xff]
    %v2619 = vld [vmem:[%s2617 + $0x8] sm:$0xff]
    %v2620 = vld [vmem:[%s2617 + $0x10] sm:$0xff]
    %v2621 = vld [vmem:[%s2617 + $0x18] sm:$0xff]
    %v2622 = vld [vmem:[%s2617 + $0x20] sm:$0xff]
    %v2623 = vld [vmem:[%s2617 + $0x28] sm:$0xff]
    %v2624 = vld [vmem:[%s2617 + $0x30] sm:$0xff]
    %v2625 = vld [vmem:[%s2617 + $0x38] sm:$0xff]
    %v2626 = vld [vmem:[%s2617 + $0x40] sm:$0xff]
    %v2627 = vld [vmem:[%s2617 + $0x48] sm:$0xff]
    %v2628 = vld [vmem:[%s2617 + $0x50] sm:$0xff]
    %v2629 = vld [vmem:[%s2617 + $0x58] sm:$0xff]
    %v2630 = vld [vmem:[%s2617 + $0x60] sm:$0xff]
    %v2631 = vld [vmem:[%s2617 + $0x68] sm:$0xff]
    %v2632 = vld [vmem:[%s2617 + $0x70] sm:$0xff]
    %v2633 = vld [vmem:[%s2617 + $0x78] sm:$0xff]
    %s2634 = scalar_lea.vmem [#allocation2], %s2616
    %v2635 = vld [vmem:[%s2634] sm:$0xff]
    %v2636 = vld [vmem:[%s2634 + $0x8] sm:$0xff]
    %v2637 = vld [vmem:[%s2634 + $0x10] sm:$0xff]
    %v2638 = vld [vmem:[%s2634 + $0x18] sm:$0xff]
    %v2639 = vld [vmem:[%s2634 + $0x20] sm:$0xff]
    %v2640 = vld [vmem:[%s2634 + $0x28] sm:$0xff]
    %v2641 = vld [vmem:[%s2634 + $0x30] sm:$0xff]
    %v2642 = vld [vmem:[%s2634 + $0x38] sm:$0xff]
    %v2643 = vld [vmem:[%s2634 + $0x40] sm:$0xff]
    %v2644 = vld [vmem:[%s2634 + $0x48] sm:$0xff]
    %v2645 = vld [vmem:[%s2634 + $0x50] sm:$0xff]
    %v2646 = vld [vmem:[%s2634 + $0x58] sm:$0xff]
    %v2647 = vld [vmem:[%s2634 + $0x60] sm:$0xff]
    %v2648 = vld [vmem:[%s2634 + $0x68] sm:$0xff]
    %v2649 = vld [vmem:[%s2634 + $0x70] sm:$0xff]
    %v2650 = vld [vmem:[%s2634 + $0x78] sm:$0xff]
    %v2651 = vmul.f32 %v2635, %v2604
    %v2652 = vmul.f32 %v2636, %v2604
    %v2653 = vmul.f32 %v2637, %v2604
    %v2654 = vmul.f32 %v2638, %v2604
    %v2655 = vmul.f32 %v2639, %v2604
    %v2656 = vmul.f32 %v2640, %v2604
    %v2657 = vmul.f32 %v2641, %v2604
    %v2658 = vmul.f32 %v2642, %v2604
    %v2659 = vmul.f32 %v2643, %v2604
    %v2660 = vmul.f32 %v2644, %v2604
    %v2661 = vmul.f32 %v2645, %v2604
    %v2662 = vmul.f32 %v2646, %v2604
    %v2663 = vmul.f32 %v2647, %v2604
    %v2664 = vmul.f32 %v2648, %v2604
    %v2665 = vmul.f32 %v2649, %v2604
    %v2666 = vmul.f32 %v2650, %v2604
    %v2667 = vadd.f32 %v2651, %v2608
    %v2668 = vadd.f32 %v2652, %v2608
    %v2669 = vadd.f32 %v2653, %v2608
    %v2670 = vadd.f32 %v2654, %v2608
    %v2671 = vadd.f32 %v2655, %v2608
    %v2672 = vadd.f32 %v2656, %v2608
    %v2673 = vadd.f32 %v2657, %v2608
    %v2674 = vadd.f32 %v2658, %v2608
    %v2675 = vadd.f32 %v2659, %v2608
    %v2676 = vadd.f32 %v2660, %v2608
    %v2677 = vadd.f32 %v2661, %v2608
    %v2678 = vadd.f32 %v2662, %v2608
    %v2679 = vadd.f32 %v2663, %v2608
    %v2680 = vadd.f32 %v2664, %v2608
    %v2681 = vadd.f32 %v2665, %v2608
    %v2682 = vadd.f32 %v2666, %v2608
    %vm2683 = vcmp.gt.f32.partialorder %v2667, 0.0
    %vm2684 = vcmp.gt.f32.partialorder %v2668, 0.0
    %vm2685 = vcmp.gt.f32.partialorder %v2669, 0.0
    %vm2686 = vcmp.gt.f32.partialorder %v2670, 0.0
    %vm2687 = vcmp.gt.f32.partialorder %v2671, 0.0
    %vm2688 = vcmp.gt.f32.partialorder %v2672, 0.0
    %vm2689 = vcmp.gt.f32.partialorder %v2673, 0.0
    %vm2690 = vcmp.gt.f32.partialorder %v2674, 0.0
    %vm2691 = vcmp.gt.f32.partialorder %v2675, 0.0
    %vm2692 = vcmp.gt.f32.partialorder %v2676, 0.0
    %vm2693 = vcmp.gt.f32.partialorder %v2677, 0.0
    %vm2694 = vcmp.gt.f32.partialorder %v2678, 0.0
    %vm2695 = vcmp.gt.f32.partialorder %v2679, 0.0
    %vm2696 = vcmp.gt.f32.partialorder %v2680, 0.0
    %vm2697 = vcmp.gt.f32.partialorder %v2681, 0.0
    %vm2698 = vcmp.gt.f32.partialorder %v2682, 0.0
    %v2699 = vmul.f32 %v2667, 0.01
    %v2700 = vmul.f32 %v2668, 0.01
    %v2701 = vmul.f32 %v2669, 0.01
    %v2702 = vmul.f32 %v2670, 0.01
    %v2703 = vmul.f32 %v2671, 0.01
    %v2704 = vmul.f32 %v2672, 0.01
    %v2705 = vmul.f32 %v2673, 0.01
    %v2706 = vmul.f32 %v2674, 0.01
    %v2707 = vmul.f32 %v2675, 0.01
    %v2708 = vmul.f32 %v2676, 0.01
    %v2709 = vmul.f32 %v2677, 0.01
    %v2710 = vmul.f32 %v2678, 0.01
    %v2711 = vmul.f32 %v2679, 0.01
    %v2712 = vmul.f32 %v2680, 0.01
    %v2713 = vmul.f32 %v2681, 0.01
    %v2714 = vmul.f32 %v2682, 0.01
    %v2715 = vsel %vm2683, %v2667, %v2699
    %v2716 = vsel %vm2684, %v2668, %v2700
    %v2717 = vsel %vm2685, %v2669, %v2701
    %v2718 = vsel %vm2686, %v2670, %v2702
    %v2719 = vsel %vm2687, %v2671, %v2703
    %v2720 = vsel %vm2688, %v2672, %v2704
    %v2721 = vsel %vm2689, %v2673, %v2705
    %v2722 = vsel %vm2690, %v2674, %v2706
    %v2723 = vsel %vm2691, %v2675, %v2707
    %v2724 = vsel %vm2692, %v2676, %v2708
    %v2725 = vsel %vm2693, %v2677, %v2709
    %v2726 = vsel %vm2694, %v2678, %v2710
    %v2727 = vsel %vm2695, %v2679, %v2711
    %v2728 = vsel %vm2696, %v2680, %v2712
    %v2729 = vsel %vm2697, %v2681, %v2713
    %v2730 = vsel %vm2698, %v2682, %v2714
    %2732 = vset.pattern.permute.xlu0 4
    %2733 = vperm.xlu0 %2732, %v2618
    %v2734 = vpop.permute.xlu0 %2733
    %2737 = vset.pattern.permute.xlu0 4
    %2738 = vperm.xlu0 %2737, %v2619
    %v2739 = vpop.permute.xlu0 %2738
    %2742 = vset.pattern.permute.xlu0 4
    %2743 = vperm.xlu0 %2742, %v2620
    %v2744 = vpop.permute.xlu0 %2743
    %2747 = vset.pattern.permute.xlu0 4
    %2748 = vperm.xlu0 %2747, %v2621
    %v2749 = vpop.permute.xlu0 %2748
    %2752 = vset.pattern.permute.xlu0 4
    %2753 = vperm.xlu0 %2752, %v2622
    %v2754 = vpop.permute.xlu0 %2753
    %2757 = vset.pattern.permute.xlu0 4
    %2758 = vperm.xlu0 %2757, %v2623
    %v2759 = vpop.permute.xlu0 %2758
    %2762 = vset.pattern.permute.xlu0 4
    %2763 = vperm.xlu0 %2762, %v2624
    %v2764 = vpop.permute.xlu0 %2763
    %2767 = vset.pattern.permute.xlu0 4
    %2768 = vperm.xlu0 %2767, %v2625
    %v2769 = vpop.permute.xlu0 %2768
    %2772 = vset.pattern.permute.xlu0 4
    %2773 = vperm.xlu0 %2772, %v2626
    %v2774 = vpop.permute.xlu0 %2773
    %2777 = vset.pattern.permute.xlu0 4
    %2778 = vperm.xlu0 %2777, %v2627
    %v2779 = vpop.permute.xlu0 %2778
    %2782 = vset.pattern.permute.xlu0 4
    %2783 = vperm.xlu0 %2782, %v2628
    %v2784 = vpop.permute.xlu0 %2783
    %2787 = vset.pattern.permute.xlu0 4
    %2788 = vperm.xlu0 %2787, %v2629
    %v2789 = vpop.permute.xlu0 %2788
    %2792 = vset.pattern.permute.xlu0 4
    %2793 = vperm.xlu0 %2792, %v2630
    %v2794 = vpop.permute.xlu0 %2793
    %2797 = vset.pattern.permute.xlu0 4
    %2798 = vperm.xlu0 %2797, %v2631
    %v2799 = vpop.permute.xlu0 %2798
    %2802 = vset.pattern.permute.xlu0 4
    %2803 = vperm.xlu0 %2802, %v2632
    %v2804 = vpop.permute.xlu0 %2803
    %2807 = vset.pattern.permute.xlu0 4
    %2808 = vperm.xlu0 %2807, %v2633
    %v2809 = vpop.permute.xlu0 %2808
    %v2811 = vmul.f32 %v2715, %v2734
    %v2812 = vmul.f32 %v2716, %v2739
    %v2813 = vmul.f32 %v2717, %v2744
    %v2814 = vmul.f32 %v2718, %v2749
    %v2815 = vmul.f32 %v2719, %v2754
    %v2816 = vmul.f32 %v2720, %v2759
    %v2817 = vmul.f32 %v2721, %v2764
    %v2818 = vmul.f32 %v2722, %v2769
    %v2819 = vmul.f32 %v2723, %v2774
    %v2820 = vmul.f32 %v2724, %v2779
    %v2821 = vmul.f32 %v2725, %v2784
    %v2822 = vmul.f32 %v2726, %v2789
    %v2823 = vmul.f32 %v2727, %v2794
    %v2824 = vmul.f32 %v2728, %v2799
    %v2825 = vmul.f32 %v2729, %v2804
    %v2826 = vmul.f32 %v2730, %v2809
    %2827 = vst.msk [vmem:[%s2634] sm:$0xff] %vm17, %v2811
    %2828 = vst.msk [vmem:[%s2634 + $0x8] sm:$0xff] %vm17, %v2812
    %2829 = vst.msk [vmem:[%s2634 + $0x10] sm:$0xff] %vm17, %v2813
    %2830 = vst.msk [vmem:[%s2634 + $0x18] sm:$0xff] %vm17, %v2814
    %2831 = vst.msk [vmem:[%s2634 + $0x20] sm:$0xff] %vm17, %v2815
    %2832 = vst.msk [vmem:[%s2634 + $0x28] sm:$0xff] %vm17, %v2816
    %2833 = vst.msk [vmem:[%s2634 + $0x30] sm:$0xff] %vm17, %v2817
    %2834 = vst.msk [vmem:[%s2634 + $0x38] sm:$0xff] %vm17, %v2818
    %2835 = vst.msk [vmem:[%s2634 + $0x40] sm:$0xff] %vm17, %v2819
    %2836 = vst.msk [vmem:[%s2634 + $0x48] sm:$0xff] %vm17, %v2820
    %2837 = vst.msk [vmem:[%s2634 + $0x50] sm:$0xff] %vm17, %v2821
    %2838 = vst.msk [vmem:[%s2634 + $0x58] sm:$0xff] %vm17, %v2822
    %2839 = vst.msk [vmem:[%s2634 + $0x60] sm:$0xff] %vm17, %v2823
    %2840 = vst.msk [vmem:[%s2634 + $0x68] sm:$0xff] %vm17, %v2824
    %2841 = vst.msk [vmem:[%s2634 + $0x70] sm:$0xff] %vm17, %v2825
    %2842 = vst.msk [vmem:[%s2634 + $0x78] sm:$0xff] %vm17, %v2826
  $region29: #{tpu_custom_call.1} parent=0 // loop_footer
    %s2614 = sadd.s32 1, %s2610
  $region30: #{tpu_custom_call.1} parent=0 // loop_footer_branch
    %2609 = sbr.rel target = $region26
  $region31: #{tpu_custom_call.1} parent=0 // loop_exit
    _
  %v2843 = vld [vmem:[%s2] sm:$0xff]
  %s2844 = scalar_lea.vmem %s2, 8
  %v2845 = vld [vmem:[%s2844] sm:$0xff]
  %s2846 = scalar_lea.vmem %s2, 16
  %v2847 = vld [vmem:[%s2846] sm:$0xff]
  %s2848 = scalar_lea.vmem %s2, 24
  %v2849 = vld [vmem:[%s2848] sm:$0xff]
  %s2850 = scalar_lea.vmem %s2, 32
  %v2851 = vld [vmem:[%s2850] sm:$0xff]
  %s2852 = scalar_lea.vmem %s2, 40
  %v2853 = vld [vmem:[%s2852] sm:$0xff]
  %s2854 = scalar_lea.vmem %s2, 48
  %v2855 = vld [vmem:[%s2854] sm:$0xff]
  %s2856 = scalar_lea.vmem %s2, 56
  %v2857 = vld [vmem:[%s2856] sm:$0xff]
  %s2858 = scalar_lea.vmem %s2, 64
  %v2859 = vld [vmem:[%s2858] sm:$0xff]
  loop: start=0, step=1, limit=7
  $region32: #{tpu_custom_call.1} parent=0 // loop_pre_header
    _
  $region33: #{tpu_custom_call.1} parent=0 // loop_header
    %s2861 = sphi 0, %s2865
    %p2862 = scmp.ge.s32.totalorder %s2861, 7
    %v2866 = vphi 0.0, %v5047
    %v2867 = vphi 0.0, %v5101
  $region34: #{tpu_custom_call.1} parent=0 // loop_header_branch
    %2864 = sbr.rel (%p2862) target = $region38
  $region35: #{tpu_custom_call.1} parent=0 // loop_body
    %s2868 = smul.u32 %s2861, 128
    %s2869 = sadd.s32 %s2868, 32
    %s2870 = scalar_lea.vmem %s0, %s2869
    %v2871 = vld [vmem:[%s2870] sm:$0xff]
    %v2872 = vld [vmem:[%s2870 + $0x8] sm:$0xff]
    %v2873 = vld [vmem:[%s2870 + $0x10] sm:$0xff]
    %v2874 = vld [vmem:[%s2870 + $0x18] sm:$0xff]
    %v2875 = vld [vmem:[%s2870 + $0x20] sm:$0xff]
    %v2876 = vld [vmem:[%s2870 + $0x28] sm:$0xff]
    %v2877 = vld [vmem:[%s2870 + $0x30] sm:$0xff]
    %v2878 = vld [vmem:[%s2870 + $0x38] sm:$0xff]
    %v2879 = vld [vmem:[%s2870 + $0x40] sm:$0xff]
    %v2880 = vld [vmem:[%s2870 + $0x48] sm:$0xff]
    %v2881 = vld [vmem:[%s2870 + $0x50] sm:$0xff]
    %v2882 = vld [vmem:[%s2870 + $0x58] sm:$0xff]
    %v2883 = vld [vmem:[%s2870 + $0x60] sm:$0xff]
    %v2884 = vld [vmem:[%s2870 + $0x68] sm:$0xff]
    %v2885 = vld [vmem:[%s2870 + $0x70] sm:$0xff]
    %v2886 = vld [vmem:[%s2870 + $0x78] sm:$0xff]
    %s2887 = sadd.s32 %s2869, 4294967271
    %s2888 = scalar_lea.vmem [#allocation2], %s2887
    %v2889 = vld [vmem:[%s2888] sm:$0xff]
    %v2890 = vld [vmem:[%s2888 + $0x8] sm:$0xff]
    %v2891 = vld [vmem:[%s2888 + $0x10] sm:$0xff]
    %v2892 = vld [vmem:[%s2888 + $0x18] sm:$0xff]
    %v2893 = vld [vmem:[%s2888 + $0x20] sm:$0xff]
    %v2894 = vld [vmem:[%s2888 + $0x28] sm:$0xff]
    %v2895 = vld [vmem:[%s2888 + $0x30] sm:$0xff]
    %v2896 = vld [vmem:[%s2888 + $0x38] sm:$0xff]
    %v2897 = vld [vmem:[%s2888 + $0x40] sm:$0xff]
    %v2898 = vld [vmem:[%s2888 + $0x48] sm:$0xff]
    %v2899 = vld [vmem:[%s2888 + $0x50] sm:$0xff]
    %v2900 = vld [vmem:[%s2888 + $0x58] sm:$0xff]
    %v2901 = vld [vmem:[%s2888 + $0x60] sm:$0xff]
    %v2902 = vld [vmem:[%s2888 + $0x68] sm:$0xff]
    %v2903 = vld [vmem:[%s2888 + $0x70] sm:$0xff]
    %v2904 = vld [vmem:[%s2888 + $0x78] sm:$0xff]
    %s2905 = sadd.s32 %s2869, 4294967272
    %s2906 = scalar_lea.vmem [#allocation2], %s2905
    %v2907 = vld [vmem:[%s2906] sm:$0xff]
    %v2908 = vld [vmem:[%s2906 + $0x8] sm:$0xff]
    %v2909 = vld [vmem:[%s2906 + $0x10] sm:$0xff]
    %v2910 = vld [vmem:[%s2906 + $0x18] sm:$0xff]
    %v2911 = vld [vmem:[%s2906 + $0x20] sm:$0xff]
    %v2912 = vld [vmem:[%s2906 + $0x28] sm:$0xff]
    %v2913 = vld [vmem:[%s2906 + $0x30] sm:$0xff]
    %v2914 = vld [vmem:[%s2906 + $0x38] sm:$0xff]
    %v2915 = vld [vmem:[%s2906 + $0x40] sm:$0xff]
    %v2916 = vld [vmem:[%s2906 + $0x48] sm:$0xff]
    %v2917 = vld [vmem:[%s2906 + $0x50] sm:$0xff]
    %v2918 = vld [vmem:[%s2906 + $0x58] sm:$0xff]
    %v2919 = vld [vmem:[%s2906 + $0x60] sm:$0xff]
    %v2920 = vld [vmem:[%s2906 + $0x68] sm:$0xff]
    %v2921 = vld [vmem:[%s2906 + $0x70] sm:$0xff]
    %v2922 = vld [vmem:[%s2906 + $0x78] sm:$0xff]
    %v2924 = vsel %vm17, %v2907, 0
    %v2927 = vsel %vm17, %v2908, 0
    %v2930 = vsel %vm17, %v2909, 0
    %v2933 = vsel %vm17, %v2910, 0
    %v2936 = vsel %vm17, %v2911, 0
    %v2939 = vsel %vm17, %v2912, 0
    %v2942 = vsel %vm17, %v2913, 0
    %v2945 = vsel %vm17, %v2914, 0
    %v2948 = vsel %vm17, %v2915, 0
    %v2951 = vsel %vm17, %v2916, 0
    %v2954 = vsel %vm17, %v2917, 0
    %v2957 = vsel %vm17, %v2918, 0
    %v2960 = vsel %vm17, %v2919, 0
    %v2963 = vsel %vm17, %v2920, 0
    %v2966 = vsel %vm17, %v2921, 0
    %v2969 = vsel %vm17, %v2922, 0
    %2971 = vmatprep.subr.mxu0 0.0
    %2972 = vmatpush1.msra.mxu0 %v2845
    %2973 = vmatprep.subr.mxu0 0.0
    %2974 = vmatpush1.msra.mxu0 0.0
    %2975 = vmatprep.subr.mxu0 0.0
    %2976 = vmatpush1.msra.mxu0 0.0
    %2977 = vmatprep.subr.mxu0 0.0
    %2978 = vmatpush1.msra.mxu0 0.0
    %2979 = vmatprep.subr.mxu0 0.0
    %2980 = vmatpush1.msra.mxu0 0.0
    %2981 = vmatprep.subr.mxu0 0.0
    %2982 = vmatpush1.msra.mxu0 0.0
    %2983 = vmatprep.subr.mxu0 0.0
    %2984 = vmatpush1.msra.mxu0 0.0
    %2985 = vmatprep.subr.mxu0 0.0
    %2986 = vmatpush1.msra.mxu0 0.0
    %2987 = vmatprep.subr.mxu0 0.0
    %2988 = vmatpush1.msra.mxu0 0.0
    %2989 = vmatprep.subr.mxu0 0.0
    %2990 = vmatpush1.msra.mxu0 0.0
    %2991 = vmatprep.subr.mxu0 0.0
    %2992 = vmatpush1.msra.mxu0 0.0
    %2993 = vmatprep.subr.mxu0 0.0
    %2994 = vmatpush1.msra.mxu0 0.0
    %2995 = vmatprep.subr.mxu0 0.0
    %2996 = vmatpush1.msra.mxu0 0.0
    %2997 = vmatprep.subr.mxu0 0.0
    %2998 = vmatpush1.msra.mxu0 0.0
    %2999 = vmatprep.subr.mxu0 0.0
    %3000 = vmatpush1.msra.mxu0 0.0
    %3001 = vmatprep.subr.mxu0 0.0
    %3002 = vmatpush1.msra.mxu0 0.0
    %3003 = vmatprep.subr.mxu0 0.0
    %3004 = vmatpush1.msra.mxu0 0.0
    %3005 = vmatprep.subr.mxu0 0.0
    %3006 = vmatpush1.msra.mxu0 0.0
    %3007 = vmatprep.subr.mxu0 0.0
    %3008 = vmatpush1.msra.mxu0 0.0
    %3009 = vmatprep.subr.mxu0 0.0
    %3010 = vmatpush1.msra.mxu0 0.0
    %3011 = vmatprep.subr.mxu0 0.0
    %3012 = vmatpush1.msra.mxu0 0.0
    %3013 = vmatprep.subr.mxu0 0.0
    %3014 = vmatpush1.msra.mxu0 0.0
    %3015 = vmatprep.subr.mxu0 0.0
    %3016 = vmatpush1.msra.mxu0 0.0
    %3017 = vmatprep.subr.mxu0 0.0
    %3018 = vmatpush1.msra.mxu0 0.0
    %3019 = vmatprep.subr.mxu0 0.0
    %3020 = vmatpush1.msra.mxu0 0.0
    %3021 = vmatprep.subr.mxu0 0.0
    %3022 = vmatpush1.msra.mxu0 0.0
    %3023 = vmatprep.subr.mxu0 0.0
    %3024 = vmatpush1.msra.mxu0 0.0
    %3025 = vmatprep.subr.mxu0 0.0
    %3026 = vmatpush1.msra.mxu0 0.0
    %3027 = vmatprep.subr.mxu0 0.0
    %3028 = vmatpush1.msra.mxu0 0.0
    %3029 = vmatprep.subr.mxu0 0.0
    %3030 = vmatpush1.msra.mxu0 0.0
    %3031 = vmatprep.subr.mxu0 0.0
    %3032 = vmatpush1.msra.mxu0 0.0
    %3033 = vmatprep.subr.mxu0 0.0
    %3034 = vmatpush1.msra.mxu0 0.0
    %3035 = vmatprep.mubr.f32.mxu0 0.0
    %3036 = vmatmul.mubr.f32.gmra.mrb[0].mxu0 %v2924
    %v3037 = vpop.f32.mrb[0].mxu0
    %v3038 = vadd.f32 0.0, %v3037
    %v3039 = vpop.f32.mrb[0].mxu0
    %3040 = vmatprep.mubr.f32.mxu0 0.0
    %3041 = vmatmul.mubr.f32.gmra.mrb[0].mxu0 %v2927
    %v3042 = vpop.f32.mrb[0].mxu0
    %v3043 = vadd.f32 0.0, %v3042
    %v3044 = vpop.f32.mrb[0].mxu0
    %3045 = vmatprep.mubr.f32.mxu0 0.0
    %3046 = vmatmul.mubr.f32.gmra.mrb[0].mxu0 %v2930
    %v3047 = vpop.f32.mrb[0].mxu0
    %v3048 = vadd.f32 0.0, %v3047
    %v3049 = vpop.f32.mrb[0].mxu0
    %3050 = vmatprep.mubr.f32.mxu0 0.0
    %3051 = vmatmul.mubr.f32.gmra.mrb[0].mxu0 %v2933
    %v3052 = vpop.f32.mrb[0].mxu0
    %v3053 = vadd.f32 0.0, %v3052
    %v3054 = vpop.f32.mrb[0].mxu0
    %3055 = vmatprep.mubr.f32.mxu0 0.0
    %3056 = vmatmul.mubr.f32.gmra.mrb[0].mxu0 %v2936
    %v3057 = vpop.f32.mrb[0].mxu0
    %v3058 = vadd.f32 0.0, %v3057
    %v3059 = vpop.f32.mrb[0].mxu0
    %3060 = vmatprep.mubr.f32.mxu0 0.0
    %3061 = vmatmul.mubr.f32.gmra.mrb[0].mxu0 %v2939
    %v3062 = vpop.f32.mrb[0].mxu0
    %v3063 = vadd.f32 0.0, %v3062
    %v3064 = vpop.f32.mrb[0].mxu0
    %3065 = vmatprep.mubr.f32.mxu0 0.0
    %3066 = vmatmul.mubr.f32.gmra.mrb[0].mxu0 %v2942
    %v3067 = vpop.f32.mrb[0].mxu0
    %v3068 = vadd.f32 0.0, %v3067
    %v3069 = vpop.f32.mrb[0].mxu0
    %3070 = vmatprep.mubr.f32.mxu0 0.0
    %3071 = vmatmul.mubr.f32.gmra.mrb[0].mxu0 %v2945
    %v3072 = vpop.f32.mrb[0].mxu0
    %v3073 = vadd.f32 0.0, %v3072
    %v3074 = vpop.f32.mrb[0].mxu0
    %3075 = vmatprep.mubr.f32.mxu0 0.0
    %3076 = vmatmul.mubr.f32.gmra.mrb[0].mxu0 %v2948
    %v3077 = vpop.f32.mrb[0].mxu0
    %v3078 = vadd.f32 0.0, %v3077
    %v3079 = vpop.f32.mrb[0].mxu0
    %3080 = vmatprep.mubr.f32.mxu0 0.0
    %3081 = vmatmul.mubr.f32.gmra.mrb[0].mxu0 %v2951
    %v3082 = vpop.f32.mrb[0].mxu0
    %v3083 = vadd.f32 0.0, %v3082
    %v3084 = vpop.f32.mrb[0].mxu0
    %3085 = vmatprep.mubr.f32.mxu0 0.0
    %3086 = vmatmul.mubr.f32.gmra.mrb[0].mxu0 %v2954
    %v3087 = vpop.f32.mrb[0].mxu0
    %v3088 = vadd.f32 0.0, %v3087
    %v3089 = vpop.f32.mrb[0].mxu0
    %3090 = vmatprep.mubr.f32.mxu0 0.0
    %3091 = vmatmul.mubr.f32.gmra.mrb[0].mxu0 %v2957
    %v3092 = vpop.f32.mrb[0].mxu0
    %v3093 = vadd.f32 0.0, %v3092
    %v3094 = vpop.f32.mrb[0].mxu0
    %3095 = vmatprep.mubr.f32.mxu0 0.0
    %3096 = vmatmul.mubr.f32.gmra.mrb[0].mxu0 %v2960
    %v3097 = vpop.f32.mrb[0].mxu0
    %v3098 = vadd.f32 0.0, %v3097
    %v3099 = vpop.f32.mrb[0].mxu0
    %3100 = vmatprep.mubr.f32.mxu0 0.0
    %3101 = vmatmul.mubr.f32.gmra.mrb[0].mxu0 %v2963
    %v3102 = vpop.f32.mrb[0].mxu0
    %v3103 = vadd.f32 0.0, %v3102
    %v3104 = vpop.f32.mrb[0].mxu0
    %3105 = vmatprep.mubr.f32.mxu0 0.0
    %3106 = vmatmul.mubr.f32.gmra.mrb[0].mxu0 %v2966
    %v3107 = vpop.f32.mrb[0].mxu0
    %v3108 = vadd.f32 0.0, %v3107
    %v3109 = vpop.f32.mrb[0].mxu0
    %3110 = vmatprep.mubr.f32.mxu0 0.0
    %3111 = vmatmul.mubr.f32.gmra.mrb[0].mxu0 %v2969
    %v3112 = vpop.f32.mrb[0].mxu0
    %v3113 = vadd.f32 0.0, %v3112
    %v3114 = vpop.f32.mrb[0].mxu0
    %3115 = vdwg.mxu0
    %v3117 = vsel %vm17, %v2889, 0
    %v3120 = vsel %vm17, %v2890, 0
    %v3123 = vsel %vm17, %v2891, 0
    %v3126 = vsel %vm17, %v2892, 0
    %v3129 = vsel %vm17, %v2893, 0
    %v3132 = vsel %vm17, %v2894, 0
    %v3135 = vsel %vm17, %v2895, 0
    %v3138 = vsel %vm17, %v2896, 0
    %v3141 = vsel %vm17, %v2897, 0
    %v3144 = vsel %vm17, %v2898, 0
    %v3147 = vsel %vm17, %v2899, 0
    %v3150 = vsel %vm17, %v2900, 0
    %v3153 = vsel %vm17, %v2901, 0
    %v3156 = vsel %vm17, %v2902, 0
    %v3159 = vsel %vm17, %v2903, 0
    %v3162 = vsel %vm17, %v2904, 0
    %3164 = vmatprep.subr.mxu0 0.0
    %3165 = vmatpush1.msra.mxu0 %v2843
    %3166 = vmatprep.subr.mxu0 0.0
    %3167 = vmatpush1.msra.mxu0 0.0
    %3168 = vmatprep.subr.mxu0 0.0
    %3169 = vmatpush1.msra.mxu0 0.0
    %3170 = vmatprep.subr.mxu0 0.0
    %3171 = vmatpush1.msra.mxu0 0.0
    %3172 = vmatprep.subr.mxu0 0.0
    %3173 = vmatpush1.msra.mxu0 0.0
    %3174 = vmatprep.subr.mxu0 0.0
    %3175 = vmatpush1.msra.mxu0 0.0
    %3176 = vmatprep.subr.mxu0 0.0
    %3177 = vmatpush1.msra.mxu0 0.0
    %3178 = vmatprep.subr.mxu0 0.0
    %3179 = vmatpush1.msra.mxu0 0.0
    %3180 = vmatprep.subr.mxu0 0.0
    %3181 = vmatpush1.msra.mxu0 0.0
    %3182 = vmatprep.subr.mxu0 0.0
    %3183 = vmatpush1.msra.mxu0 0.0
    %3184 = vmatprep.subr.mxu0 0.0
    %3185 = vmatpush1.msra.mxu0 0.0
    %3186 = vmatprep.subr.mxu0 0.0
    %3187 = vmatpush1.msra.mxu0 0.0
    %3188 = vmatprep.subr.mxu0 0.0
    %3189 = vmatpush1.msra.mxu0 0.0
    %3190 = vmatprep.subr.mxu0 0.0
    %3191 = vmatpush1.msra.mxu0 0.0
    %3192 = vmatprep.subr.mxu0 0.0
    %3193 = vmatpush1.msra.mxu0 0.0
    %3194 = vmatprep.subr.mxu0 0.0
    %3195 = vmatpush1.msra.mxu0 0.0
    %3196 = vmatprep.subr.mxu0 0.0
    %3197 = vmatpush1.msra.mxu0 0.0
    %3198 = vmatprep.subr.mxu0 0.0
    %3199 = vmatpush1.msra.mxu0 0.0
    %3200 = vmatprep.subr.mxu0 0.0
    %3201 = vmatpush1.msra.mxu0 0.0
    %3202 = vmatprep.subr.mxu0 0.0
    %3203 = vmatpush1.msra.mxu0 0.0
    %3204 = vmatprep.subr.mxu0 0.0
    %3205 = vmatpush1.msra.mxu0 0.0
    %3206 = vmatprep.subr.mxu0 0.0
    %3207 = vmatpush1.msra.mxu0 0.0
    %3208 = vmatprep.subr.mxu0 0.0
    %3209 = vmatpush1.msra.mxu0 0.0
    %3210 = vmatprep.subr.mxu0 0.0
    %3211 = vmatpush1.msra.mxu0 0.0
    %3212 = vmatprep.subr.mxu0 0.0
    %3213 = vmatpush1.msra.mxu0 0.0
    %3214 = vmatprep.subr.mxu0 0.0
    %3215 = vmatpush1.msra.mxu0 0.0
    %3216 = vmatprep.subr.mxu0 0.0
    %3217 = vmatpush1.msra.mxu0 0.0
    %3218 = vmatprep.subr.mxu0 0.0
    %3219 = vmatpush1.msra.mxu0 0.0
    %3220 = vmatprep.subr.mxu0 0.0
    %3221 = vmatpush1.msra.mxu0 0.0
    %3222 = vmatprep.subr.mxu0 0.0
    %3223 = vmatpush1.msra.mxu0 0.0
    %3224 = vmatprep.subr.mxu0 0.0
    %3225 = vmatpush1.msra.mxu0 0.0
    %3226 = vmatprep.subr.mxu0 0.0
    %3227 = vmatpush1.msra.mxu0 0.0
    %3228 = vmatprep.mubr.f32.mxu0 0.0
    %3229 = vmatmul.mubr.f32.gmra.mrb[0].mxu0 %v3117
    %v3230 = vpop.f32.mrb[0].mxu0
    %v3231 = vadd.f32 %v3038, %v3230
    %v3232 = vpop.f32.mrb[0].mxu0
    %3233 = vmatprep.mubr.f32.mxu0 0.0
    %3234 = vmatmul.mubr.f32.gmra.mrb[0].mxu0 %v3120
    %v3235 = vpop.f32.mrb[0].mxu0
    %v3236 = vadd.f32 %v3043, %v3235
    %v3237 = vpop.f32.mrb[0].mxu0
    %3238 = vmatprep.mubr.f32.mxu0 0.0
    %3239 = vmatmul.mubr.f32.gmra.mrb[0].mxu0 %v3123
    %v3240 = vpop.f32.mrb[0].mxu0
    %v3241 = vadd.f32 %v3048, %v3240
    %v3242 = vpop.f32.mrb[0].mxu0
    %3243 = vmatprep.mubr.f32.mxu0 0.0
    %3244 = vmatmul.mubr.f32.gmra.mrb[0].mxu0 %v3126
    %v3245 = vpop.f32.mrb[0].mxu0
    %v3246 = vadd.f32 %v3053, %v3245
    %v3247 = vpop.f32.mrb[0].mxu0
    %3248 = vmatprep.mubr.f32.mxu0 0.0
    %3249 = vmatmul.mubr.f32.gmra.mrb[0].mxu0 %v3129
    %v3250 = vpop.f32.mrb[0].mxu0
    %v3251 = vadd.f32 %v3058, %v3250
    %v3252 = vpop.f32.mrb[0].mxu0
    %3253 = vmatprep.mubr.f32.mxu0 0.0
    %3254 = vmatmul.mubr.f32.gmra.mrb[0].mxu0 %v3132
    %v3255 = vpop.f32.mrb[0].mxu0
    %v3256 = vadd.f32 %v3063, %v3255
    %v3257 = vpop.f32.mrb[0].mxu0
    %3258 = vmatprep.mubr.f32.mxu0 0.0
    %3259 = vmatmul.mubr.f32.gmra.mrb[0].mxu0 %v3135
    %v3260 = vpop.f32.mrb[0].mxu0
    %v3261 = vadd.f32 %v3068, %v3260
    %v3262 = vpop.f32.mrb[0].mxu0
    %3263 = vmatprep.mubr.f32.mxu0 0.0
    %3264 = vmatmul.mubr.f32.gmra.mrb[0].mxu0 %v3138
    %v3265 = vpop.f32.mrb[0].mxu0
    %v3266 = vadd.f32 %v3073, %v3265
    %v3267 = vpop.f32.mrb[0].mxu0
    %3268 = vmatprep.mubr.f32.mxu0 0.0
    %3269 = vmatmul.mubr.f32.gmra.mrb[0].mxu0 %v3141
    %v3270 = vpop.f32.mrb[0].mxu0
    %v3271 = vadd.f32 %v3078, %v3270
    %v3272 = vpop.f32.mrb[0].mxu0
    %3273 = vmatprep.mubr.f32.mxu0 0.0
    %3274 = vmatmul.mubr.f32.gmra.mrb[0].mxu0 %v3144
    %v3275 = vpop.f32.mrb[0].mxu0
    %v3276 = vadd.f32 %v3083, %v3275
    %v3277 = vpop.f32.mrb[0].mxu0
    %3278 = vmatprep.mubr.f32.mxu0 0.0
    %3279 = vmatmul.mubr.f32.gmra.mrb[0].mxu0 %v3147
    %v3280 = vpop.f32.mrb[0].mxu0
    %v3281 = vadd.f32 %v3088, %v3280
    %v3282 = vpop.f32.mrb[0].mxu0
    %3283 = vmatprep.mubr.f32.mxu0 0.0
    %3284 = vmatmul.mubr.f32.gmra.mrb[0].mxu0 %v3150
    %v3285 = vpop.f32.mrb[0].mxu0
    %v3286 = vadd.f32 %v3093, %v3285
    %v3287 = vpop.f32.mrb[0].mxu0
    %3288 = vmatprep.mubr.f32.mxu0 0.0
    %3289 = vmatmul.mubr.f32.gmra.mrb[0].mxu0 %v3153
    %v3290 = vpop.f32.mrb[0].mxu0
    %v3291 = vadd.f32 %v3098, %v3290
    %v3292 = vpop.f32.mrb[0].mxu0
    %3293 = vmatprep.mubr.f32.mxu0 0.0
    %3294 = vmatmul.mubr.f32.gmra.mrb[0].mxu0 %v3156
    %v3295 = vpop.f32.mrb[0].mxu0
    %v3296 = vadd.f32 %v3103, %v3295
    %v3297 = vpop.f32.mrb[0].mxu0
    %3298 = vmatprep.mubr.f32.mxu0 0.0
    %3299 = vmatmul.mubr.f32.gmra.mrb[0].mxu0 %v3159
    %v3300 = vpop.f32.mrb[0].mxu0
    %v3301 = vadd.f32 %v3108, %v3300
    %v3302 = vpop.f32.mrb[0].mxu0
    %3303 = vmatprep.mubr.f32.mxu0 0.0
    %3304 = vmatmul.mubr.f32.gmra.mrb[0].mxu0 %v3162
    %v3305 = vpop.f32.mrb[0].mxu0
    %v3306 = vadd.f32 %v3113, %v3305
    %v3307 = vpop.f32.mrb[0].mxu0
    %3308 = vdwg.mxu0
    %s3309 = sadd.s32 %s2869, 4294967273
    %s3310 = scalar_lea.vmem [#allocation2], %s3309
    %v3311 = vld [vmem:[%s3310] sm:$0xff]
    %v3312 = vld [vmem:[%s3310 + $0x8] sm:$0xff]
    %v3313 = vld [vmem:[%s3310 + $0x10] sm:$0xff]
    %v3314 = vld [vmem:[%s3310 + $0x18] sm:$0xff]
    %v3315 = vld [vmem:[%s3310 + $0x20] sm:$0xff]
    %v3316 = vld [vmem:[%s3310 + $0x28] sm:$0xff]
    %v3317 = vld [vmem:[%s3310 + $0x30] sm:$0xff]
    %v3318 = vld [vmem:[%s3310 + $0x38] sm:$0xff]
    %v3319 = vld [vmem:[%s3310 + $0x40] sm:$0xff]
    %v3320 = vld [vmem:[%s3310 + $0x48] sm:$0xff]
    %v3321 = vld [vmem:[%s3310 + $0x50] sm:$0xff]
    %v3322 = vld [vmem:[%s3310 + $0x58] sm:$0xff]
    %v3323 = vld [vmem:[%s3310 + $0x60] sm:$0xff]
    %v3324 = vld [vmem:[%s3310 + $0x68] sm:$0xff]
    %v3325 = vld [vmem:[%s3310 + $0x70] sm:$0xff]
    %v3326 = vld [vmem:[%s3310 + $0x78] sm:$0xff]
    %v3328 = vsel %vm17, %v3311, 0
    %v3331 = vsel %vm17, %v3312, 0
    %v3334 = vsel %vm17, %v3313, 0
    %v3337 = vsel %vm17, %v3314, 0
    %v3340 = vsel %vm17, %v3315, 0
    %v3343 = vsel %vm17, %v3316, 0
    %v3346 = vsel %vm17, %v3317, 0
    %v3349 = vsel %vm17, %v3318, 0
    %v3352 = vsel %vm17, %v3319, 0
    %v3355 = vsel %vm17, %v3320, 0
    %v3358 = vsel %vm17, %v3321, 0
    %v3361 = vsel %vm17, %v3322, 0
    %v3364 = vsel %vm17, %v3323, 0
    %v3367 = vsel %vm17, %v3324, 0
    %v3370 = vsel %vm17, %v3325, 0
    %v3373 = vsel %vm17, %v3326, 0
    %3375 = vmatprep.subr.mxu0 0.0
    %3376 = vmatpush1.msra.mxu0 %v2847
    %3377 = vmatprep.subr.mxu0 0.0
    %3378 = vmatpush1.msra.mxu0 0.0
    %3379 = vmatprep.subr.mxu0 0.0
    %3380 = vmatpush1.msra.mxu0 0.0
    %3381 = vmatprep.subr.mxu0 0.0
    %3382 = vmatpush1.msra.mxu0 0.0
    %3383 = vmatprep.subr.mxu0 0.0
    %3384 = vmatpush1.msra.mxu0 0.0
    %3385 = vmatprep.subr.mxu0 0.0
    %3386 = vmatpush1.msra.mxu0 0.0
    %3387 = vmatprep.subr.mxu0 0.0
    %3388 = vmatpush1.msra.mxu0 0.0
    %3389 = vmatprep.subr.mxu0 0.0
    %3390 = vmatpush1.msra.mxu0 0.0
    %3391 = vmatprep.subr.mxu0 0.0
    %3392 = vmatpush1.msra.mxu0 0.0
    %3393 = vmatprep.subr.mxu0 0.0
    %3394 = vmatpush1.msra.mxu0 0.0
    %3395 = vmatprep.subr.mxu0 0.0
    %3396 = vmatpush1.msra.mxu0 0.0
    %3397 = vmatprep.subr.mxu0 0.0
    %3398 = vmatpush1.msra.mxu0 0.0
    %3399 = vmatprep.subr.mxu0 0.0
    %3400 = vmatpush1.msra.mxu0 0.0
    %3401 = vmatprep.subr.mxu0 0.0
    %3402 = vmatpush1.msra.mxu0 0.0
    %3403 = vmatprep.subr.mxu0 0.0
    %3404 = vmatpush1.msra.mxu0 0.0
    %3405 = vmatprep.subr.mxu0 0.0
    %3406 = vmatpush1.msra.mxu0 0.0
    %3407 = vmatprep.subr.mxu0 0.0
    %3408 = vmatpush1.msra.mxu0 0.0
    %3409 = vmatprep.subr.mxu0 0.0
    %3410 = vmatpush1.msra.mxu0 0.0
    %3411 = vmatprep.subr.mxu0 0.0
    %3412 = vmatpush1.msra.mxu0 0.0
    %3413 = vmatprep.subr.mxu0 0.0
    %3414 = vmatpush1.msra.mxu0 0.0
    %3415 = vmatprep.subr.mxu0 0.0
    %3416 = vmatpush1.msra.mxu0 0.0
    %3417 = vmatprep.subr.mxu0 0.0
    %3418 = vmatpush1.msra.mxu0 0.0
    %3419 = vmatprep.subr.mxu0 0.0
    %3420 = vmatpush1.msra.mxu0 0.0
    %3421 = vmatprep.subr.mxu0 0.0
    %3422 = vmatpush1.msra.mxu0 0.0
    %3423 = vmatprep.subr.mxu0 0.0
    %3424 = vmatpush1.msra.mxu0 0.0
    %3425 = vmatprep.subr.mxu0 0.0
    %3426 = vmatpush1.msra.mxu0 0.0
    %3427 = vmatprep.subr.mxu0 0.0
    %3428 = vmatpush1.msra.mxu0 0.0
    %3429 = vmatprep.subr.mxu0 0.0
    %3430 = vmatpush1.msra.mxu0 0.0
    %3431 = vmatprep.subr.mxu0 0.0
    %3432 = vmatpush1.msra.mxu0 0.0
    %3433 = vmatprep.subr.mxu0 0.0
    %3434 = vmatpush1.msra.mxu0 0.0
    %3435 = vmatprep.subr.mxu0 0.0
    %3436 = vmatpush1.msra.mxu0 0.0
    %3437 = vmatprep.subr.mxu0 0.0
    %3438 = vmatpush1.msra.mxu0 0.0
    %3439 = vmatprep.mubr.f32.mxu0 0.0
    %3440 = vmatmul.mubr.f32.gmra.mrb[0].mxu0 %v3328
    %v3441 = vpop.f32.mrb[0].mxu0
    %v3442 = vadd.f32 0.0, %v3441
    %v3443 = vpop.f32.mrb[0].mxu0
    %3444 = vmatprep.mubr.f32.mxu0 0.0
    %3445 = vmatmul.mubr.f32.gmra.mrb[0].mxu0 %v3331
    %v3446 = vpop.f32.mrb[0].mxu0
    %v3447 = vadd.f32 0.0, %v3446
    %v3448 = vpop.f32.mrb[0].mxu0
    %3449 = vmatprep.mubr.f32.mxu0 0.0
    %3450 = vmatmul.mubr.f32.gmra.mrb[0].mxu0 %v3334
    %v3451 = vpop.f32.mrb[0].mxu0
    %v3452 = vadd.f32 0.0, %v3451
    %v3453 = vpop.f32.mrb[0].mxu0
    %3454 = vmatprep.mubr.f32.mxu0 0.0
    %3455 = vmatmul.mubr.f32.gmra.mrb[0].mxu0 %v3337
    %v3456 = vpop.f32.mrb[0].mxu0
    %v3457 = vadd.f32 0.0, %v3456
    %v3458 = vpop.f32.mrb[0].mxu0
    %3459 = vmatprep.mubr.f32.mxu0 0.0
    %3460 = vmatmul.mubr.f32.gmra.mrb[0].mxu0 %v3340
    %v3461 = vpop.f32.mrb[0].mxu0
    %v3462 = vadd.f32 0.0, %v3461
    %v3463 = vpop.f32.mrb[0].mxu0
    %3464 = vmatprep.mubr.f32.mxu0 0.0
    %3465 = vmatmul.mubr.f32.gmra.mrb[0].mxu0 %v3343
    %v3466 = vpop.f32.mrb[0].mxu0
    %v3467 = vadd.f32 0.0, %v3466
    %v3468 = vpop.f32.mrb[0].mxu0
    %3469 = vmatprep.mubr.f32.mxu0 0.0
    %3470 = vmatmul.mubr.f32.gmra.mrb[0].mxu0 %v3346
    %v3471 = vpop.f32.mrb[0].mxu0
    %v3472 = vadd.f32 0.0, %v3471
    %v3473 = vpop.f32.mrb[0].mxu0
    %3474 = vmatprep.mubr.f32.mxu0 0.0
    %3475 = vmatmul.mubr.f32.gmra.mrb[0].mxu0 %v3349
    %v3476 = vpop.f32.mrb[0].mxu0
    %v3477 = vadd.f32 0.0, %v3476
    %v3478 = vpop.f32.mrb[0].mxu0
    %3479 = vmatprep.mubr.f32.mxu0 0.0
    %3480 = vmatmul.mubr.f32.gmra.mrb[0].mxu0 %v3352
    %v3481 = vpop.f32.mrb[0].mxu0
    %v3482 = vadd.f32 0.0, %v3481
    %v3483 = vpop.f32.mrb[0].mxu0
    %3484 = vmatprep.mubr.f32.mxu0 0.0
    %3485 = vmatmul.mubr.f32.gmra.mrb[0].mxu0 %v3355
    %v3486 = vpop.f32.mrb[0].mxu0
    %v3487 = vadd.f32 0.0, %v3486
    %v3488 = vpop.f32.mrb[0].mxu0
    %3489 = vmatprep.mubr.f32.mxu0 0.0
    %3490 = vmatmul.mubr.f32.gmra.mrb[0].mxu0 %v3358
    %v3491 = vpop.f32.mrb[0].mxu0
    %v3492 = vadd.f32 0.0, %v3491
    %v3493 = vpop.f32.mrb[0].mxu0
    %3494 = vmatprep.mubr.f32.mxu0 0.0
    %3495 = vmatmul.mubr.f32.gmra.mrb[0].mxu0 %v3361
    %v3496 = vpop.f32.mrb[0].mxu0
    %v3497 = vadd.f32 0.0, %v3496
    %v3498 = vpop.f32.mrb[0].mxu0
    %3499 = vmatprep.mubr.f32.mxu0 0.0
    %3500 = vmatmul.mubr.f32.gmra.mrb[0].mxu0 %v3364
    %v3501 = vpop.f32.mrb[0].mxu0
    %v3502 = vadd.f32 0.0, %v3501
    %v3503 = vpop.f32.mrb[0].mxu0
    %3504 = vmatprep.mubr.f32.mxu0 0.0
    %3505 = vmatmul.mubr.f32.gmra.mrb[0].mxu0 %v3367
    %v3506 = vpop.f32.mrb[0].mxu0
    %v3507 = vadd.f32 0.0, %v3506
    %v3508 = vpop.f32.mrb[0].mxu0
    %3509 = vmatprep.mubr.f32.mxu0 0.0
    %3510 = vmatmul.mubr.f32.gmra.mrb[0].mxu0 %v3370
    %v3511 = vpop.f32.mrb[0].mxu0
    %v3512 = vadd.f32 0.0, %v3511
    %v3513 = vpop.f32.mrb[0].mxu0
    %3514 = vmatprep.mubr.f32.mxu0 0.0
    %3515 = vmatmul.mubr.f32.gmra.mrb[0].mxu0 %v3373
    %v3516 = vpop.f32.mrb[0].mxu0
    %v3517 = vadd.f32 0.0, %v3516
    %v3518 = vpop.f32.mrb[0].mxu0
    %3519 = vdwg.mxu0
    %v3520 = vadd.f32 %v3231, %v3442
    %v3521 = vadd.f32 %v3236, %v3447
    %v3522 = vadd.f32 %v3241, %v3452
    %v3523 = vadd.f32 %v3246, %v3457
    %v3524 = vadd.f32 %v3251, %v3462
    %v3525 = vadd.f32 %v3256, %v3467
    %v3526 = vadd.f32 %v3261, %v3472
    %v3527 = vadd.f32 %v3266, %v3477
    %v3528 = vadd.f32 %v3271, %v3482
    %v3529 = vadd.f32 %v3276, %v3487
    %v3530 = vadd.f32 %v3281, %v3492
    %v3531 = vadd.f32 %v3286, %v3497
    %v3532 = vadd.f32 %v3291, %v3502
    %v3533 = vadd.f32 %v3296, %v3507
    %v3534 = vadd.f32 %v3301, %v3512
    %v3535 = vadd.f32 %v3306, %v3517
    %s3536 = sadd.s32 %s2869, 4294967295
    %s3537 = scalar_lea.vmem [#allocation2], %s3536
    %v3538 = vld [vmem:[%s3537] sm:$0xff]
    %v3539 = vld [vmem:[%s3537 + $0x8] sm:$0xff]
    %v3540 = vld [vmem:[%s3537 + $0x10] sm:$0xff]
    %v3541 = vld [vmem:[%s3537 + $0x18] sm:$0xff]
    %v3542 = vld [vmem:[%s3537 + $0x20] sm:$0xff]
    %v3543 = vld [vmem:[%s3537 + $0x28] sm:$0xff]
    %v3544 = vld [vmem:[%s3537 + $0x30] sm:$0xff]
    %v3545 = vld [vmem:[%s3537 + $0x38] sm:$0xff]
    %v3546 = vld [vmem:[%s3537 + $0x40] sm:$0xff]
    %v3547 = vld [vmem:[%s3537 + $0x48] sm:$0xff]
    %v3548 = vld [vmem:[%s3537 + $0x50] sm:$0xff]
    %v3549 = vld [vmem:[%s3537 + $0x58] sm:$0xff]
    %v3550 = vld [vmem:[%s3537 + $0x60] sm:$0xff]
    %v3551 = vld [vmem:[%s3537 + $0x68] sm:$0xff]
    %v3552 = vld [vmem:[%s3537 + $0x70] sm:$0xff]
    %v3553 = vld [vmem:[%s3537 + $0x78] sm:$0xff]
    %v3555 = vsel %vm17, %v3538, 0
    %v3558 = vsel %vm17, %v3539, 0
    %v3561 = vsel %vm17, %v3540, 0
    %v3564 = vsel %vm17, %v3541, 0
    %v3567 = vsel %vm17, %v3542, 0
    %v3570 = vsel %vm17, %v3543, 0
    %v3573 = vsel %vm17, %v3544, 0
    %v3576 = vsel %vm17, %v3545, 0
    %v3579 = vsel %vm17, %v3546, 0
    %v3582 = vsel %vm17, %v3547, 0
    %v3585 = vsel %vm17, %v3548, 0
    %v3588 = vsel %vm17, %v3549, 0
    %v3591 = vsel %vm17, %v3550, 0
    %v3594 = vsel %vm17, %v3551, 0
    %v3597 = vsel %vm17, %v3552, 0
    %v3600 = vsel %vm17, %v3553, 0
    %3602 = vmatprep.subr.mxu0 0.0
    %3603 = vmatpush1.msra.mxu0 %v2849
    %3604 = vmatprep.subr.mxu0 0.0
    %3605 = vmatpush1.msra.mxu0 0.0
    %3606 = vmatprep.subr.mxu0 0.0
    %3607 = vmatpush1.msra.mxu0 0.0
    %3608 = vmatprep.subr.mxu0 0.0
    %3609 = vmatpush1.msra.mxu0 0.0
    %3610 = vmatprep.subr.mxu0 0.0
    %3611 = vmatpush1.msra.mxu0 0.0
    %3612 = vmatprep.subr.mxu0 0.0
    %3613 = vmatpush1.msra.mxu0 0.0
    %3614 = vmatprep.subr.mxu0 0.0
    %3615 = vmatpush1.msra.mxu0 0.0
    %3616 = vmatprep.subr.mxu0 0.0
    %3617 = vmatpush1.msra.mxu0 0.0
    %3618 = vmatprep.subr.mxu0 0.0
    %3619 = vmatpush1.msra.mxu0 0.0
    %3620 = vmatprep.subr.mxu0 0.0
    %3621 = vmatpush1.msra.mxu0 0.0
    %3622 = vmatprep.subr.mxu0 0.0
    %3623 = vmatpush1.msra.mxu0 0.0
    %3624 = vmatprep.subr.mxu0 0.0
    %3625 = vmatpush1.msra.mxu0 0.0
    %3626 = vmatprep.subr.mxu0 0.0
    %3627 = vmatpush1.msra.mxu0 0.0
    %3628 = vmatprep.subr.mxu0 0.0
    %3629 = vmatpush1.msra.mxu0 0.0
    %3630 = vmatprep.subr.mxu0 0.0
    %3631 = vmatpush1.msra.mxu0 0.0
    %3632 = vmatprep.subr.mxu0 0.0
    %3633 = vmatpush1.msra.mxu0 0.0
    %3634 = vmatprep.subr.mxu0 0.0
    %3635 = vmatpush1.msra.mxu0 0.0
    %3636 = vmatprep.subr.mxu0 0.0
    %3637 = vmatpush1.msra.mxu0 0.0
    %3638 = vmatprep.subr.mxu0 0.0
    %3639 = vmatpush1.msra.mxu0 0.0
    %3640 = vmatprep.subr.mxu0 0.0
    %3641 = vmatpush1.msra.mxu0 0.0
    %3642 = vmatprep.subr.mxu0 0.0
    %3643 = vmatpush1.msra.mxu0 0.0
    %3644 = vmatprep.subr.mxu0 0.0
    %3645 = vmatpush1.msra.mxu0 0.0
    %3646 = vmatprep.subr.mxu0 0.0
    %3647 = vmatpush1.msra.mxu0 0.0
    %3648 = vmatprep.subr.mxu0 0.0
    %3649 = vmatpush1.msra.mxu0 0.0
    %3650 = vmatprep.subr.mxu0 0.0
    %3651 = vmatpush1.msra.mxu0 0.0
    %3652 = vmatprep.subr.mxu0 0.0
    %3653 = vmatpush1.msra.mxu0 0.0
    %3654 = vmatprep.subr.mxu0 0.0
    %3655 = vmatpush1.msra.mxu0 0.0
    %3656 = vmatprep.subr.mxu0 0.0
    %3657 = vmatpush1.msra.mxu0 0.0
    %3658 = vmatprep.subr.mxu0 0.0
    %3659 = vmatpush1.msra.mxu0 0.0
    %3660 = vmatprep.subr.mxu0 0.0
    %3661 = vmatpush1.msra.mxu0 0.0
    %3662 = vmatprep.subr.mxu0 0.0
    %3663 = vmatpush1.msra.mxu0 0.0
    %3664 = vmatprep.subr.mxu0 0.0
    %3665 = vmatpush1.msra.mxu0 0.0
    %3666 = vmatprep.mubr.f32.mxu0 0.0
    %3667 = vmatmul.mubr.f32.gmra.mrb[0].mxu0 %v3555
    %v3668 = vpop.f32.mrb[0].mxu0
    %v3669 = vadd.f32 0.0, %v3668
    %v3670 = vpop.f32.mrb[0].mxu0
    %3671 = vmatprep.mubr.f32.mxu0 0.0
    %3672 = vmatmul.mubr.f32.gmra.mrb[0].mxu0 %v3558
    %v3673 = vpop.f32.mrb[0].mxu0
    %v3674 = vadd.f32 0.0, %v3673
    %v3675 = vpop.f32.mrb[0].mxu0
    %3676 = vmatprep.mubr.f32.mxu0 0.0
    %3677 = vmatmul.mubr.f32.gmra.mrb[0].mxu0 %v3561
    %v3678 = vpop.f32.mrb[0].mxu0
    %v3679 = vadd.f32 0.0, %v3678
    %v3680 = vpop.f32.mrb[0].mxu0
    %3681 = vmatprep.mubr.f32.mxu0 0.0
    %3682 = vmatmul.mubr.f32.gmra.mrb[0].mxu0 %v3564
    %v3683 = vpop.f32.mrb[0].mxu0
    %v3684 = vadd.f32 0.0, %v3683
    %v3685 = vpop.f32.mrb[0].mxu0
    %3686 = vmatprep.mubr.f32.mxu0 0.0
    %3687 = vmatmul.mubr.f32.gmra.mrb[0].mxu0 %v3567
    %v3688 = vpop.f32.mrb[0].mxu0
    %v3689 = vadd.f32 0.0, %v3688
    %v3690 = vpop.f32.mrb[0].mxu0
    %3691 = vmatprep.mubr.f32.mxu0 0.0
    %3692 = vmatmul.mubr.f32.gmra.mrb[0].mxu0 %v3570
    %v3693 = vpop.f32.mrb[0].mxu0
    %v3694 = vadd.f32 0.0, %v3693
    %v3695 = vpop.f32.mrb[0].mxu0
    %3696 = vmatprep.mubr.f32.mxu0 0.0
    %3697 = vmatmul.mubr.f32.gmra.mrb[0].mxu0 %v3573
    %v3698 = vpop.f32.mrb[0].mxu0
    %v3699 = vadd.f32 0.0, %v3698
    %v3700 = vpop.f32.mrb[0].mxu0
    %3701 = vmatprep.mubr.f32.mxu0 0.0
    %3702 = vmatmul.mubr.f32.gmra.mrb[0].mxu0 %v3576
    %v3703 = vpop.f32.mrb[0].mxu0
    %v3704 = vadd.f32 0.0, %v3703
    %v3705 = vpop.f32.mrb[0].mxu0
    %3706 = vmatprep.mubr.f32.mxu0 0.0
    %3707 = vmatmul.mubr.f32.gmra.mrb[0].mxu0 %v3579
    %v3708 = vpop.f32.mrb[0].mxu0
    %v3709 = vadd.f32 0.0, %v3708
    %v3710 = vpop.f32.mrb[0].mxu0
    %3711 = vmatprep.mubr.f32.mxu0 0.0
    %3712 = vmatmul.mubr.f32.gmra.mrb[0].mxu0 %v3582
    %v3713 = vpop.f32.mrb[0].mxu0
    %v3714 = vadd.f32 0.0, %v3713
    %v3715 = vpop.f32.mrb[0].mxu0
    %3716 = vmatprep.mubr.f32.mxu0 0.0
    %3717 = vmatmul.mubr.f32.gmra.mrb[0].mxu0 %v3585
    %v3718 = vpop.f32.mrb[0].mxu0
    %v3719 = vadd.f32 0.0, %v3718
    %v3720 = vpop.f32.mrb[0].mxu0
    %3721 = vmatprep.mubr.f32.mxu0 0.0
    %3722 = vmatmul.mubr.f32.gmra.mrb[0].mxu0 %v3588
    %v3723 = vpop.f32.mrb[0].mxu0
    %v3724 = vadd.f32 0.0, %v3723
    %v3725 = vpop.f32.mrb[0].mxu0
    %3726 = vmatprep.mubr.f32.mxu0 0.0
    %3727 = vmatmul.mubr.f32.gmra.mrb[0].mxu0 %v3591
    %v3728 = vpop.f32.mrb[0].mxu0
    %v3729 = vadd.f32 0.0, %v3728
    %v3730 = vpop.f32.mrb[0].mxu0
    %3731 = vmatprep.mubr.f32.mxu0 0.0
    %3732 = vmatmul.mubr.f32.gmra.mrb[0].mxu0 %v3594
    %v3733 = vpop.f32.mrb[0].mxu0
    %v3734 = vadd.f32 0.0, %v3733
    %v3735 = vpop.f32.mrb[0].mxu0
    %3736 = vmatprep.mubr.f32.mxu0 0.0
    %3737 = vmatmul.mubr.f32.gmra.mrb[0].mxu0 %v3597
    %v3738 = vpop.f32.mrb[0].mxu0
    %v3739 = vadd.f32 0.0, %v3738
    %v3740 = vpop.f32.mrb[0].mxu0
    %3741 = vmatprep.mubr.f32.mxu0 0.0
    %3742 = vmatmul.mubr.f32.gmra.mrb[0].mxu0 %v3600
    %v3743 = vpop.f32.mrb[0].mxu0
    %v3744 = vadd.f32 0.0, %v3743
    %v3745 = vpop.f32.mrb[0].mxu0
    %3746 = vdwg.mxu0
    %v3747 = vadd.f32 %v3520, %v3669
    %v3748 = vadd.f32 %v3521, %v3674
    %v3749 = vadd.f32 %v3522, %v3679
    %v3750 = vadd.f32 %v3523, %v3684
    %v3751 = vadd.f32 %v3524, %v3689
    %v3752 = vadd.f32 %v3525, %v3694
    %v3753 = vadd.f32 %v3526, %v3699
    %v3754 = vadd.f32 %v3527, %v3704
    %v3755 = vadd.f32 %v3528, %v3709
    %v3756 = vadd.f32 %v3529, %v3714
    %v3757 = vadd.f32 %v3530, %v3719
    %v3758 = vadd.f32 %v3531, %v3724
    %v3759 = vadd.f32 %v3532, %v3729
    %v3760 = vadd.f32 %v3533, %v3734
    %v3761 = vadd.f32 %v3534, %v3739
    %v3762 = vadd.f32 %v3535, %v3744
    %s3763 = scalar_lea.vmem [#allocation2], %s2869
    %v3764 = vld [vmem:[%s3763] sm:$0xff]
    %v3765 = vld [vmem:[%s3763 + $0x8] sm:$0xff]
    %v3766 = vld [vmem:[%s3763 + $0x10] sm:$0xff]
    %v3767 = vld [vmem:[%s3763 + $0x18] sm:$0xff]
    %v3768 = vld [vmem:[%s3763 + $0x20] sm:$0xff]
    %v3769 = vld [vmem:[%s3763 + $0x28] sm:$0xff]
    %v3770 = vld [vmem:[%s3763 + $0x30] sm:$0xff]
    %v3771 = vld [vmem:[%s3763 + $0x38] sm:$0xff]
    %v3772 = vld [vmem:[%s3763 + $0x40] sm:$0xff]
    %v3773 = vld [vmem:[%s3763 + $0x48] sm:$0xff]
    %v3774 = vld [vmem:[%s3763 + $0x50] sm:$0xff]
    %v3775 = vld [vmem:[%s3763 + $0x58] sm:$0xff]
    %v3776 = vld [vmem:[%s3763 + $0x60] sm:$0xff]
    %v3777 = vld [vmem:[%s3763 + $0x68] sm:$0xff]
    %v3778 = vld [vmem:[%s3763 + $0x70] sm:$0xff]
    %v3779 = vld [vmem:[%s3763 + $0x78] sm:$0xff]
    %v3781 = vsel %vm17, %v3764, 0
    %v3784 = vsel %vm17, %v3765, 0
    %v3787 = vsel %vm17, %v3766, 0
    %v3790 = vsel %vm17, %v3767, 0
    %v3793 = vsel %vm17, %v3768, 0
    %v3796 = vsel %vm17, %v3769, 0
    %v3799 = vsel %vm17, %v3770, 0
    %v3802 = vsel %vm17, %v3771, 0
    %v3805 = vsel %vm17, %v3772, 0
    %v3808 = vsel %vm17, %v3773, 0
    %v3811 = vsel %vm17, %v3774, 0
    %v3814 = vsel %vm17, %v3775, 0
    %v3817 = vsel %vm17, %v3776, 0
    %v3820 = vsel %vm17, %v3777, 0
    %v3823 = vsel %vm17, %v3778, 0
    %v3826 = vsel %vm17, %v3779, 0
    %3828 = vmatprep.subr.mxu0 0.0
    %3829 = vmatpush1.msra.mxu0 %v2851
    %3830 = vmatprep.subr.mxu0 0.0
    %3831 = vmatpush1.msra.mxu0 0.0
    %3832 = vmatprep.subr.mxu0 0.0
    %3833 = vmatpush1.msra.mxu0 0.0
    %3834 = vmatprep.subr.mxu0 0.0
    %3835 = vmatpush1.msra.mxu0 0.0
    %3836 = vmatprep.subr.mxu0 0.0
    %3837 = vmatpush1.msra.mxu0 0.0
    %3838 = vmatprep.subr.mxu0 0.0
    %3839 = vmatpush1.msra.mxu0 0.0
    %3840 = vmatprep.subr.mxu0 0.0
    %3841 = vmatpush1.msra.mxu0 0.0
    %3842 = vmatprep.subr.mxu0 0.0
    %3843 = vmatpush1.msra.mxu0 0.0
    %3844 = vmatprep.subr.mxu0 0.0
    %3845 = vmatpush1.msra.mxu0 0.0
    %3846 = vmatprep.subr.mxu0 0.0
    %3847 = vmatpush1.msra.mxu0 0.0
    %3848 = vmatprep.subr.mxu0 0.0
    %3849 = vmatpush1.msra.mxu0 0.0
    %3850 = vmatprep.subr.mxu0 0.0
    %3851 = vmatpush1.msra.mxu0 0.0
    %3852 = vmatprep.subr.mxu0 0.0
    %3853 = vmatpush1.msra.mxu0 0.0
    %3854 = vmatprep.subr.mxu0 0.0
    %3855 = vmatpush1.msra.mxu0 0.0
    %3856 = vmatprep.subr.mxu0 0.0
    %3857 = vmatpush1.msra.mxu0 0.0
    %3858 = vmatprep.subr.mxu0 0.0
    %3859 = vmatpush1.msra.mxu0 0.0
    %3860 = vmatprep.subr.mxu0 0.0
    %3861 = vmatpush1.msra.mxu0 0.0
    %3862 = vmatprep.subr.mxu0 0.0
    %3863 = vmatpush1.msra.mxu0 0.0
    %3864 = vmatprep.subr.mxu0 0.0
    %3865 = vmatpush1.msra.mxu0 0.0
    %3866 = vmatprep.subr.mxu0 0.0
    %3867 = vmatpush1.msra.mxu0 0.0
    %3868 = vmatprep.subr.mxu0 0.0
    %3869 = vmatpush1.msra.mxu0 0.0
    %3870 = vmatprep.subr.mxu0 0.0
    %3871 = vmatpush1.msra.mxu0 0.0
    %3872 = vmatprep.subr.mxu0 0.0
    %3873 = vmatpush1.msra.mxu0 0.0
    %3874 = vmatprep.subr.mxu0 0.0
    %3875 = vmatpush1.msra.mxu0 0.0
    %3876 = vmatprep.subr.mxu0 0.0
    %3877 = vmatpush1.msra.mxu0 0.0
    %3878 = vmatprep.subr.mxu0 0.0
    %3879 = vmatpush1.msra.mxu0 0.0
    %3880 = vmatprep.subr.mxu0 0.0
    %3881 = vmatpush1.msra.mxu0 0.0
    %3882 = vmatprep.subr.mxu0 0.0
    %3883 = vmatpush1.msra.mxu0 0.0
    %3884 = vmatprep.subr.mxu0 0.0
    %3885 = vmatpush1.msra.mxu0 0.0
    %3886 = vmatprep.subr.mxu0 0.0
    %3887 = vmatpush1.msra.mxu0 0.0
    %3888 = vmatprep.subr.mxu0 0.0
    %3889 = vmatpush1.msra.mxu0 0.0
    %3890 = vmatprep.subr.mxu0 0.0
    %3891 = vmatpush1.msra.mxu0 0.0
    %3892 = vmatprep.mubr.f32.mxu0 0.0
    %3893 = vmatmul.mubr.f32.gmra.mrb[0].mxu0 %v3781
    %v3894 = vpop.f32.mrb[0].mxu0
    %v3895 = vadd.f32 0.0, %v3894
    %v3896 = vpop.f32.mrb[0].mxu0
    %3897 = vmatprep.mubr.f32.mxu0 0.0
    %3898 = vmatmul.mubr.f32.gmra.mrb[0].mxu0 %v3784
    %v3899 = vpop.f32.mrb[0].mxu0
    %v3900 = vadd.f32 0.0, %v3899
    %v3901 = vpop.f32.mrb[0].mxu0
    %3902 = vmatprep.mubr.f32.mxu0 0.0
    %3903 = vmatmul.mubr.f32.gmra.mrb[0].mxu0 %v3787
    %v3904 = vpop.f32.mrb[0].mxu0
    %v3905 = vadd.f32 0.0, %v3904
    %v3906 = vpop.f32.mrb[0].mxu0
    %3907 = vmatprep.mubr.f32.mxu0 0.0
    %3908 = vmatmul.mubr.f32.gmra.mrb[0].mxu0 %v3790
    %v3909 = vpop.f32.mrb[0].mxu0
    %v3910 = vadd.f32 0.0, %v3909
    %v3911 = vpop.f32.mrb[0].mxu0
    %3912 = vmatprep.mubr.f32.mxu0 0.0
    %3913 = vmatmul.mubr.f32.gmra.mrb[0].mxu0 %v3793
    %v3914 = vpop.f32.mrb[0].mxu0
    %v3915 = vadd.f32 0.0, %v3914
    %v3916 = vpop.f32.mrb[0].mxu0
    %3917 = vmatprep.mubr.f32.mxu0 0.0
    %3918 = vmatmul.mubr.f32.gmra.mrb[0].mxu0 %v3796
    %v3919 = vpop.f32.mrb[0].mxu0
    %v3920 = vadd.f32 0.0, %v3919
    %v3921 = vpop.f32.mrb[0].mxu0
    %3922 = vmatprep.mubr.f32.mxu0 0.0
    %3923 = vmatmul.mubr.f32.gmra.mrb[0].mxu0 %v3799
    %v3924 = vpop.f32.mrb[0].mxu0
    %v3925 = vadd.f32 0.0, %v3924
    %v3926 = vpop.f32.mrb[0].mxu0
    %3927 = vmatprep.mubr.f32.mxu0 0.0
    %3928 = vmatmul.mubr.f32.gmra.mrb[0].mxu0 %v3802
    %v3929 = vpop.f32.mrb[0].mxu0
    %v3930 = vadd.f32 0.0, %v3929
    %v3931 = vpop.f32.mrb[0].mxu0
    %3932 = vmatprep.mubr.f32.mxu0 0.0
    %3933 = vmatmul.mubr.f32.gmra.mrb[0].mxu0 %v3805
    %v3934 = vpop.f32.mrb[0].mxu0
    %v3935 = vadd.f32 0.0, %v3934
    %v3936 = vpop.f32.mrb[0].mxu0
    %3937 = vmatprep.mubr.f32.mxu0 0.0
    %3938 = vmatmul.mubr.f32.gmra.mrb[0].mxu0 %v3808
    %v3939 = vpop.f32.mrb[0].mxu0
    %v3940 = vadd.f32 0.0, %v3939
    %v3941 = vpop.f32.mrb[0].mxu0
    %3942 = vmatprep.mubr.f32.mxu0 0.0
    %3943 = vmatmul.mubr.f32.gmra.mrb[0].mxu0 %v3811
    %v3944 = vpop.f32.mrb[0].mxu0
    %v3945 = vadd.f32 0.0, %v3944
    %v3946 = vpop.f32.mrb[0].mxu0
    %3947 = vmatprep.mubr.f32.mxu0 0.0
    %3948 = vmatmul.mubr.f32.gmra.mrb[0].mxu0 %v3814
    %v3949 = vpop.f32.mrb[0].mxu0
    %v3950 = vadd.f32 0.0, %v3949
    %v3951 = vpop.f32.mrb[0].mxu0
    %3952 = vmatprep.mubr.f32.mxu0 0.0
    %3953 = vmatmul.mubr.f32.gmra.mrb[0].mxu0 %v3817
    %v3954 = vpop.f32.mrb[0].mxu0
    %v3955 = vadd.f32 0.0, %v3954
    %v3956 = vpop.f32.mrb[0].mxu0
    %3957 = vmatprep.mubr.f32.mxu0 0.0
    %3958 = vmatmul.mubr.f32.gmra.mrb[0].mxu0 %v3820
    %v3959 = vpop.f32.mrb[0].mxu0
    %v3960 = vadd.f32 0.0, %v3959
    %v3961 = vpop.f32.mrb[0].mxu0
    %3962 = vmatprep.mubr.f32.mxu0 0.0
    %3963 = vmatmul.mubr.f32.gmra.mrb[0].mxu0 %v3823
    %v3964 = vpop.f32.mrb[0].mxu0
    %v3965 = vadd.f32 0.0, %v3964
    %v3966 = vpop.f32.mrb[0].mxu0
    %3967 = vmatprep.mubr.f32.mxu0 0.0
    %3968 = vmatmul.mubr.f32.gmra.mrb[0].mxu0 %v3826
    %v3969 = vpop.f32.mrb[0].mxu0
    %v3970 = vadd.f32 0.0, %v3969
    %v3971 = vpop.f32.mrb[0].mxu0
    %3972 = vdwg.mxu0
    %v3973 = vadd.f32 %v3747, %v3895
    %v3974 = vadd.f32 %v3748, %v3900
    %v3975 = vadd.f32 %v3749, %v3905
    %v3976 = vadd.f32 %v3750, %v3910
    %v3977 = vadd.f32 %v3751, %v3915
    %v3978 = vadd.f32 %v3752, %v3920
    %v3979 = vadd.f32 %v3753, %v3925
    %v3980 = vadd.f32 %v3754, %v3930
    %v3981 = vadd.f32 %v3755, %v3935
    %v3982 = vadd.f32 %v3756, %v3940
    %v3983 = vadd.f32 %v3757, %v3945
    %v3984 = vadd.f32 %v3758, %v3950
    %v3985 = vadd.f32 %v3759, %v3955
    %v3986 = vadd.f32 %v3760, %v3960
    %v3987 = vadd.f32 %v3761, %v3965
    %v3988 = vadd.f32 %v3762, %v3970
    %s3989 = sadd.s32 %s2869, 1
    %s3990 = scalar_lea.vmem [#allocation2], %s3989
    %v3991 = vld [vmem:[%s3990] sm:$0xff]
    %v3992 = vld [vmem:[%s3990 + $0x8] sm:$0xff]
    %v3993 = vld [vmem:[%s3990 + $0x10] sm:$0xff]
    %v3994 = vld [vmem:[%s3990 + $0x18] sm:$0xff]
    %v3995 = vld [vmem:[%s3990 + $0x20] sm:$0xff]
    %v3996 = vld [vmem:[%s3990 + $0x28] sm:$0xff]
    %v3997 = vld [vmem:[%s3990 + $0x30] sm:$0xff]
    %v3998 = vld [vmem:[%s3990 + $0x38] sm:$0xff]
    %v3999 = vld [vmem:[%s3990 + $0x40] sm:$0xff]
    %v4000 = vld [vmem:[%s3990 + $0x48] sm:$0xff]
    %v4001 = vld [vmem:[%s3990 + $0x50] sm:$0xff]
    %v4002 = vld [vmem:[%s3990 + $0x58] sm:$0xff]
    %v4003 = vld [vmem:[%s3990 + $0x60] sm:$0xff]
    %v4004 = vld [vmem:[%s3990 + $0x68] sm:$0xff]
    %v4005 = vld [vmem:[%s3990 + $0x70] sm:$0xff]
    %v4006 = vld [vmem:[%s3990 + $0x78] sm:$0xff]
    %v4008 = vsel %vm17, %v3991, 0
    %v4011 = vsel %vm17, %v3992, 0
    %v4014 = vsel %vm17, %v3993, 0
    %v4017 = vsel %vm17, %v3994, 0
    %v4020 = vsel %vm17, %v3995, 0
    %v4023 = vsel %vm17, %v3996, 0
    %v4026 = vsel %vm17, %v3997, 0
    %v4029 = vsel %vm17, %v3998, 0
    %v4032 = vsel %vm17, %v3999, 0
    %v4035 = vsel %vm17, %v4000, 0
    %v4038 = vsel %vm17, %v4001, 0
    %v4041 = vsel %vm17, %v4002, 0
    %v4044 = vsel %vm17, %v4003, 0
    %v4047 = vsel %vm17, %v4004, 0
    %v4050 = vsel %vm17, %v4005, 0
    %v4053 = vsel %vm17, %v4006, 0
    %4055 = vmatprep.subr.mxu0 0.0
    %4056 = vmatpush1.msra.mxu0 %v2853
    %4057 = vmatprep.subr.mxu0 0.0
    %4058 = vmatpush1.msra.mxu0 0.0
    %4059 = vmatprep.subr.mxu0 0.0
    %4060 = vmatpush1.msra.mxu0 0.0
    %4061 = vmatprep.subr.mxu0 0.0
    %4062 = vmatpush1.msra.mxu0 0.0
    %4063 = vmatprep.subr.mxu0 0.0
    %4064 = vmatpush1.msra.mxu0 0.0
    %4065 = vmatprep.subr.mxu0 0.0
    %4066 = vmatpush1.msra.mxu0 0.0
    %4067 = vmatprep.subr.mxu0 0.0
    %4068 = vmatpush1.msra.mxu0 0.0
    %4069 = vmatprep.subr.mxu0 0.0
    %4070 = vmatpush1.msra.mxu0 0.0
    %4071 = vmatprep.subr.mxu0 0.0
    %4072 = vmatpush1.msra.mxu0 0.0
    %4073 = vmatprep.subr.mxu0 0.0
    %4074 = vmatpush1.msra.mxu0 0.0
    %4075 = vmatprep.subr.mxu0 0.0
    %4076 = vmatpush1.msra.mxu0 0.0
    %4077 = vmatprep.subr.mxu0 0.0
    %4078 = vmatpush1.msra.mxu0 0.0
    %4079 = vmatprep.subr.mxu0 0.0
    %4080 = vmatpush1.msra.mxu0 0.0
    %4081 = vmatprep.subr.mxu0 0.0
    %4082 = vmatpush1.msra.mxu0 0.0
    %4083 = vmatprep.subr.mxu0 0.0
    %4084 = vmatpush1.msra.mxu0 0.0
    %4085 = vmatprep.subr.mxu0 0.0
    %4086 = vmatpush1.msra.mxu0 0.0
    %4087 = vmatprep.subr.mxu0 0.0
    %4088 = vmatpush1.msra.mxu0 0.0
    %4089 = vmatprep.subr.mxu0 0.0
    %4090 = vmatpush1.msra.mxu0 0.0
    %4091 = vmatprep.subr.mxu0 0.0
    %4092 = vmatpush1.msra.mxu0 0.0
    %4093 = vmatprep.subr.mxu0 0.0
    %4094 = vmatpush1.msra.mxu0 0.0
    %4095 = vmatprep.subr.mxu0 0.0
    %4096 = vmatpush1.msra.mxu0 0.0
    %4097 = vmatprep.subr.mxu0 0.0
    %4098 = vmatpush1.msra.mxu0 0.0
    %4099 = vmatprep.subr.mxu0 0.0
    %4100 = vmatpush1.msra.mxu0 0.0
    %4101 = vmatprep.subr.mxu0 0.0
    %4102 = vmatpush1.msra.mxu0 0.0
    %4103 = vmatprep.subr.mxu0 0.0
    %4104 = vmatpush1.msra.mxu0 0.0
    %4105 = vmatprep.subr.mxu0 0.0
    %4106 = vmatpush1.msra.mxu0 0.0
    %4107 = vmatprep.subr.mxu0 0.0
    %4108 = vmatpush1.msra.mxu0 0.0
    %4109 = vmatprep.subr.mxu0 0.0
    %4110 = vmatpush1.msra.mxu0 0.0
    %4111 = vmatprep.subr.mxu0 0.0
    %4112 = vmatpush1.msra.mxu0 0.0
    %4113 = vmatprep.subr.mxu0 0.0
    %4114 = vmatpush1.msra.mxu0 0.0
    %4115 = vmatprep.subr.mxu0 0.0
    %4116 = vmatpush1.msra.mxu0 0.0
    %4117 = vmatprep.subr.mxu0 0.0
    %4118 = vmatpush1.msra.mxu0 0.0
    %4119 = vmatprep.mubr.f32.mxu0 0.0
    %4120 = vmatmul.mubr.f32.gmra.mrb[0].mxu0 %v4008
    %v4121 = vpop.f32.mrb[0].mxu0
    %v4122 = vadd.f32 0.0, %v4121
    %v4123 = vpop.f32.mrb[0].mxu0
    %4124 = vmatprep.mubr.f32.mxu0 0.0
    %4125 = vmatmul.mubr.f32.gmra.mrb[0].mxu0 %v4011
    %v4126 = vpop.f32.mrb[0].mxu0
    %v4127 = vadd.f32 0.0, %v4126
    %v4128 = vpop.f32.mrb[0].mxu0
    %4129 = vmatprep.mubr.f32.mxu0 0.0
    %4130 = vmatmul.mubr.f32.gmra.mrb[0].mxu0 %v4014
    %v4131 = vpop.f32.mrb[0].mxu0
    %v4132 = vadd.f32 0.0, %v4131
    %v4133 = vpop.f32.mrb[0].mxu0
    %4134 = vmatprep.mubr.f32.mxu0 0.0
    %4135 = vmatmul.mubr.f32.gmra.mrb[0].mxu0 %v4017
    %v4136 = vpop.f32.mrb[0].mxu0
    %v4137 = vadd.f32 0.0, %v4136
    %v4138 = vpop.f32.mrb[0].mxu0
    %4139 = vmatprep.mubr.f32.mxu0 0.0
    %4140 = vmatmul.mubr.f32.gmra.mrb[0].mxu0 %v4020
    %v4141 = vpop.f32.mrb[0].mxu0
    %v4142 = vadd.f32 0.0, %v4141
    %v4143 = vpop.f32.mrb[0].mxu0
    %4144 = vmatprep.mubr.f32.mxu0 0.0
    %4145 = vmatmul.mubr.f32.gmra.mrb[0].mxu0 %v4023
    %v4146 = vpop.f32.mrb[0].mxu0
    %v4147 = vadd.f32 0.0, %v4146
    %v4148 = vpop.f32.mrb[0].mxu0
    %4149 = vmatprep.mubr.f32.mxu0 0.0
    %4150 = vmatmul.mubr.f32.gmra.mrb[0].mxu0 %v4026
    %v4151 = vpop.f32.mrb[0].mxu0
    %v4152 = vadd.f32 0.0, %v4151
    %v4153 = vpop.f32.mrb[0].mxu0
    %4154 = vmatprep.mubr.f32.mxu0 0.0
    %4155 = vmatmul.mubr.f32.gmra.mrb[0].mxu0 %v4029
    %v4156 = vpop.f32.mrb[0].mxu0
    %v4157 = vadd.f32 0.0, %v4156
    %v4158 = vpop.f32.mrb[0].mxu0
    %4159 = vmatprep.mubr.f32.mxu0 0.0
    %4160 = vmatmul.mubr.f32.gmra.mrb[0].mxu0 %v4032
    %v4161 = vpop.f32.mrb[0].mxu0
    %v4162 = vadd.f32 0.0, %v4161
    %v4163 = vpop.f32.mrb[0].mxu0
    %4164 = vmatprep.mubr.f32.mxu0 0.0
    %4165 = vmatmul.mubr.f32.gmra.mrb[0].mxu0 %v4035
    %v4166 = vpop.f32.mrb[0].mxu0
    %v4167 = vadd.f32 0.0, %v4166
    %v4168 = vpop.f32.mrb[0].mxu0
    %4169 = vmatprep.mubr.f32.mxu0 0.0
    %4170 = vmatmul.mubr.f32.gmra.mrb[0].mxu0 %v4038
    %v4171 = vpop.f32.mrb[0].mxu0
    %v4172 = vadd.f32 0.0, %v4171
    %v4173 = vpop.f32.mrb[0].mxu0
    %4174 = vmatprep.mubr.f32.mxu0 0.0
    %4175 = vmatmul.mubr.f32.gmra.mrb[0].mxu0 %v4041
    %v4176 = vpop.f32.mrb[0].mxu0
    %v4177 = vadd.f32 0.0, %v4176
    %v4178 = vpop.f32.mrb[0].mxu0
    %4179 = vmatprep.mubr.f32.mxu0 0.0
    %4180 = vmatmul.mubr.f32.gmra.mrb[0].mxu0 %v4044
    %v4181 = vpop.f32.mrb[0].mxu0
    %v4182 = vadd.f32 0.0, %v4181
    %v4183 = vpop.f32.mrb[0].mxu0
    %4184 = vmatprep.mubr.f32.mxu0 0.0
    %4185 = vmatmul.mubr.f32.gmra.mrb[0].mxu0 %v4047
    %v4186 = vpop.f32.mrb[0].mxu0
    %v4187 = vadd.f32 0.0, %v4186
    %v4188 = vpop.f32.mrb[0].mxu0
    %4189 = vmatprep.mubr.f32.mxu0 0.0
    %4190 = vmatmul.mubr.f32.gmra.mrb[0].mxu0 %v4050
    %v4191 = vpop.f32.mrb[0].mxu0
    %v4192 = vadd.f32 0.0, %v4191
    %v4193 = vpop.f32.mrb[0].mxu0
    %4194 = vmatprep.mubr.f32.mxu0 0.0
    %4195 = vmatmul.mubr.f32.gmra.mrb[0].mxu0 %v4053
    %v4196 = vpop.f32.mrb[0].mxu0
    %v4197 = vadd.f32 0.0, %v4196
    %v4198 = vpop.f32.mrb[0].mxu0
    %4199 = vdwg.mxu0
    %v4200 = vadd.f32 %v3973, %v4122
    %v4201 = vadd.f32 %v3974, %v4127
    %v4202 = vadd.f32 %v3975, %v4132
    %v4203 = vadd.f32 %v3976, %v4137
    %v4204 = vadd.f32 %v3977, %v4142
    %v4205 = vadd.f32 %v3978, %v4147
    %v4206 = vadd.f32 %v3979, %v4152
    %v4207 = vadd.f32 %v3980, %v4157
    %v4208 = vadd.f32 %v3981, %v4162
    %v4209 = vadd.f32 %v3982, %v4167
    %v4210 = vadd.f32 %v3983, %v4172
    %v4211 = vadd.f32 %v3984, %v4177
    %v4212 = vadd.f32 %v3985, %v4182
    %v4213 = vadd.f32 %v3986, %v4187
    %v4214 = vadd.f32 %v3987, %v4192
    %v4215 = vadd.f32 %v3988, %v4197
    %s4216 = sadd.s32 %s2869, 23
    %s4217 = scalar_lea.vmem [#allocation2], %s4216
    %v4218 = vld [vmem:[%s4217] sm:$0xff]
    %v4219 = vld [vmem:[%s4217 + $0x8] sm:$0xff]
    %v4220 = vld [vmem:[%s4217 + $0x10] sm:$0xff]
    %v4221 = vld [vmem:[%s4217 + $0x18] sm:$0xff]
    %v4222 = vld [vmem:[%s4217 + $0x20] sm:$0xff]
    %v4223 = vld [vmem:[%s4217 + $0x28] sm:$0xff]
    %v4224 = vld [vmem:[%s4217 + $0x30] sm:$0xff]
    %v4225 = vld [vmem:[%s4217 + $0x38] sm:$0xff]
    %v4226 = vld [vmem:[%s4217 + $0x40] sm:$0xff]
    %v4227 = vld [vmem:[%s4217 + $0x48] sm:$0xff]
    %v4228 = vld [vmem:[%s4217 + $0x50] sm:$0xff]
    %v4229 = vld [vmem:[%s4217 + $0x58] sm:$0xff]
    %v4230 = vld [vmem:[%s4217 + $0x60] sm:$0xff]
    %v4231 = vld [vmem:[%s4217 + $0x68] sm:$0xff]
    %v4232 = vld [vmem:[%s4217 + $0x70] sm:$0xff]
    %v4233 = vld [vmem:[%s4217 + $0x78] sm:$0xff]
    %v4235 = vsel %vm17, %v4218, 0
    %v4238 = vsel %vm17, %v4219, 0
    %v4241 = vsel %vm17, %v4220, 0
    %v4244 = vsel %vm17, %v4221, 0
    %v4247 = vsel %vm17, %v4222, 0
    %v4250 = vsel %vm17, %v4223, 0
    %v4253 = vsel %vm17, %v4224, 0
    %v4256 = vsel %vm17, %v4225, 0
    %v4259 = vsel %vm17, %v4226, 0
    %v4262 = vsel %vm17, %v4227, 0
    %v4265 = vsel %vm17, %v4228, 0
    %v4268 = vsel %vm17, %v4229, 0
    %v4271 = vsel %vm17, %v4230, 0
    %v4274 = vsel %vm17, %v4231, 0
    %v4277 = vsel %vm17, %v4232, 0
    %v4280 = vsel %vm17, %v4233, 0
    %4282 = vmatprep.subr.mxu0 0.0
    %4283 = vmatpush1.msra.mxu0 %v2855
    %4284 = vmatprep.subr.mxu0 0.0
    %4285 = vmatpush1.msra.mxu0 0.0
    %4286 = vmatprep.subr.mxu0 0.0
    %4287 = vmatpush1.msra.mxu0 0.0
    %4288 = vmatprep.subr.mxu0 0.0
    %4289 = vmatpush1.msra.mxu0 0.0
    %4290 = vmatprep.subr.mxu0 0.0
    %4291 = vmatpush1.msra.mxu0 0.0
    %4292 = vmatprep.subr.mxu0 0.0
    %4293 = vmatpush1.msra.mxu0 0.0
    %4294 = vmatprep.subr.mxu0 0.0
    %4295 = vmatpush1.msra.mxu0 0.0
    %4296 = vmatprep.subr.mxu0 0.0
    %4297 = vmatpush1.msra.mxu0 0.0
    %4298 = vmatprep.subr.mxu0 0.0
    %4299 = vmatpush1.msra.mxu0 0.0
    %4300 = vmatprep.subr.mxu0 0.0
    %4301 = vmatpush1.msra.mxu0 0.0
    %4302 = vmatprep.subr.mxu0 0.0
    %4303 = vmatpush1.msra.mxu0 0.0
    %4304 = vmatprep.subr.mxu0 0.0
    %4305 = vmatpush1.msra.mxu0 0.0
    %4306 = vmatprep.subr.mxu0 0.0
    %4307 = vmatpush1.msra.mxu0 0.0
    %4308 = vmatprep.subr.mxu0 0.0
    %4309 = vmatpush1.msra.mxu0 0.0
    %4310 = vmatprep.subr.mxu0 0.0
    %4311 = vmatpush1.msra.mxu0 0.0
    %4312 = vmatprep.subr.mxu0 0.0
    %4313 = vmatpush1.msra.mxu0 0.0
    %4314 = vmatprep.subr.mxu0 0.0
    %4315 = vmatpush1.msra.mxu0 0.0
    %4316 = vmatprep.subr.mxu0 0.0
    %4317 = vmatpush1.msra.mxu0 0.0
    %4318 = vmatprep.subr.mxu0 0.0
    %4319 = vmatpush1.msra.mxu0 0.0
    %4320 = vmatprep.subr.mxu0 0.0
    %4321 = vmatpush1.msra.mxu0 0.0
    %4322 = vmatprep.subr.mxu0 0.0
    %4323 = vmatpush1.msra.mxu0 0.0
    %4324 = vmatprep.subr.mxu0 0.0
    %4325 = vmatpush1.msra.mxu0 0.0
    %4326 = vmatprep.subr.mxu0 0.0
    %4327 = vmatpush1.msra.mxu0 0.0
    %4328 = vmatprep.subr.mxu0 0.0
    %4329 = vmatpush1.msra.mxu0 0.0
    %4330 = vmatprep.subr.mxu0 0.0
    %4331 = vmatpush1.msra.mxu0 0.0
    %4332 = vmatprep.subr.mxu0 0.0
    %4333 = vmatpush1.msra.mxu0 0.0
    %4334 = vmatprep.subr.mxu0 0.0
    %4335 = vmatpush1.msra.mxu0 0.0
    %4336 = vmatprep.subr.mxu0 0.0
    %4337 = vmatpush1.msra.mxu0 0.0
    %4338 = vmatprep.subr.mxu0 0.0
    %4339 = vmatpush1.msra.mxu0 0.0
    %4340 = vmatprep.subr.mxu0 0.0
    %4341 = vmatpush1.msra.mxu0 0.0
    %4342 = vmatprep.subr.mxu0 0.0
    %4343 = vmatpush1.msra.mxu0 0.0
    %4344 = vmatprep.subr.mxu0 0.0
    %4345 = vmatpush1.msra.mxu0 0.0
    %4346 = vmatprep.mubr.f32.mxu0 0.0
    %4347 = vmatmul.mubr.f32.gmra.mrb[0].mxu0 %v4235
    %v4348 = vpop.f32.mrb[0].mxu0
    %v4349 = vadd.f32 0.0, %v4348
    %v4350 = vpop.f32.mrb[0].mxu0
    %4351 = vmatprep.mubr.f32.mxu0 0.0
    %4352 = vmatmul.mubr.f32.gmra.mrb[0].mxu0 %v4238
    %v4353 = vpop.f32.mrb[0].mxu0
    %v4354 = vadd.f32 0.0, %v4353
    %v4355 = vpop.f32.mrb[0].mxu0
    %4356 = vmatprep.mubr.f32.mxu0 0.0
    %4357 = vmatmul.mubr.f32.gmra.mrb[0].mxu0 %v4241
    %v4358 = vpop.f32.mrb[0].mxu0
    %v4359 = vadd.f32 0.0, %v4358
    %v4360 = vpop.f32.mrb[0].mxu0
    %4361 = vmatprep.mubr.f32.mxu0 0.0
    %4362 = vmatmul.mubr.f32.gmra.mrb[0].mxu0 %v4244
    %v4363 = vpop.f32.mrb[0].mxu0
    %v4364 = vadd.f32 0.0, %v4363
    %v4365 = vpop.f32.mrb[0].mxu0
    %4366 = vmatprep.mubr.f32.mxu0 0.0
    %4367 = vmatmul.mubr.f32.gmra.mrb[0].mxu0 %v4247
    %v4368 = vpop.f32.mrb[0].mxu0
    %v4369 = vadd.f32 0.0, %v4368
    %v4370 = vpop.f32.mrb[0].mxu0
    %4371 = vmatprep.mubr.f32.mxu0 0.0
    %4372 = vmatmul.mubr.f32.gmra.mrb[0].mxu0 %v4250
    %v4373 = vpop.f32.mrb[0].mxu0
    %v4374 = vadd.f32 0.0, %v4373
    %v4375 = vpop.f32.mrb[0].mxu0
    %4376 = vmatprep.mubr.f32.mxu0 0.0
    %4377 = vmatmul.mubr.f32.gmra.mrb[0].mxu0 %v4253
    %v4378 = vpop.f32.mrb[0].mxu0
    %v4379 = vadd.f32 0.0, %v4378
    %v4380 = vpop.f32.mrb[0].mxu0
    %4381 = vmatprep.mubr.f32.mxu0 0.0
    %4382 = vmatmul.mubr.f32.gmra.mrb[0].mxu0 %v4256
    %v4383 = vpop.f32.mrb[0].mxu0
    %v4384 = vadd.f32 0.0, %v4383
    %v4385 = vpop.f32.mrb[0].mxu0
    %4386 = vmatprep.mubr.f32.mxu0 0.0
    %4387 = vmatmul.mubr.f32.gmra.mrb[0].mxu0 %v4259
    %v4388 = vpop.f32.mrb[0].mxu0
    %v4389 = vadd.f32 0.0, %v4388
    %v4390 = vpop.f32.mrb[0].mxu0
    %4391 = vmatprep.mubr.f32.mxu0 0.0
    %4392 = vmatmul.mubr.f32.gmra.mrb[0].mxu0 %v4262
    %v4393 = vpop.f32.mrb[0].mxu0
    %v4394 = vadd.f32 0.0, %v4393
    %v4395 = vpop.f32.mrb[0].mxu0
    %4396 = vmatprep.mubr.f32.mxu0 0.0
    %4397 = vmatmul.mubr.f32.gmra.mrb[0].mxu0 %v4265
    %v4398 = vpop.f32.mrb[0].mxu0
    %v4399 = vadd.f32 0.0, %v4398
    %v4400 = vpop.f32.mrb[0].mxu0
    %4401 = vmatprep.mubr.f32.mxu0 0.0
    %4402 = vmatmul.mubr.f32.gmra.mrb[0].mxu0 %v4268
    %v4403 = vpop.f32.mrb[0].mxu0
    %v4404 = vadd.f32 0.0, %v4403
    %v4405 = vpop.f32.mrb[0].mxu0
    %4406 = vmatprep.mubr.f32.mxu0 0.0
    %4407 = vmatmul.mubr.f32.gmra.mrb[0].mxu0 %v4271
    %v4408 = vpop.f32.mrb[0].mxu0
    %v4409 = vadd.f32 0.0, %v4408
    %v4410 = vpop.f32.mrb[0].mxu0
    %4411 = vmatprep.mubr.f32.mxu0 0.0
    %4412 = vmatmul.mubr.f32.gmra.mrb[0].mxu0 %v4274
    %v4413 = vpop.f32.mrb[0].mxu0
    %v4414 = vadd.f32 0.0, %v4413
    %v4415 = vpop.f32.mrb[0].mxu0
    %4416 = vmatprep.mubr.f32.mxu0 0.0
    %4417 = vmatmul.mubr.f32.gmra.mrb[0].mxu0 %v4277
    %v4418 = vpop.f32.mrb[0].mxu0
    %v4419 = vadd.f32 0.0, %v4418
    %v4420 = vpop.f32.mrb[0].mxu0
    %4421 = vmatprep.mubr.f32.mxu0 0.0
    %4422 = vmatmul.mubr.f32.gmra.mrb[0].mxu0 %v4280
    %v4423 = vpop.f32.mrb[0].mxu0
    %v4424 = vadd.f32 0.0, %v4423
    %v4425 = vpop.f32.mrb[0].mxu0
    %4426 = vdwg.mxu0
    %v4427 = vadd.f32 %v4200, %v4349
    %v4428 = vadd.f32 %v4201, %v4354
    %v4429 = vadd.f32 %v4202, %v4359
    %v4430 = vadd.f32 %v4203, %v4364
    %v4431 = vadd.f32 %v4204, %v4369
    %v4432 = vadd.f32 %v4205, %v4374
    %v4433 = vadd.f32 %v4206, %v4379
    %v4434 = vadd.f32 %v4207, %v4384
    %v4435 = vadd.f32 %v4208, %v4389
    %v4436 = vadd.f32 %v4209, %v4394
    %v4437 = vadd.f32 %v4210, %v4399
    %v4438 = vadd.f32 %v4211, %v4404
    %v4439 = vadd.f32 %v4212, %v4409
    %v4440 = vadd.f32 %v4213, %v4414
    %v4441 = vadd.f32 %v4214, %v4419
    %v4442 = vadd.f32 %v4215, %v4424
    %s4443 = sadd.s32 %s2869, 24
    %s4444 = scalar_lea.vmem [#allocation2], %s4443
    %v4445 = vld [vmem:[%s4444] sm:$0xff]
    %v4446 = vld [vmem:[%s4444 + $0x8] sm:$0xff]
    %v4447 = vld [vmem:[%s4444 + $0x10] sm:$0xff]
    %v4448 = vld [vmem:[%s4444 + $0x18] sm:$0xff]
    %v4449 = vld [vmem:[%s4444 + $0x20] sm:$0xff]
    %v4450 = vld [vmem:[%s4444 + $0x28] sm:$0xff]
    %v4451 = vld [vmem:[%s4444 + $0x30] sm:$0xff]
    %v4452 = vld [vmem:[%s4444 + $0x38] sm:$0xff]
    %v4453 = vld [vmem:[%s4444 + $0x40] sm:$0xff]
    %v4454 = vld [vmem:[%s4444 + $0x48] sm:$0xff]
    %v4455 = vld [vmem:[%s4444 + $0x50] sm:$0xff]
    %v4456 = vld [vmem:[%s4444 + $0x58] sm:$0xff]
    %v4457 = vld [vmem:[%s4444 + $0x60] sm:$0xff]
    %v4458 = vld [vmem:[%s4444 + $0x68] sm:$0xff]
    %v4459 = vld [vmem:[%s4444 + $0x70] sm:$0xff]
    %v4460 = vld [vmem:[%s4444 + $0x78] sm:$0xff]
    %v4462 = vsel %vm17, %v4445, 0
    %v4465 = vsel %vm17, %v4446, 0
    %v4468 = vsel %vm17, %v4447, 0
    %v4471 = vsel %vm17, %v4448, 0
    %v4474 = vsel %vm17, %v4449, 0
    %v4477 = vsel %vm17, %v4450, 0
    %v4480 = vsel %vm17, %v4451, 0
    %v4483 = vsel %vm17, %v4452, 0
    %v4486 = vsel %vm17, %v4453, 0
    %v4489 = vsel %vm17, %v4454, 0
    %v4492 = vsel %vm17, %v4455, 0
    %v4495 = vsel %vm17, %v4456, 0
    %v4498 = vsel %vm17, %v4457, 0
    %v4501 = vsel %vm17, %v4458, 0
    %v4504 = vsel %vm17, %v4459, 0
    %v4507 = vsel %vm17, %v4460, 0
    %4509 = vmatprep.subr.mxu0 0.0
    %4510 = vmatpush1.msra.mxu0 %v2857
    %4511 = vmatprep.subr.mxu0 0.0
    %4512 = vmatpush1.msra.mxu0 0.0
    %4513 = vmatprep.subr.mxu0 0.0
    %4514 = vmatpush1.msra.mxu0 0.0
    %4515 = vmatprep.subr.mxu0 0.0
    %4516 = vmatpush1.msra.mxu0 0.0
    %4517 = vmatprep.subr.mxu0 0.0
    %4518 = vmatpush1.msra.mxu0 0.0
    %4519 = vmatprep.subr.mxu0 0.0
    %4520 = vmatpush1.msra.mxu0 0.0
    %4521 = vmatprep.subr.mxu0 0.0
    %4522 = vmatpush1.msra.mxu0 0.0
    %4523 = vmatprep.subr.mxu0 0.0
    %4524 = vmatpush1.msra.mxu0 0.0
    %4525 = vmatprep.subr.mxu0 0.0
    %4526 = vmatpush1.msra.mxu0 0.0
    %4527 = vmatprep.subr.mxu0 0.0
    %4528 = vmatpush1.msra.mxu0 0.0
    %4529 = vmatprep.subr.mxu0 0.0
    %4530 = vmatpush1.msra.mxu0 0.0
    %4531 = vmatprep.subr.mxu0 0.0
    %4532 = vmatpush1.msra.mxu0 0.0
    %4533 = vmatprep.subr.mxu0 0.0
    %4534 = vmatpush1.msra.mxu0 0.0
    %4535 = vmatprep.subr.mxu0 0.0
    %4536 = vmatpush1.msra.mxu0 0.0
    %4537 = vmatprep.subr.mxu0 0.0
    %4538 = vmatpush1.msra.mxu0 0.0
    %4539 = vmatprep.subr.mxu0 0.0
    %4540 = vmatpush1.msra.mxu0 0.0
    %4541 = vmatprep.subr.mxu0 0.0
    %4542 = vmatpush1.msra.mxu0 0.0
    %4543 = vmatprep.subr.mxu0 0.0
    %4544 = vmatpush1.msra.mxu0 0.0
    %4545 = vmatprep.subr.mxu0 0.0
    %4546 = vmatpush1.msra.mxu0 0.0
    %4547 = vmatprep.subr.mxu0 0.0
    %4548 = vmatpush1.msra.mxu0 0.0
    %4549 = vmatprep.subr.mxu0 0.0
    %4550 = vmatpush1.msra.mxu0 0.0
    %4551 = vmatprep.subr.mxu0 0.0
    %4552 = vmatpush1.msra.mxu0 0.0
    %4553 = vmatprep.subr.mxu0 0.0
    %4554 = vmatpush1.msra.mxu0 0.0
    %4555 = vmatprep.subr.mxu0 0.0
    %4556 = vmatpush1.msra.mxu0 0.0
    %4557 = vmatprep.subr.mxu0 0.0
    %4558 = vmatpush1.msra.mxu0 0.0
    %4559 = vmatprep.subr.mxu0 0.0
    %4560 = vmatpush1.msra.mxu0 0.0
    %4561 = vmatprep.subr.mxu0 0.0
    %4562 = vmatpush1.msra.mxu0 0.0
    %4563 = vmatprep.subr.mxu0 0.0
    %4564 = vmatpush1.msra.mxu0 0.0
    %4565 = vmatprep.subr.mxu0 0.0
    %4566 = vmatpush1.msra.mxu0 0.0
    %4567 = vmatprep.subr.mxu0 0.0
    %4568 = vmatpush1.msra.mxu0 0.0
    %4569 = vmatprep.subr.mxu0 0.0
    %4570 = vmatpush1.msra.mxu0 0.0
    %4571 = vmatprep.subr.mxu0 0.0
    %4572 = vmatpush1.msra.mxu0 0.0
    %4573 = vmatprep.mubr.f32.mxu0 0.0
    %4574 = vmatmul.mubr.f32.gmra.mrb[0].mxu0 %v4462
    %v4575 = vpop.f32.mrb[0].mxu0
    %v4576 = vadd.f32 0.0, %v4575
    %v4577 = vpop.f32.mrb[0].mxu0
    %4578 = vmatprep.mubr.f32.mxu0 0.0
    %4579 = vmatmul.mubr.f32.gmra.mrb[0].mxu0 %v4465
    %v4580 = vpop.f32.mrb[0].mxu0
    %v4581 = vadd.f32 0.0, %v4580
    %v4582 = vpop.f32.mrb[0].mxu0
    %4583 = vmatprep.mubr.f32.mxu0 0.0
    %4584 = vmatmul.mubr.f32.gmra.mrb[0].mxu0 %v4468
    %v4585 = vpop.f32.mrb[0].mxu0
    %v4586 = vadd.f32 0.0, %v4585
    %v4587 = vpop.f32.mrb[0].mxu0
    %4588 = vmatprep.mubr.f32.mxu0 0.0
    %4589 = vmatmul.mubr.f32.gmra.mrb[0].mxu0 %v4471
    %v4590 = vpop.f32.mrb[0].mxu0
    %v4591 = vadd.f32 0.0, %v4590
    %v4592 = vpop.f32.mrb[0].mxu0
    %4593 = vmatprep.mubr.f32.mxu0 0.0
    %4594 = vmatmul.mubr.f32.gmra.mrb[0].mxu0 %v4474
    %v4595 = vpop.f32.mrb[0].mxu0
    %v4596 = vadd.f32 0.0, %v4595
    %v4597 = vpop.f32.mrb[0].mxu0
    %4598 = vmatprep.mubr.f32.mxu0 0.0
    %4599 = vmatmul.mubr.f32.gmra.mrb[0].mxu0 %v4477
    %v4600 = vpop.f32.mrb[0].mxu0
    %v4601 = vadd.f32 0.0, %v4600
    %v4602 = vpop.f32.mrb[0].mxu0
    %4603 = vmatprep.mubr.f32.mxu0 0.0
    %4604 = vmatmul.mubr.f32.gmra.mrb[0].mxu0 %v4480
    %v4605 = vpop.f32.mrb[0].mxu0
    %v4606 = vadd.f32 0.0, %v4605
    %v4607 = vpop.f32.mrb[0].mxu0
    %4608 = vmatprep.mubr.f32.mxu0 0.0
    %4609 = vmatmul.mubr.f32.gmra.mrb[0].mxu0 %v4483
    %v4610 = vpop.f32.mrb[0].mxu0
    %v4611 = vadd.f32 0.0, %v4610
    %v4612 = vpop.f32.mrb[0].mxu0
    %4613 = vmatprep.mubr.f32.mxu0 0.0
    %4614 = vmatmul.mubr.f32.gmra.mrb[0].mxu0 %v4486
    %v4615 = vpop.f32.mrb[0].mxu0
    %v4616 = vadd.f32 0.0, %v4615
    %v4617 = vpop.f32.mrb[0].mxu0
    %4618 = vmatprep.mubr.f32.mxu0 0.0
    %4619 = vmatmul.mubr.f32.gmra.mrb[0].mxu0 %v4489
    %v4620 = vpop.f32.mrb[0].mxu0
    %v4621 = vadd.f32 0.0, %v4620
    %v4622 = vpop.f32.mrb[0].mxu0
    %4623 = vmatprep.mubr.f32.mxu0 0.0
    %4624 = vmatmul.mubr.f32.gmra.mrb[0].mxu0 %v4492
    %v4625 = vpop.f32.mrb[0].mxu0
    %v4626 = vadd.f32 0.0, %v4625
    %v4627 = vpop.f32.mrb[0].mxu0
    %4628 = vmatprep.mubr.f32.mxu0 0.0
    %4629 = vmatmul.mubr.f32.gmra.mrb[0].mxu0 %v4495
    %v4630 = vpop.f32.mrb[0].mxu0
    %v4631 = vadd.f32 0.0, %v4630
    %v4632 = vpop.f32.mrb[0].mxu0
    %4633 = vmatprep.mubr.f32.mxu0 0.0
    %4634 = vmatmul.mubr.f32.gmra.mrb[0].mxu0 %v4498
    %v4635 = vpop.f32.mrb[0].mxu0
    %v4636 = vadd.f32 0.0, %v4635
    %v4637 = vpop.f32.mrb[0].mxu0
    %4638 = vmatprep.mubr.f32.mxu0 0.0
    %4639 = vmatmul.mubr.f32.gmra.mrb[0].mxu0 %v4501
    %v4640 = vpop.f32.mrb[0].mxu0
    %v4641 = vadd.f32 0.0, %v4640
    %v4642 = vpop.f32.mrb[0].mxu0
    %4643 = vmatprep.mubr.f32.mxu0 0.0
    %4644 = vmatmul.mubr.f32.gmra.mrb[0].mxu0 %v4504
    %v4645 = vpop.f32.mrb[0].mxu0
    %v4646 = vadd.f32 0.0, %v4645
    %v4647 = vpop.f32.mrb[0].mxu0
    %4648 = vmatprep.mubr.f32.mxu0 0.0
    %4649 = vmatmul.mubr.f32.gmra.mrb[0].mxu0 %v4507
    %v4650 = vpop.f32.mrb[0].mxu0
    %v4651 = vadd.f32 0.0, %v4650
    %v4652 = vpop.f32.mrb[0].mxu0
    %4653 = vdwg.mxu0
    %v4654 = vadd.f32 %v4427, %v4576
    %v4655 = vadd.f32 %v4428, %v4581
    %v4656 = vadd.f32 %v4429, %v4586
    %v4657 = vadd.f32 %v4430, %v4591
    %v4658 = vadd.f32 %v4431, %v4596
    %v4659 = vadd.f32 %v4432, %v4601
    %v4660 = vadd.f32 %v4433, %v4606
    %v4661 = vadd.f32 %v4434, %v4611
    %v4662 = vadd.f32 %v4435, %v4616
    %v4663 = vadd.f32 %v4436, %v4621
    %v4664 = vadd.f32 %v4437, %v4626
    %v4665 = vadd.f32 %v4438, %v4631
    %v4666 = vadd.f32 %v4439, %v4636
    %v4667 = vadd.f32 %v4440, %v4641
    %v4668 = vadd.f32 %v4441, %v4646
    %v4669 = vadd.f32 %v4442, %v4651
    %s4670 = sadd.s32 %s2869, 25
    %s4671 = scalar_lea.vmem [#allocation2], %s4670
    %v4672 = vld [vmem:[%s4671] sm:$0xff]
    %v4673 = vld [vmem:[%s4671 + $0x8] sm:$0xff]
    %v4674 = vld [vmem:[%s4671 + $0x10] sm:$0xff]
    %v4675 = vld [vmem:[%s4671 + $0x18] sm:$0xff]
    %v4676 = vld [vmem:[%s4671 + $0x20] sm:$0xff]
    %v4677 = vld [vmem:[%s4671 + $0x28] sm:$0xff]
    %v4678 = vld [vmem:[%s4671 + $0x30] sm:$0xff]
    %v4679 = vld [vmem:[%s4671 + $0x38] sm:$0xff]
    %v4680 = vld [vmem:[%s4671 + $0x40] sm:$0xff]
    %v4681 = vld [vmem:[%s4671 + $0x48] sm:$0xff]
    %v4682 = vld [vmem:[%s4671 + $0x50] sm:$0xff]
    %v4683 = vld [vmem:[%s4671 + $0x58] sm:$0xff]
    %v4684 = vld [vmem:[%s4671 + $0x60] sm:$0xff]
    %v4685 = vld [vmem:[%s4671 + $0x68] sm:$0xff]
    %v4686 = vld [vmem:[%s4671 + $0x70] sm:$0xff]
    %v4687 = vld [vmem:[%s4671 + $0x78] sm:$0xff]
    %v4689 = vsel %vm17, %v4672, 0
    %v4692 = vsel %vm17, %v4673, 0
    %v4695 = vsel %vm17, %v4674, 0
    %v4698 = vsel %vm17, %v4675, 0
    %v4701 = vsel %vm17, %v4676, 0
    %v4704 = vsel %vm17, %v4677, 0
    %v4707 = vsel %vm17, %v4678, 0
    %v4710 = vsel %vm17, %v4679, 0
    %v4713 = vsel %vm17, %v4680, 0
    %v4716 = vsel %vm17, %v4681, 0
    %v4719 = vsel %vm17, %v4682, 0
    %v4722 = vsel %vm17, %v4683, 0
    %v4725 = vsel %vm17, %v4684, 0
    %v4728 = vsel %vm17, %v4685, 0
    %v4731 = vsel %vm17, %v4686, 0
    %v4734 = vsel %vm17, %v4687, 0
    %4736 = vmatprep.subr.mxu0 0.0
    %4737 = vmatpush1.msra.mxu0 %v2859
    %4738 = vmatprep.subr.mxu0 0.0
    %4739 = vmatpush1.msra.mxu0 0.0
    %4740 = vmatprep.subr.mxu0 0.0
    %4741 = vmatpush1.msra.mxu0 0.0
    %4742 = vmatprep.subr.mxu0 0.0
    %4743 = vmatpush1.msra.mxu0 0.0
    %4744 = vmatprep.subr.mxu0 0.0
    %4745 = vmatpush1.msra.mxu0 0.0
    %4746 = vmatprep.subr.mxu0 0.0
    %4747 = vmatpush1.msra.mxu0 0.0
    %4748 = vmatprep.subr.mxu0 0.0
    %4749 = vmatpush1.msra.mxu0 0.0
    %4750 = vmatprep.subr.mxu0 0.0
    %4751 = vmatpush1.msra.mxu0 0.0
    %4752 = vmatprep.subr.mxu0 0.0
    %4753 = vmatpush1.msra.mxu0 0.0
    %4754 = vmatprep.subr.mxu0 0.0
    %4755 = vmatpush1.msra.mxu0 0.0
    %4756 = vmatprep.subr.mxu0 0.0
    %4757 = vmatpush1.msra.mxu0 0.0
    %4758 = vmatprep.subr.mxu0 0.0
    %4759 = vmatpush1.msra.mxu0 0.0
    %4760 = vmatprep.subr.mxu0 0.0
    %4761 = vmatpush1.msra.mxu0 0.0
    %4762 = vmatprep.subr.mxu0 0.0
    %4763 = vmatpush1.msra.mxu0 0.0
    %4764 = vmatprep.subr.mxu0 0.0
    %4765 = vmatpush1.msra.mxu0 0.0
    %4766 = vmatprep.subr.mxu0 0.0
    %4767 = vmatpush1.msra.mxu0 0.0
    %4768 = vmatprep.subr.mxu0 0.0
    %4769 = vmatpush1.msra.mxu0 0.0
    %4770 = vmatprep.subr.mxu0 0.0
    %4771 = vmatpush1.msra.mxu0 0.0
    %4772 = vmatprep.subr.mxu0 0.0
    %4773 = vmatpush1.msra.mxu0 0.0
    %4774 = vmatprep.subr.mxu0 0.0
    %4775 = vmatpush1.msra.mxu0 0.0
    %4776 = vmatprep.subr.mxu0 0.0
    %4777 = vmatpush1.msra.mxu0 0.0
    %4778 = vmatprep.subr.mxu0 0.0
    %4779 = vmatpush1.msra.mxu0 0.0
    %4780 = vmatprep.subr.mxu0 0.0
    %4781 = vmatpush1.msra.mxu0 0.0
    %4782 = vmatprep.subr.mxu0 0.0
    %4783 = vmatpush1.msra.mxu0 0.0
    %4784 = vmatprep.subr.mxu0 0.0
    %4785 = vmatpush1.msra.mxu0 0.0
    %4786 = vmatprep.subr.mxu0 0.0
    %4787 = vmatpush1.msra.mxu0 0.0
    %4788 = vmatprep.subr.mxu0 0.0
    %4789 = vmatpush1.msra.mxu0 0.0
    %4790 = vmatprep.subr.mxu0 0.0
    %4791 = vmatpush1.msra.mxu0 0.0
    %4792 = vmatprep.subr.mxu0 0.0
    %4793 = vmatpush1.msra.mxu0 0.0
    %4794 = vmatprep.subr.mxu0 0.0
    %4795 = vmatpush1.msra.mxu0 0.0
    %4796 = vmatprep.subr.mxu0 0.0
    %4797 = vmatpush1.msra.mxu0 0.0
    %4798 = vmatprep.subr.mxu0 0.0
    %4799 = vmatpush1.msra.mxu0 0.0
    %4800 = vmatprep.mubr.f32.mxu0 0.0
    %4801 = vmatmul.mubr.f32.gmra.mrb[0].mxu0 %v4689
    %v4802 = vpop.f32.mrb[0].mxu0
    %v4803 = vadd.f32 0.0, %v4802
    %v4804 = vpop.f32.mrb[0].mxu0
    %4805 = vmatprep.mubr.f32.mxu0 0.0
    %4806 = vmatmul.mubr.f32.gmra.mrb[0].mxu0 %v4692
    %v4807 = vpop.f32.mrb[0].mxu0
    %v4808 = vadd.f32 0.0, %v4807
    %v4809 = vpop.f32.mrb[0].mxu0
    %4810 = vmatprep.mubr.f32.mxu0 0.0
    %4811 = vmatmul.mubr.f32.gmra.mrb[0].mxu0 %v4695
    %v4812 = vpop.f32.mrb[0].mxu0
    %v4813 = vadd.f32 0.0, %v4812
    %v4814 = vpop.f32.mrb[0].mxu0
    %4815 = vmatprep.mubr.f32.mxu0 0.0
    %4816 = vmatmul.mubr.f32.gmra.mrb[0].mxu0 %v4698
    %v4817 = vpop.f32.mrb[0].mxu0
    %v4818 = vadd.f32 0.0, %v4817
    %v4819 = vpop.f32.mrb[0].mxu0
    %4820 = vmatprep.mubr.f32.mxu0 0.0
    %4821 = vmatmul.mubr.f32.gmra.mrb[0].mxu0 %v4701
    %v4822 = vpop.f32.mrb[0].mxu0
    %v4823 = vadd.f32 0.0, %v4822
    %v4824 = vpop.f32.mrb[0].mxu0
    %4825 = vmatprep.mubr.f32.mxu0 0.0
    %4826 = vmatmul.mubr.f32.gmra.mrb[0].mxu0 %v4704
    %v4827 = vpop.f32.mrb[0].mxu0
    %v4828 = vadd.f32 0.0, %v4827
    %v4829 = vpop.f32.mrb[0].mxu0
    %4830 = vmatprep.mubr.f32.mxu0 0.0
    %4831 = vmatmul.mubr.f32.gmra.mrb[0].mxu0 %v4707
    %v4832 = vpop.f32.mrb[0].mxu0
    %v4833 = vadd.f32 0.0, %v4832
    %v4834 = vpop.f32.mrb[0].mxu0
    %4835 = vmatprep.mubr.f32.mxu0 0.0
    %4836 = vmatmul.mubr.f32.gmra.mrb[0].mxu0 %v4710
    %v4837 = vpop.f32.mrb[0].mxu0
    %v4838 = vadd.f32 0.0, %v4837
    %v4839 = vpop.f32.mrb[0].mxu0
    %4840 = vmatprep.mubr.f32.mxu0 0.0
    %4841 = vmatmul.mubr.f32.gmra.mrb[0].mxu0 %v4713
    %v4842 = vpop.f32.mrb[0].mxu0
    %v4843 = vadd.f32 0.0, %v4842
    %v4844 = vpop.f32.mrb[0].mxu0
    %4845 = vmatprep.mubr.f32.mxu0 0.0
    %4846 = vmatmul.mubr.f32.gmra.mrb[0].mxu0 %v4716
    %v4847 = vpop.f32.mrb[0].mxu0
    %v4848 = vadd.f32 0.0, %v4847
    %v4849 = vpop.f32.mrb[0].mxu0
    %4850 = vmatprep.mubr.f32.mxu0 0.0
    %4851 = vmatmul.mubr.f32.gmra.mrb[0].mxu0 %v4719
    %v4852 = vpop.f32.mrb[0].mxu0
    %v4853 = vadd.f32 0.0, %v4852
    %v4854 = vpop.f32.mrb[0].mxu0
    %4855 = vmatprep.mubr.f32.mxu0 0.0
    %4856 = vmatmul.mubr.f32.gmra.mrb[0].mxu0 %v4722
    %v4857 = vpop.f32.mrb[0].mxu0
    %v4858 = vadd.f32 0.0, %v4857
    %v4859 = vpop.f32.mrb[0].mxu0
    %4860 = vmatprep.mubr.f32.mxu0 0.0
    %4861 = vmatmul.mubr.f32.gmra.mrb[0].mxu0 %v4725
    %v4862 = vpop.f32.mrb[0].mxu0
    %v4863 = vadd.f32 0.0, %v4862
    %v4864 = vpop.f32.mrb[0].mxu0
    %4865 = vmatprep.mubr.f32.mxu0 0.0
    %4866 = vmatmul.mubr.f32.gmra.mrb[0].mxu0 %v4728
    %v4867 = vpop.f32.mrb[0].mxu0
    %v4868 = vadd.f32 0.0, %v4867
    %v4869 = vpop.f32.mrb[0].mxu0
    %4870 = vmatprep.mubr.f32.mxu0 0.0
    %4871 = vmatmul.mubr.f32.gmra.mrb[0].mxu0 %v4731
    %v4872 = vpop.f32.mrb[0].mxu0
    %v4873 = vadd.f32 0.0, %v4872
    %v4874 = vpop.f32.mrb[0].mxu0
    %4875 = vmatprep.mubr.f32.mxu0 0.0
    %4876 = vmatmul.mubr.f32.gmra.mrb[0].mxu0 %v4734
    %v4877 = vpop.f32.mrb[0].mxu0
    %v4878 = vadd.f32 0.0, %v4877
    %v4879 = vpop.f32.mrb[0].mxu0
    %4880 = vdwg.mxu0
    %v4881 = vadd.f32 %v4654, %v4803
    %v4882 = vadd.f32 %v4655, %v4808
    %v4883 = vadd.f32 %v4656, %v4813
    %v4884 = vadd.f32 %v4657, %v4818
    %v4885 = vadd.f32 %v4658, %v4823
    %v4886 = vadd.f32 %v4659, %v4828
    %v4887 = vadd.f32 %v4660, %v4833
    %v4888 = vadd.f32 %v4661, %v4838
    %v4889 = vadd.f32 %v4662, %v4843
    %v4890 = vadd.f32 %v4663, %v4848
    %v4891 = vadd.f32 %v4664, %v4853
    %v4892 = vadd.f32 %v4665, %v4858
    %v4893 = vadd.f32 %v4666, %v4863
    %v4894 = vadd.f32 %v4667, %v4868
    %v4895 = vadd.f32 %v4668, %v4873
    %v4896 = vadd.f32 %v4669, %v4878
    %s4897 = scalar_lea.vmem %s4, %s2868
    %4898 = vst.msk [vmem:[%s4897] sm:$0xff] %vm17, %v4881
    %4899 = vst.msk [vmem:[%s4897 + $0x8] sm:$0xff] %vm17, %v4882
    %4900 = vst.msk [vmem:[%s4897 + $0x10] sm:$0xff] %vm17, %v4883
    %4901 = vst.msk [vmem:[%s4897 + $0x18] sm:$0xff] %vm17, %v4884
    %4902 = vst.msk [vmem:[%s4897 + $0x20] sm:$0xff] %vm17, %v4885
    %4903 = vst.msk [vmem:[%s4897 + $0x28] sm:$0xff] %vm17, %v4886
    %4904 = vst.msk [vmem:[%s4897 + $0x30] sm:$0xff] %vm17, %v4887
    %4905 = vst.msk [vmem:[%s4897 + $0x38] sm:$0xff] %vm17, %v4888
    %4906 = vst.msk [vmem:[%s4897 + $0x40] sm:$0xff] %vm17, %v4889
    %4907 = vst.msk [vmem:[%s4897 + $0x48] sm:$0xff] %vm17, %v4890
    %4908 = vst.msk [vmem:[%s4897 + $0x50] sm:$0xff] %vm17, %v4891
    %4909 = vst.msk [vmem:[%s4897 + $0x58] sm:$0xff] %vm17, %v4892
    %4910 = vst.msk [vmem:[%s4897 + $0x60] sm:$0xff] %vm17, %v4893
    %4911 = vst.msk [vmem:[%s4897 + $0x68] sm:$0xff] %vm17, %v4894
    %4912 = vst.msk [vmem:[%s4897 + $0x70] sm:$0xff] %vm17, %v4895
    %4913 = vst.msk [vmem:[%s4897 + $0x78] sm:$0xff] %vm17, %v4896
    %4915 = vset.pattern.permute.xlu0 4
    %4916 = vperm.xlu0 %4915, %v2871
    %v4917 = vpop.permute.xlu0 %4916
    %4920 = vset.pattern.permute.xlu0 4
    %4921 = vperm.xlu0 %4920, %v2872
    %v4922 = vpop.permute.xlu0 %4921
    %4925 = vset.pattern.permute.xlu0 4
    %4926 = vperm.xlu0 %4925, %v2873
    %v4927 = vpop.permute.xlu0 %4926
    %4930 = vset.pattern.permute.xlu0 4
    %4931 = vperm.xlu0 %4930, %v2874
    %v4932 = vpop.permute.xlu0 %4931
    %4935 = vset.pattern.permute.xlu0 4
    %4936 = vperm.xlu0 %4935, %v2875
    %v4937 = vpop.permute.xlu0 %4936
    %4940 = vset.pattern.permute.xlu0 4
    %4941 = vperm.xlu0 %4940, %v2876
    %v4942 = vpop.permute.xlu0 %4941
    %4945 = vset.pattern.permute.xlu0 4
    %4946 = vperm.xlu0 %4945, %v2877
    %v4947 = vpop.permute.xlu0 %4946
    %4950 = vset.pattern.permute.xlu0 4
    %4951 = vperm.xlu0 %4950, %v2878
    %v4952 = vpop.permute.xlu0 %4951
    %4955 = vset.pattern.permute.xlu0 4
    %4956 = vperm.xlu0 %4955, %v2879
    %v4957 = vpop.permute.xlu0 %4956
    %4960 = vset.pattern.permute.xlu0 4
    %4961 = vperm.xlu0 %4960, %v2880
    %v4962 = vpop.permute.xlu0 %4961
    %4965 = vset.pattern.permute.xlu0 4
    %4966 = vperm.xlu0 %4965, %v2881
    %v4967 = vpop.permute.xlu0 %4966
    %4970 = vset.pattern.permute.xlu0 4
    %4971 = vperm.xlu0 %4970, %v2882
    %v4972 = vpop.permute.xlu0 %4971
    %4975 = vset.pattern.permute.xlu0 4
    %4976 = vperm.xlu0 %4975, %v2883
    %v4977 = vpop.permute.xlu0 %4976
    %4980 = vset.pattern.permute.xlu0 4
    %4981 = vperm.xlu0 %4980, %v2884
    %v4982 = vpop.permute.xlu0 %4981
    %4985 = vset.pattern.permute.xlu0 4
    %4986 = vperm.xlu0 %4985, %v2885
    %v4987 = vpop.permute.xlu0 %4986
    %4990 = vset.pattern.permute.xlu0 4
    %4991 = vperm.xlu0 %4990, %v2886
    %v4992 = vpop.permute.xlu0 %4991
    %v4994 = vmul.f32 %v4881, %v4917
    %v4995 = vmul.f32 %v4882, %v4922
    %v4996 = vmul.f32 %v4883, %v4927
    %v4997 = vmul.f32 %v4884, %v4932
    %v4998 = vmul.f32 %v4885, %v4937
    %v4999 = vmul.f32 %v4886, %v4942
    %v5000 = vmul.f32 %v4887, %v4947
    %v5001 = vmul.f32 %v4888, %v4952
    %v5002 = vmul.f32 %v4889, %v4957
    %v5003 = vmul.f32 %v4890, %v4962
    %v5004 = vmul.f32 %v4891, %v4967
    %v5005 = vmul.f32 %v4892, %v4972
    %v5006 = vmul.f32 %v4893, %v4977
    %v5007 = vmul.f32 %v4894, %v4982
    %v5008 = vmul.f32 %v4895, %v4987
    %v5009 = vmul.f32 %v4896, %v4992
    %v5010 = vsel %vm17, %v4994, 0.0
    %v5011 = vsel %vm17, %v4995, 0.0
    %v5012 = vadd.f32 %v5010, %v5011
    %v5013 = vsel %vm17, %v4996, 0.0
    %v5014 = vadd.f32 %v5012, %v5013
    %v5015 = vsel %vm17, %v4997, 0.0
    %v5016 = vadd.f32 %v5014, %v5015
    %v5017 = vsel %vm17, %v4998, 0.0
    %v5018 = vadd.f32 %v5016, %v5017
    %v5019 = vsel %vm17, %v4999, 0.0
    %v5020 = vadd.f32 %v5018, %v5019
    %v5021 = vsel %vm17, %v5000, 0.0
    %v5022 = vadd.f32 %v5020, %v5021
    %v5023 = vsel %vm17, %v5001, 0.0
    %v5024 = vadd.f32 %v5022, %v5023
    %v5025 = vsel %vm17, %v5002, 0.0
    %v5026 = vadd.f32 %v5024, %v5025
    %v5027 = vsel %vm17, %v5003, 0.0
    %v5028 = vadd.f32 %v5026, %v5027
    %v5029 = vsel %vm17, %v5004, 0.0
    %v5030 = vadd.f32 %v5028, %v5029
    %v5031 = vsel %vm17, %v5005, 0.0
    %v5032 = vadd.f32 %v5030, %v5031
    %v5033 = vsel %vm17, %v5006, 0.0
    %v5034 = vadd.f32 %v5032, %v5033
    %v5035 = vsel %vm17, %v5007, 0.0
    %v5036 = vadd.f32 %v5034, %v5035
    %v5037 = vsel %vm17, %v5008, 0.0
    %v5038 = vadd.f32 %v5036, %v5037
    %v5039 = vsel %vm17, %v5009, 0.0
    %v5040 = vadd.f32 %v5038, %v5039
    %v5041 = vrot.slane %v5040, 4
    %v5042 = vadd.f32 %v5040, %v5041
    %v5043 = vrot.slane %v5042, 2
    %v5044 = vadd.f32 %v5042, %v5043
    %v5045 = vrot.slane %v5044, 1
    %v5046 = vadd.f32 %v5044, %v5045
    %v5047 = vadd.f32 %v2866, %v5046
    %v5048 = vmul.f32 %v4994, %v4881
    %v5049 = vmul.f32 %v4995, %v4882
    %v5050 = vmul.f32 %v4996, %v4883
    %v5051 = vmul.f32 %v4997, %v4884
    %v5052 = vmul.f32 %v4998, %v4885
    %v5053 = vmul.f32 %v4999, %v4886
    %v5054 = vmul.f32 %v5000, %v4887
    %v5055 = vmul.f32 %v5001, %v4888
    %v5056 = vmul.f32 %v5002, %v4889
    %v5057 = vmul.f32 %v5003, %v4890
    %v5058 = vmul.f32 %v5004, %v4891
    %v5059 = vmul.f32 %v5005, %v4892
    %v5060 = vmul.f32 %v5006, %v4893
    %v5061 = vmul.f32 %v5007, %v4894
    %v5062 = vmul.f32 %v5008, %v4895
    %v5063 = vmul.f32 %v5009, %v4896
    %v5064 = vsel %vm17, %v5048, 0.0
    %v5065 = vsel %vm17, %v5049, 0.0
    %v5066 = vadd.f32 %v5064, %v5065
    %v5067 = vsel %vm17, %v5050, 0.0
    %v5068 = vadd.f32 %v5066, %v5067
    %v5069 = vsel %vm17, %v5051, 0.0
    %v5070 = vadd.f32 %v5068, %v5069
    %v5071 = vsel %vm17, %v5052, 0.0
    %v5072 = vadd.f32 %v5070, %v5071
    %v5073 = vsel %vm17, %v5053, 0.0
    %v5074 = vadd.f32 %v5072, %v5073
    %v5075 = vsel %vm17, %v5054, 0.0
    %v5076 = vadd.f32 %v5074, %v5075
    %v5077 = vsel %vm17, %v5055, 0.0
    %v5078 = vadd.f32 %v5076, %v5077
    %v5079 = vsel %vm17, %v5056, 0.0
    %v5080 = vadd.f32 %v5078, %v5079
    %v5081 = vsel %vm17, %v5057, 0.0
    %v5082 = vadd.f32 %v5080, %v5081
    %v5083 = vsel %vm17, %v5058, 0.0
    %v5084 = vadd.f32 %v5082, %v5083
    %v5085 = vsel %vm17, %v5059, 0.0
    %v5086 = vadd.f32 %v5084, %v5085
    %v5087 = vsel %vm17, %v5060, 0.0
    %v5088 = vadd.f32 %v5086, %v5087
    %v5089 = vsel %vm17, %v5061, 0.0
    %v5090 = vadd.f32 %v5088, %v5089
    %v5091 = vsel %vm17, %v5062, 0.0
    %v5092 = vadd.f32 %v5090, %v5091
    %v5093 = vsel %vm17, %v5063, 0.0
    %v5094 = vadd.f32 %v5092, %v5093
    %v5095 = vrot.slane %v5094, 4
    %v5096 = vadd.f32 %v5094, %v5095
    %v5097 = vrot.slane %v5096, 2
    %v5098 = vadd.f32 %v5096, %v5097
    %v5099 = vrot.slane %v5098, 1
    %v5100 = vadd.f32 %v5098, %v5099
    %v5101 = vadd.f32 %v2867, %v5100
  $region36: #{tpu_custom_call.1} parent=0 // loop_footer
    %s2865 = sadd.s32 1, %s2861
  $region37: #{tpu_custom_call.1} parent=0 // loop_footer_branch
    %2860 = sbr.rel target = $region33
  $region38: #{tpu_custom_call.1} parent=0 // loop_exit
    _
  %v5102 = vmul.f32 %v2866, 0.001953125
  %v5103 = vmul.f32 %v2867, 0.001953125
  %v5104 = vmul.f32 %v5102, %v5102
  %v5105 = vsub.f32 %v5103, %v5104
  %v5106 = vmax.f32 %v5105, 0.0
  %v5107 = vadd.f32 %v5106, 1e-05
  %v5108 = vrsqrt.pop %v5107
  %v5109 = vmul.f32 %v26, %v5108
  %v5110 = vmul.f32 %v5102, %v5109
  %v5112 = vrot.slane %v5110, 7
  %v5114 = vsub.f32 %v26, %v5112
  %v5115 = vlaneseq
  %v5116 = vshrl.u32 %v5115, 7
  %v5117 = vsub.s32 2, %v5116
  %v5118 = vrot.slane %v5109, %v5117
  %v5119 = vlaneseq
  %v5120 = vshrl.u32 %v5119, 7
  %v5121 = vsub.s32 3, %v5120
  %v5122 = vrot.slane %v5114, %v5121
  %v5123 = vlaneseq
  %v5124 = vshrl.u32 %v5123, 7
  %v5125 = vsub.s32 4, %v5124
  %v5126 = vrot.slane %v2595, %v5125
  %v5127 = vlaneseq
  %v5128 = vshrl.u32 %v5127, 7
  %v5129 = vsub.s32 5, %v5128
  %v5130 = vrot.slane %v2600, %v5129
  loop: start=0, step=1, limit=7
  $region39: #{tpu_custom_call.1} parent=0 // loop_pre_header
    _
  $region40: #{tpu_custom_call.1} parent=0 // loop_header
    %s5132 = sphi 0, %s5136
    %p5133 = scmp.ge.s32.totalorder %s5132, 7
  $region41: #{tpu_custom_call.1} parent=0 // loop_header_branch
    %5135 = sbr.rel (%p5133) target = $region45
  $region42: #{tpu_custom_call.1} parent=0 // loop_body
    %s5137 = smul.u32 %s5132, 128
    %s5138 = sadd.s32 %s5137, 32
    %s5139 = scalar_lea.vmem %s4, %s5137
    %v5140 = vld [vmem:[%s5139] sm:$0xff]
    %v5141 = vld [vmem:[%s5139 + $0x8] sm:$0xff]
    %v5142 = vld [vmem:[%s5139 + $0x10] sm:$0xff]
    %v5143 = vld [vmem:[%s5139 + $0x18] sm:$0xff]
    %v5144 = vld [vmem:[%s5139 + $0x20] sm:$0xff]
    %v5145 = vld [vmem:[%s5139 + $0x28] sm:$0xff]
    %v5146 = vld [vmem:[%s5139 + $0x30] sm:$0xff]
    %v5147 = vld [vmem:[%s5139 + $0x38] sm:$0xff]
    %v5148 = vld [vmem:[%s5139 + $0x40] sm:$0xff]
    %v5149 = vld [vmem:[%s5139 + $0x48] sm:$0xff]
    %v5150 = vld [vmem:[%s5139 + $0x50] sm:$0xff]
    %v5151 = vld [vmem:[%s5139 + $0x58] sm:$0xff]
    %v5152 = vld [vmem:[%s5139 + $0x60] sm:$0xff]
    %v5153 = vld [vmem:[%s5139 + $0x68] sm:$0xff]
    %v5154 = vld [vmem:[%s5139 + $0x70] sm:$0xff]
    %v5155 = vld [vmem:[%s5139 + $0x78] sm:$0xff]
    %v5156 = vmul.f32 %v5140, %v5118
    %v5157 = vmul.f32 %v5141, %v5118
    %v5158 = vmul.f32 %v5142, %v5118
    %v5159 = vmul.f32 %v5143, %v5118
    %v5160 = vmul.f32 %v5144, %v5118
    %v5161 = vmul.f32 %v5145, %v5118
    %v5162 = vmul.f32 %v5146, %v5118
    %v5163 = vmul.f32 %v5147, %v5118
    %v5164 = vmul.f32 %v5148, %v5118
    %v5165 = vmul.f32 %v5149, %v5118
    %v5166 = vmul.f32 %v5150, %v5118
    %v5167 = vmul.f32 %v5151, %v5118
    %v5168 = vmul.f32 %v5152, %v5118
    %v5169 = vmul.f32 %v5153, %v5118
    %v5170 = vmul.f32 %v5154, %v5118
    %v5171 = vmul.f32 %v5155, %v5118
    %v5172 = vadd.f32 %v5156, %v5122
    %v5173 = vadd.f32 %v5157, %v5122
    %v5174 = vadd.f32 %v5158, %v5122
    %v5175 = vadd.f32 %v5159, %v5122
    %v5176 = vadd.f32 %v5160, %v5122
    %v5177 = vadd.f32 %v5161, %v5122
    %v5178 = vadd.f32 %v5162, %v5122
    %v5179 = vadd.f32 %v5163, %v5122
    %v5180 = vadd.f32 %v5164, %v5122
    %v5181 = vadd.f32 %v5165, %v5122
    %v5182 = vadd.f32 %v5166, %v5122
    %v5183 = vadd.f32 %v5167, %v5122
    %v5184 = vadd.f32 %v5168, %v5122
    %v5185 = vadd.f32 %v5169, %v5122
    %v5186 = vadd.f32 %v5170, %v5122
    %v5187 = vadd.f32 %v5171, %v5122
    %vm5188 = vcmp.gt.f32.partialorder %v5172, 0.0
    %vm5189 = vcmp.gt.f32.partialorder %v5173, 0.0
    %vm5190 = vcmp.gt.f32.partialorder %v5174, 0.0
    %vm5191 = vcmp.gt.f32.partialorder %v5175, 0.0
    %vm5192 = vcmp.gt.f32.partialorder %v5176, 0.0
    %vm5193 = vcmp.gt.f32.partialorder %v5177, 0.0
    %vm5194 = vcmp.gt.f32.partialorder %v5178, 0.0
    %vm5195 = vcmp.gt.f32.partialorder %v5179, 0.0
    %vm5196 = vcmp.gt.f32.partialorder %v5180, 0.0
    %vm5197 = vcmp.gt.f32.partialorder %v5181, 0.0
    %vm5198 = vcmp.gt.f32.partialorder %v5182, 0.0
    %vm5199 = vcmp.gt.f32.partialorder %v5183, 0.0
    %vm5200 = vcmp.gt.f32.partialorder %v5184, 0.0
    %vm5201 = vcmp.gt.f32.partialorder %v5185, 0.0
    %vm5202 = vcmp.gt.f32.partialorder %v5186, 0.0
    %vm5203 = vcmp.gt.f32.partialorder %v5187, 0.0
    %v5204 = vmul.f32 %v5172, 0.01
    %v5205 = vmul.f32 %v5173, 0.01
    %v5206 = vmul.f32 %v5174, 0.01
    %v5207 = vmul.f32 %v5175, 0.01
    %v5208 = vmul.f32 %v5176, 0.01
    %v5209 = vmul.f32 %v5177, 0.01
    %v5210 = vmul.f32 %v5178, 0.01
    %v5211 = vmul.f32 %v5179, 0.01
    %v5212 = vmul.f32 %v5180, 0.01
    %v5213 = vmul.f32 %v5181, 0.01
    %v5214 = vmul.f32 %v5182, 0.01
    %v5215 = vmul.f32 %v5183, 0.01
    %v5216 = vmul.f32 %v5184, 0.01
    %v5217 = vmul.f32 %v5185, 0.01
    %v5218 = vmul.f32 %v5186, 0.01
    %v5219 = vmul.f32 %v5187, 0.01
    %v5220 = vsel %vm5188, %v5172, %v5204
    %v5221 = vsel %vm5189, %v5173, %v5205
    %v5222 = vsel %vm5190, %v5174, %v5206
    %v5223 = vsel %vm5191, %v5175, %v5207
    %v5224 = vsel %vm5192, %v5176, %v5208
    %v5225 = vsel %vm5193, %v5177, %v5209
    %v5226 = vsel %vm5194, %v5178, %v5210
    %v5227 = vsel %vm5195, %v5179, %v5211
    %v5228 = vsel %vm5196, %v5180, %v5212
    %v5229 = vsel %vm5197, %v5181, %v5213
    %v5230 = vsel %vm5198, %v5182, %v5214
    %v5231 = vsel %vm5199, %v5183, %v5215
    %v5232 = vsel %vm5200, %v5184, %v5216
    %v5233 = vsel %vm5201, %v5185, %v5217
    %v5234 = vsel %vm5202, %v5186, %v5218
    %v5235 = vsel %vm5203, %v5187, %v5219
    %s5236 = scalar_lea.vmem %s0, %s5138
    %v5237 = vld [vmem:[%s5236] sm:$0xff]
    %v5238 = vld [vmem:[%s5236 + $0x8] sm:$0xff]
    %v5239 = vld [vmem:[%s5236 + $0x10] sm:$0xff]
    %v5240 = vld [vmem:[%s5236 + $0x18] sm:$0xff]
    %v5241 = vld [vmem:[%s5236 + $0x20] sm:$0xff]
    %v5242 = vld [vmem:[%s5236 + $0x28] sm:$0xff]
    %v5243 = vld [vmem:[%s5236 + $0x30] sm:$0xff]
    %v5244 = vld [vmem:[%s5236 + $0x38] sm:$0xff]
    %v5245 = vld [vmem:[%s5236 + $0x40] sm:$0xff]
    %v5246 = vld [vmem:[%s5236 + $0x48] sm:$0xff]
    %v5247 = vld [vmem:[%s5236 + $0x50] sm:$0xff]
    %v5248 = vld [vmem:[%s5236 + $0x58] sm:$0xff]
    %v5249 = vld [vmem:[%s5236 + $0x60] sm:$0xff]
    %v5250 = vld [vmem:[%s5236 + $0x68] sm:$0xff]
    %v5251 = vld [vmem:[%s5236 + $0x70] sm:$0xff]
    %v5252 = vld [vmem:[%s5236 + $0x78] sm:$0xff]
    %v5254 = vsel %vm17, %v5237, 0
    %v5257 = vsel %vm17, %v5238, 0
    %v5260 = vsel %vm17, %v5239, 0
    %v5263 = vsel %vm17, %v5240, 0
    %v5266 = vsel %vm17, %v5241, 0
    %v5269 = vsel %vm17, %v5242, 0
    %v5272 = vsel %vm17, %v5243, 0
    %v5275 = vsel %vm17, %v5244, 0
    %v5278 = vsel %vm17, %v5245, 0
    %v5281 = vsel %vm17, %v5246, 0
    %v5284 = vsel %vm17, %v5247, 0
    %v5287 = vsel %vm17, %v5248, 0
    %v5290 = vsel %vm17, %v5249, 0
    %v5293 = vsel %vm17, %v5250, 0
    %v5296 = vsel %vm17, %v5251, 0
    %v5299 = vsel %vm17, %v5252, 0
    %5301 = vmatprep.subr.mxu0 0.0
    %5302 = vmatpush1.msra.mxu0 %v28
    %5303 = vmatprep.subr.mxu0 0.0
    %5304 = vmatpush1.msra.mxu0 0.0
    %5305 = vmatprep.subr.mxu0 0.0
    %5306 = vmatpush1.msra.mxu0 0.0
    %5307 = vmatprep.subr.mxu0 0.0
    %5308 = vmatpush1.msra.mxu0 0.0
    %5309 = vmatprep.subr.mxu0 0.0
    %5310 = vmatpush1.msra.mxu0 0.0
    %5311 = vmatprep.subr.mxu0 0.0
    %5312 = vmatpush1.msra.mxu0 0.0
    %5313 = vmatprep.subr.mxu0 0.0
    %5314 = vmatpush1.msra.mxu0 0.0
    %5315 = vmatprep.subr.mxu0 0.0
    %5316 = vmatpush1.msra.mxu0 0.0
    %5317 = vmatprep.subr.mxu0 0.0
    %5318 = vmatpush1.msra.mxu0 0.0
    %5319 = vmatprep.subr.mxu0 0.0
    %5320 = vmatpush1.msra.mxu0 0.0
    %5321 = vmatprep.subr.mxu0 0.0
    %5322 = vmatpush1.msra.mxu0 0.0
    %5323 = vmatprep.subr.mxu0 0.0
    %5324 = vmatpush1.msra.mxu0 0.0
    %5325 = vmatprep.subr.mxu0 0.0
    %5326 = vmatpush1.msra.mxu0 0.0
    %5327 = vmatprep.subr.mxu0 0.0
    %5328 = vmatpush1.msra.mxu0 0.0
    %5329 = vmatprep.subr.mxu0 0.0
    %5330 = vmatpush1.msra.mxu0 0.0
    %5331 = vmatprep.subr.mxu0 0.0
    %5332 = vmatpush1.msra.mxu0 0.0
    %5333 = vmatprep.subr.mxu0 0.0
    %5334 = vmatpush1.msra.mxu0 0.0
    %5335 = vmatprep.subr.mxu0 0.0
    %5336 = vmatpush1.msra.mxu0 0.0
    %5337 = vmatprep.subr.mxu0 0.0
    %5338 = vmatpush1.msra.mxu0 0.0
    %5339 = vmatprep.subr.mxu0 0.0
    %5340 = vmatpush1.msra.mxu0 0.0
    %5341 = vmatprep.subr.mxu0 0.0
    %5342 = vmatpush1.msra.mxu0 0.0
    %5343 = vmatprep.subr.mxu0 0.0
    %5344 = vmatpush1.msra.mxu0 0.0
    %5345 = vmatprep.subr.mxu0 0.0
    %5346 = vmatpush1.msra.mxu0 0.0
    %5347 = vmatprep.subr.mxu0 0.0
    %5348 = vmatpush1.msra.mxu0 0.0
    %5349 = vmatprep.subr.mxu0 0.0
    %5350 = vmatpush1.msra.mxu0 0.0
    %5351 = vmatprep.subr.mxu0 0.0
    %5352 = vmatpush1.msra.mxu0 0.0
    %5353 = vmatprep.subr.mxu0 0.0
    %5354 = vmatpush1.msra.mxu0 0.0
    %5355 = vmatprep.subr.mxu0 0.0
    %5356 = vmatpush1.msra.mxu0 0.0
    %5357 = vmatprep.subr.mxu0 0.0
    %5358 = vmatpush1.msra.mxu0 0.0
    %5359 = vmatprep.subr.mxu0 0.0
    %5360 = vmatpush1.msra.mxu0 0.0
    %5361 = vmatprep.subr.mxu0 0.0
    %5362 = vmatpush1.msra.mxu0 0.0
    %5363 = vmatprep.subr.mxu0 0.0
    %5364 = vmatpush1.msra.mxu0 0.0
    %5365 = vmatprep.mubr.f32.mxu0 0.0
    %5366 = vmatmul.mubr.f32.gmra.mrb[0].mxu0 %v5254
    %v5367 = vpop.f32.mrb[0].mxu0
    %v5368 = vadd.f32 0.0, %v5367
    %v5369 = vpop.f32.mrb[0].mxu0
    %5370 = vmatprep.mubr.f32.mxu0 0.0
    %5371 = vmatmul.mubr.f32.gmra.mrb[0].mxu0 %v5257
    %v5372 = vpop.f32.mrb[0].mxu0
    %v5373 = vadd.f32 0.0, %v5372
    %v5374 = vpop.f32.mrb[0].mxu0
    %5375 = vmatprep.mubr.f32.mxu0 0.0
    %5376 = vmatmul.mubr.f32.gmra.mrb[0].mxu0 %v5260
    %v5377 = vpop.f32.mrb[0].mxu0
    %v5378 = vadd.f32 0.0, %v5377
    %v5379 = vpop.f32.mrb[0].mxu0
    %5380 = vmatprep.mubr.f32.mxu0 0.0
    %5381 = vmatmul.mubr.f32.gmra.mrb[0].mxu0 %v5263
    %v5382 = vpop.f32.mrb[0].mxu0
    %v5383 = vadd.f32 0.0, %v5382
    %v5384 = vpop.f32.mrb[0].mxu0
    %5385 = vmatprep.mubr.f32.mxu0 0.0
    %5386 = vmatmul.mubr.f32.gmra.mrb[0].mxu0 %v5266
    %v5387 = vpop.f32.mrb[0].mxu0
    %v5388 = vadd.f32 0.0, %v5387
    %v5389 = vpop.f32.mrb[0].mxu0
    %5390 = vmatprep.mubr.f32.mxu0 0.0
    %5391 = vmatmul.mubr.f32.gmra.mrb[0].mxu0 %v5269
    %v5392 = vpop.f32.mrb[0].mxu0
    %v5393 = vadd.f32 0.0, %v5392
    %v5394 = vpop.f32.mrb[0].mxu0
    %5395 = vmatprep.mubr.f32.mxu0 0.0
    %5396 = vmatmul.mubr.f32.gmra.mrb[0].mxu0 %v5272
    %v5397 = vpop.f32.mrb[0].mxu0
    %v5398 = vadd.f32 0.0, %v5397
    %v5399 = vpop.f32.mrb[0].mxu0
    %5400 = vmatprep.mubr.f32.mxu0 0.0
    %5401 = vmatmul.mubr.f32.gmra.mrb[0].mxu0 %v5275
    %v5402 = vpop.f32.mrb[0].mxu0
    %v5403 = vadd.f32 0.0, %v5402
    %v5404 = vpop.f32.mrb[0].mxu0
    %5405 = vmatprep.mubr.f32.mxu0 0.0
    %5406 = vmatmul.mubr.f32.gmra.mrb[0].mxu0 %v5278
    %v5407 = vpop.f32.mrb[0].mxu0
    %v5408 = vadd.f32 0.0, %v5407
    %v5409 = vpop.f32.mrb[0].mxu0
    %5410 = vmatprep.mubr.f32.mxu0 0.0
    %5411 = vmatmul.mubr.f32.gmra.mrb[0].mxu0 %v5281
    %v5412 = vpop.f32.mrb[0].mxu0
    %v5413 = vadd.f32 0.0, %v5412
    %v5414 = vpop.f32.mrb[0].mxu0
    %5415 = vmatprep.mubr.f32.mxu0 0.0
    %5416 = vmatmul.mubr.f32.gmra.mrb[0].mxu0 %v5284
    %v5417 = vpop.f32.mrb[0].mxu0
    %v5418 = vadd.f32 0.0, %v5417
    %v5419 = vpop.f32.mrb[0].mxu0
    %5420 = vmatprep.mubr.f32.mxu0 0.0
    %5421 = vmatmul.mubr.f32.gmra.mrb[0].mxu0 %v5287
    %v5422 = vpop.f32.mrb[0].mxu0
    %v5423 = vadd.f32 0.0, %v5422
    %v5424 = vpop.f32.mrb[0].mxu0
    %5425 = vmatprep.mubr.f32.mxu0 0.0
    %5426 = vmatmul.mubr.f32.gmra.mrb[0].mxu0 %v5290
    %v5427 = vpop.f32.mrb[0].mxu0
    %v5428 = vadd.f32 0.0, %v5427
    %v5429 = vpop.f32.mrb[0].mxu0
    %5430 = vmatprep.mubr.f32.mxu0 0.0
    %5431 = vmatmul.mubr.f32.gmra.mrb[0].mxu0 %v5293
    %v5432 = vpop.f32.mrb[0].mxu0
    %v5433 = vadd.f32 0.0, %v5432
    %v5434 = vpop.f32.mrb[0].mxu0
    %5435 = vmatprep.mubr.f32.mxu0 0.0
    %5436 = vmatmul.mubr.f32.gmra.mrb[0].mxu0 %v5296
    %v5437 = vpop.f32.mrb[0].mxu0
    %v5438 = vadd.f32 0.0, %v5437
    %v5439 = vpop.f32.mrb[0].mxu0
    %5440 = vmatprep.mubr.f32.mxu0 0.0
    %5441 = vmatmul.mubr.f32.gmra.mrb[0].mxu0 %v5299
    %v5442 = vpop.f32.mrb[0].mxu0
    %v5443 = vadd.f32 0.0, %v5442
    %v5444 = vpop.f32.mrb[0].mxu0
    %5445 = vdwg.mxu0
    %v5446 = vmul.f32 %v5368, %v5126
    %v5447 = vmul.f32 %v5373, %v5126
    %v5448 = vmul.f32 %v5378, %v5126
    %v5449 = vmul.f32 %v5383, %v5126
    %v5450 = vmul.f32 %v5388, %v5126
    %v5451 = vmul.f32 %v5393, %v5126
    %v5452 = vmul.f32 %v5398, %v5126
    %v5453 = vmul.f32 %v5403, %v5126
    %v5454 = vmul.f32 %v5408, %v5126
    %v5455 = vmul.f32 %v5413, %v5126
    %v5456 = vmul.f32 %v5418, %v5126
    %v5457 = vmul.f32 %v5423, %v5126
    %v5458 = vmul.f32 %v5428, %v5126
    %v5459 = vmul.f32 %v5433, %v5126
    %v5460 = vmul.f32 %v5438, %v5126
    %v5461 = vmul.f32 %v5443, %v5126
    %v5462 = vadd.f32 %v5220, %v5446
    %v5463 = vadd.f32 %v5221, %v5447
    %v5464 = vadd.f32 %v5222, %v5448
    %v5465 = vadd.f32 %v5223, %v5449
    %v5466 = vadd.f32 %v5224, %v5450
    %v5467 = vadd.f32 %v5225, %v5451
    %v5468 = vadd.f32 %v5226, %v5452
    %v5469 = vadd.f32 %v5227, %v5453
    %v5470 = vadd.f32 %v5228, %v5454
    %v5471 = vadd.f32 %v5229, %v5455
    %v5472 = vadd.f32 %v5230, %v5456
    %v5473 = vadd.f32 %v5231, %v5457
    %v5474 = vadd.f32 %v5232, %v5458
    %v5475 = vadd.f32 %v5233, %v5459
    %v5476 = vadd.f32 %v5234, %v5460
    %v5477 = vadd.f32 %v5235, %v5461
    %v5478 = vadd.f32 %v5462, %v5130
    %v5479 = vadd.f32 %v5463, %v5130
    %v5480 = vadd.f32 %v5464, %v5130
    %v5481 = vadd.f32 %v5465, %v5130
    %v5482 = vadd.f32 %v5466, %v5130
    %v5483 = vadd.f32 %v5467, %v5130
    %v5484 = vadd.f32 %v5468, %v5130
    %v5485 = vadd.f32 %v5469, %v5130
    %v5486 = vadd.f32 %v5470, %v5130
    %v5487 = vadd.f32 %v5471, %v5130
    %v5488 = vadd.f32 %v5472, %v5130
    %v5489 = vadd.f32 %v5473, %v5130
    %v5490 = vadd.f32 %v5474, %v5130
    %v5491 = vadd.f32 %v5475, %v5130
    %v5492 = vadd.f32 %v5476, %v5130
    %v5493 = vadd.f32 %v5477, %v5130
    %5494 = vst.msk [vmem:[%s5139] sm:$0xff] %vm17, %v5478
    %5495 = vst.msk [vmem:[%s5139 + $0x8] sm:$0xff] %vm17, %v5479
    %5496 = vst.msk [vmem:[%s5139 + $0x10] sm:$0xff] %vm17, %v5480
    %5497 = vst.msk [vmem:[%s5139 + $0x18] sm:$0xff] %vm17, %v5481
    %5498 = vst.msk [vmem:[%s5139 + $0x20] sm:$0xff] %vm17, %v5482
    %5499 = vst.msk [vmem:[%s5139 + $0x28] sm:$0xff] %vm17, %v5483
    %5500 = vst.msk [vmem:[%s5139 + $0x30] sm:$0xff] %vm17, %v5484
    %5501 = vst.msk [vmem:[%s5139 + $0x38] sm:$0xff] %vm17, %v5485
    %5502 = vst.msk [vmem:[%s5139 + $0x40] sm:$0xff] %vm17, %v5486
    %5503 = vst.msk [vmem:[%s5139 + $0x48] sm:$0xff] %vm17, %v5487
    %5504 = vst.msk [vmem:[%s5139 + $0x50] sm:$0xff] %vm17, %v5488
    %5505 = vst.msk [vmem:[%s5139 + $0x58] sm:$0xff] %vm17, %v5489
    %5506 = vst.msk [vmem:[%s5139 + $0x60] sm:$0xff] %vm17, %v5490
    %5507 = vst.msk [vmem:[%s5139 + $0x68] sm:$0xff] %vm17, %v5491
    %5508 = vst.msk [vmem:[%s5139 + $0x70] sm:$0xff] %vm17, %v5492
    %5509 = vst.msk [vmem:[%s5139 + $0x78] sm:$0xff] %vm17, %v5493
  $region43: #{tpu_custom_call.1} parent=0 // loop_footer
    %s5136 = sadd.s32 1, %s5132
  $region44: #{tpu_custom_call.1} parent=0 // loop_footer_branch
    %5131 = sbr.rel target = $region40
  $region45: #{tpu_custom_call.1} parent=0 // loop_exit
    _
  // Predicated region
  $region46: #{tpu_custom_call.1} parent=0 // pred_check
    _
  $region47: #{tpu_custom_call.1} parent=0 // pred_check_branch
    %5511 = sbr.rel (0) target = $region49
  $region48: #{tpu_custom_call.1} parent=0 // pred_region
    _
  $region49: #{tpu_custom_call.1} parent=0 // pred_fallthru
    _
  // Predicated region
  $region50: #{tpu_custom_call.1} parent=0 // pred_check
    _
  $region51: #{tpu_custom_call.1} parent=0 // pred_check_branch
    %5513 = sbr.rel (0) target = $region53
  $region52: #{tpu_custom_call.1} parent=0 // pred_region
    _
  $region53: #{tpu_custom_call.1} parent=0 // pred_fallthru
    _

</llo_original>
